<compile_context>
chip_gen: v7x
topology: tpu7x:2x2x1
jax: 0.10.0
libtpu: 0.0.40
codegen_flags: <defaults>
</compile_context>

<pallas_src>
import jax
import jax.numpy as jnp
from jax import lax
from jax.experimental import pallas as pl
from jax.experimental.pallas import tpu as pltpu

_EPS = 1e-5
_COL0 = 16   # interior column origin inside the padded staging buffers
             # (multiple of 16 => aligned interior stores for both f32 and bf16)


def _make_kernel(H, W, Cp, R, cdtype):
    """Build the BasicBlock_v2 kernel (one batch element per grid step)."""
    nb = H // R          # row blocks per image
    M = R * W            # matmul M dimension per row block

    def kernel(x_ref, s1_ref, o1_ref, w1_ref, cb1_ref,
               s2_ref, o2_ref, w2_ref, cb2_ref, out_ref,
               pad1_ref, pad2_ref):
        # x_ref   : (H, W, Cp) f32    NHWC input (leading N squeezed by BlockSpec)
        # s*/o*   : (1, Cp)    f32    folded BN scale / offset
        # w*_ref  : (3, 3, Cp, Cp)    conv weights, HWIO, cdtype (bf16 or f32)
        # cb*_ref : (1, Cp)    f32    conv biases
        # out_ref : (H, W, Cp) f32
        # pad*_ref: (H+2, Wpad, Cp)   cdtype padded staging buffers

        # Small per-channel vectors: hoist out of all loops (1 vreg row each).
        s1 = s1_ref[0]
        o1 = o1_ref[0]
        cb1 = cb1_ref[0]
        s2 = s2_ref[0]
        o2 = o2_ref[0]
        cb2 = cb2_ref[0]

        # --- zero only the 1-element halo ring.  The interior is fully
        # rewritten every grid step; re-zeroing the (tiny) halo each step keeps
        # this correct even when the batch axis is sharded across TensorCores.
        zrow = jnp.zeros((1, W + 2, Cp), cdtype)
        zcol = jnp.zeros((H, 1, Cp), cdtype)
        for pref in (pad1_ref, pad2_ref):
            pref[0:1, _COL0 - 1:_COL0 + W + 1, :] = zrow           # top halo row
            pref[H + 1:H + 2, _COL0 - 1:_COL0 + W + 1, :] = zrow   # bottom halo row
            pref[1:H + 1, _COL0 - 1:_COL0, :] = zcol               # left halo col
            pref[1:H + 1, _COL0 + W:_COL0 + W + 1, :] = zcol       # right halo col

        # --- pass A: a1 = relu(bn1(x)) -> pad1 interior, per row block ---
        def bn1_body(b, carry):
            r0 = pl.multiple_of(b * R, R)
            xb = x_ref[pl.ds(r0, R)]                               # (R, W, Cp) f32
            a1 = jnp.maximum(xb * s1 + o1, 0.0)
            pad1_ref[pl.ds(1 + r0, R), pl.ds(_COL0, W), :] = a1.astype(cdtype)
            return carry

        lax.fori_loop(0, nb, bn1_body, 0)

        # --- pass B: conv1 + fused (bias, bn2, relu) epilogue -> pad2 interior ---
        def conv1_body(b, carry):
            r0 = pl.multiple_of(b * R, R)
            acc = jnp.zeros((M, Cp), jnp.float32)
            for dy in range(3):
                for dx in range(3):
                    slab = pad1_ref[pl.ds(r0 + dy, R),
                                    pl.ds(_COL0 - 1 + dx, W), :]   # (R, W, Cp)
                    acc += jnp.dot(slab.reshape(M, Cp), w1_ref[dy, dx],
                                   preferred_element_type=jnp.float32)
            a2 = jnp.maximum((acc + cb1) * s2 + o2, 0.0)           # f32 epilogue
            pad2_ref[pl.ds(1 + r0, R), pl.ds(_COL0, W), :] = (
                a2.astype(cdtype).reshape(R, W, Cp))
            return carry

        lax.fori_loop(0, nb, conv1_body, 0)

        # --- pass C: conv2 + bias + residual -> out, per row block ---
        def conv2_body(b, carry):
            r0 = pl.multiple_of(b * R, R)
            acc = jnp.zeros((M, Cp), jnp.float32)
            for dy in range(3):
                for dx in range(3):
                    slab = pad2_ref[pl.ds(r0 + dy, R),
                                    pl.ds(_COL0 - 1 + dx, W), :]
                    acc += jnp.dot(slab.reshape(M, Cp), w2_ref[dy, dx],
                                   preferred_element_type=jnp.float32)
            xb = x_ref[pl.ds(r0, R)]                               # residual, f32
            out = acc.reshape(R, W, Cp) + cb2 + xb
            out_ref[pl.ds(r0, R)] = out.astype(out_ref.dtype)
            return carry

        lax.fori_loop(0, nb, conv2_body, 0)

    return kernel


def basic_block_v2(x_nchw, params, *, use_bf16=True):
    """params = (g1, b1, m1, v1, w1, cb1, g2, b2, m2, v2, w2, cb2), PyTorch layouts."""
    g1, b1, m1, v1, w1, cb1, g2, b2, m2, v2, w2, cb2 = params
    N, C, H, W = x_nchw.shape
    assert w1.shape[0] == w1.shape[1] == C, "identity residual needs inplanes == planes"

    cdtype = jnp.bfloat16 if use_bf16 else jnp.float32
    Cp = ((C + 127) // 128) * 128                   # lane-dense channel count

    # Row block size: aim for a matmul M dimension of ~128 pixel rows.
    R = max(1, min(H, 128 // max(1, W)))
    while H % R:
        R -= 1

    Wpad = -(-(W + _COL0 + 1) // 16) * 16           # staging width >= interior + halo

    # ---- NCHW -> NHWC, pad channels to Cp with zeros (keeps residual exact) ----
    x = jnp.transpose(x_nchw, (0, 2, 3, 1)).astype(jnp.float32)
    if Cp != C:
        x = jnp.pad(x, ((0, 0), (0, 0), (0, 0), (0, Cp - C)))

    def padc(v):
        v = v.astype(jnp.float32)
        return jnp.pad(v, (0, Cp - C)) if Cp != C else v

    # Fold BN (inference) into per-channel scale/offset:  y = x*scale + offset
    inv1 = g1 / jnp.sqrt(v1 + _EPS)
    inv2 = g2 / jnp.sqrt(v2 + _EPS)
    s1 = padc(inv1).reshape(1, Cp)
    o1 = padc(b1 - m1 * inv1).reshape(1, Cp)
    s2 = padc(inv2).reshape(1, Cp)
    o2 = padc(b2 - m2 * inv2).reshape(1, Cp)
    cb1_ = padc(cb1).reshape(1, Cp)
    cb2_ = padc(cb2).reshape(1, Cp)

    def padw(w):                                     # OIHW -> HWIO, pad channels, cast
        w_hwio = jnp.transpose(w, (2, 3, 1, 0)).astype(jnp.float32)
        if Cp != C:
            w_hwio = jnp.pad(w_hwio, ((0, 0), (0, 0), (0, Cp - C), (0, Cp - C)))
        return w_hwio.astype(cdtype)

    w1p = padw(w1)
    w2p = padw(w2)

    def full(shape):
        nd = len(shape)
        return pl.BlockSpec(shape, lambda n, _nd=nd: (0,) * _nd)

    kernel = _make_kernel(H, W, Cp, R, cdtype)

    # TODO(synk): for large H*W*C (early ResNet layers / C>=512) add a row-block
    # and/or output-channel grid axis and raise vmem_limit_bytes; whole-image
    # blocks + full weight blocks here are sized for small feature maps.
    out_nhwc = pl.pallas_call(
        kernel,
        out_shape=jax.ShapeDtypeStruct((N, H, W, Cp), jnp.float32),
        grid_spec=pltpu.PrefetchScalarGridSpec(
            num_scalar_prefetch=0,
            grid=(N,),
            in_specs=[
                pl.BlockSpec((None, H, W, Cp), lambda n: (n, 0, 0, 0)),   # x
                full((1, Cp)), full((1, Cp)),                             # bn1 scale/offset
                full((3, 3, Cp, Cp)), full((1, Cp)),                      # conv1 w / b
                full((1, Cp)), full((1, Cp)),                             # bn2 scale/offset
                full((3, 3, Cp, Cp)), full((1, Cp)),                      # conv2 w / b
            ],
            out_specs=pl.BlockSpec((None, H, W, Cp), lambda n: (n, 0, 0, 0)),
            scratch_shapes=[
                pltpu.VMEM((H + 2, Wpad, Cp), cdtype),   # padded relu(bn1(x))
                pltpu.VMEM((H + 2, Wpad, Cp), cdtype),   # padded relu(bn2(conv1(.)))
            ],
        ),
        # Batch elements are independent -> "parallel" lets v7x split the grid
        # across its two TensorCores (neutral on v5e/v6e).
        compiler_params=pltpu.CompilerParams(dimension_semantics=("parallel",)),
    )(x, s1, o1, w1p, cb1_, s2, o2, w2p, cb2_)

    out = out_nhwc[..., :C]                          # drop channel padding
    return jnp.transpose(out, (0, 3, 1, 2))          # NHWC -> NCHW


def reference(x, params):
    """Pure-JAX reference (NCHW, matches eval-mode PyTorch forward)."""
    g1, b1, m1, v1, w1, cb1, g2, b2, m2, v2, w2, cb2 = params

    def bn(t, g, b, m, v):
        sh = (1, -1, 1, 1)
        return (t - m.reshape(sh)) / jnp.sqrt(v.reshape(sh) + _EPS) * g.reshape(sh) + b.reshape(sh)

    def conv(t, w, cb):
        y = lax.conv_general_dilated(t, w, window_strides=(1, 1),
                                     padding=((1, 1), (1, 1)),
                                     dimension_numbers=('NCHW', 'OIHW', 'NCHW'))
        return y + cb.reshape(1, -1, 1, 1)

    out = jnp.maximum(bn(x, g1, b1, m1, v1), 0.0)
    out = conv(out, w1, cb1)
    out = jnp.maximum(bn(out, g2, b2, m2, v2), 0.0)
    out = conv(out, w2, cb2)
    return out + x


if __name__ == "__main__":
    N, C, H, W = 2, 4, 16, 16          # inplanes == planes == 4, stride = 1
    key = jax.random.PRNGKey(0)
    ks = jax.random.split(key, 10)

    x = jax.random.normal(ks[0], (N, C, H, W), jnp.float32)

    # Deterministic synthetic parameters (PyTorch shapes: conv OIHW, BN per-channel)
    g1 = 1.0 + 0.10 * jnp.arange(C, dtype=jnp.float32)
    b1 = 0.05 * jnp.arange(C, dtype=jnp.float32)
    m1 = 0.10 * jax.random.normal(ks[1], (C,), jnp.float32)
    v1 = 1.0 + 0.10 * jnp.abs(jax.random.normal(ks[2], (C,), jnp.float32))
    w1 = 0.10 * jax.random.normal(ks[3], (C, C, 3, 3), jnp.float32)
    cb1 = 0.01 * jnp.arange(C, dtype=jnp.float32)

    g2 = 1.0 - 0.05 * jnp.arange(C, dtype=jnp.float32)
    b2 = -0.03 * jnp.arange(C, dtype=jnp.float32)
    m2 = 0.10 * jax.random.normal(ks[4], (C,), jnp.float32)
    v2 = 1.0 + 0.10 * jnp.abs(jax.random.normal(ks[5], (C,), jnp.float32))
    w2 = 0.10 * jax.random.normal(ks[6], (C, C, 3, 3), jnp.float32)
    cb2 = -0.01 * jnp.arange(C, dtype=jnp.float32)

    params = (g1, b1, m1, v1, w1, cb1, g2, b2, m2, v2, w2, cb2)

    y_ref = reference(x, params)

    # Strict correctness path: f32 matmul operands.
    y32 = basic_block_v2(x, params, use_bf16=False)
    jax.block_until_ready(y32)
    assert y32.shape == (N, C, H, W)
    assert jnp.allclose(y32, y_ref, atol=1e-4, rtol=1e-4), "f32 path mismatch vs JAX reference"

    # Performance path: bf16 MXU operands, f32 accumulation / BN / residual.
    ybf = basic_block_v2(x, params, use_bf16=True)
    jax.block_until_ready(ybf)
    assert ybf.shape == (N, C, H, W)
    assert jnp.allclose(ybf, y_ref, atol=5e-2, rtol=5e-2), "bf16 path mismatch vs JAX reference"

    print("KERNEL_OK")
</pallas_src>

<mosaic_0001>
module attributes {stable_mosaic.version = 11 : i64} {
  func.func @kernel(%arg0: i32, %arg1: memref<1x16x16x128xf32, #tpu.memory_space<vmem>>, %arg2: memref<1x128xf32, #tpu.memory_space<vmem>>, %arg3: memref<1x128xf32, #tpu.memory_space<vmem>>, %arg4: memref<3x3x128x128xf32, #tpu.memory_space<vmem>>, %arg5: memref<1x128xf32, #tpu.memory_space<vmem>>, %arg6: memref<1x128xf32, #tpu.memory_space<vmem>>, %arg7: memref<1x128xf32, #tpu.memory_space<vmem>>, %arg8: memref<3x3x128x128xf32, #tpu.memory_space<vmem>>, %arg9: memref<1x128xf32, #tpu.memory_space<vmem>>, %arg10: memref<1x16x16x128xf32, #tpu.memory_space<vmem>>, %arg11: memref<18x48x128xf32, #tpu.memory_space<vmem>>, %arg12: memref<18x48x128xf32, #tpu.memory_space<vmem>>) attributes {dimension_semantics = [#tpu.dimension_semantics<parallel>], iteration_bounds = array<i64: 2>, scalar_prefetch = 0 : i64, scratch_operands = 2 : i64, tpu.core_type = #tpu.core_type<tc>, window_params = [{transform_indices = @transform_0, window_bounds = array<i64: 1, 16, 16, 128>}, {pipeline_mode = #tpu.pipeline_mode<synchronous>, transform_indices = @transform_1, window_bounds = array<i64: 1, 128>}, {pipeline_mode = #tpu.pipeline_mode<synchronous>, transform_indices = @transform_2, window_bounds = array<i64: 1, 128>}, {pipeline_mode = #tpu.pipeline_mode<synchronous>, transform_indices = @transform_3, window_bounds = array<i64: 3, 3, 128, 128>}, {pipeline_mode = #tpu.pipeline_mode<synchronous>, transform_indices = @transform_4, window_bounds = array<i64: 1, 128>}, {pipeline_mode = #tpu.pipeline_mode<synchronous>, transform_indices = @transform_5, window_bounds = array<i64: 1, 128>}, {pipeline_mode = #tpu.pipeline_mode<synchronous>, transform_indices = @transform_6, window_bounds = array<i64: 1, 128>}, {pipeline_mode = #tpu.pipeline_mode<synchronous>, transform_indices = @transform_7, window_bounds = array<i64: 3, 3, 128, 128>}, {pipeline_mode = #tpu.pipeline_mode<synchronous>, transform_indices = @transform_8, window_bounds = array<i64: 1, 128>}, {transform_indices = @transform_9, window_bounds = array<i64: 1, 16, 16, 128>}]} {
    %c0 = arith.constant 0 : index
    %c0_0 = arith.constant 0 : index
    %0 = vector.load %arg2[%c0, %c0_0] : memref<1x128xf32, #tpu.memory_space<vmem>>, vector<1x128xf32>
    %1 = vector.shape_cast %0 : vector<1x128xf32> to vector<128xf32>
    %c0_1 = arith.constant 0 : index
    %c0_2 = arith.constant 0 : index
    %2 = vector.load %arg3[%c0_1, %c0_2] : memref<1x128xf32, #tpu.memory_space<vmem>>, vector<1x128xf32>
    %3 = vector.shape_cast %2 : vector<1x128xf32> to vector<128xf32>
    %c0_3 = arith.constant 0 : index
    %c0_4 = arith.constant 0 : index
    %4 = vector.load %arg5[%c0_3, %c0_4] : memref<1x128xf32, #tpu.memory_space<vmem>>, vector<1x128xf32>
    %5 = vector.shape_cast %4 : vector<1x128xf32> to vector<128xf32>
    %c0_5 = arith.constant 0 : index
    %c0_6 = arith.constant 0 : index
    %6 = vector.load %arg6[%c0_5, %c0_6] : memref<1x128xf32, #tpu.memory_space<vmem>>, vector<1x128xf32>
    %7 = vector.shape_cast %6 : vector<1x128xf32> to vector<128xf32>
    %c0_7 = arith.constant 0 : index
    %c0_8 = arith.constant 0 : index
    %8 = vector.load %arg7[%c0_7, %c0_8] : memref<1x128xf32, #tpu.memory_space<vmem>>, vector<1x128xf32>
    %9 = vector.shape_cast %8 : vector<1x128xf32> to vector<128xf32>
    %c0_9 = arith.constant 0 : index
    %c0_10 = arith.constant 0 : index
    %10 = vector.load %arg9[%c0_9, %c0_10] : memref<1x128xf32, #tpu.memory_space<vmem>>, vector<1x128xf32>
    %11 = vector.shape_cast %10 : vector<1x128xf32> to vector<128xf32>
    %cst = arith.constant 0.000000e+00 : f32
    %12 = vector.broadcast %cst : f32 to vector<1x18x128xf32>
    %cst_11 = arith.constant 0.000000e+00 : f32
    %13 = vector.broadcast %cst_11 : f32 to vector<16x1x128xf32>
    %c0_12 = arith.constant 0 : index
    %c15 = arith.constant 15 : index
    %c0_13 = arith.constant 0 : index
    %14 = vector.load %arg11[%c0_12, %c15, %c0_13] : memref<18x48x128xf32, #tpu.memory_space<vmem>>, vector<1x18x128xf32>
    tpu.vector_store %arg11[%c0_12, %c15, %c0_13], %12 {strides = array<i32>} : memref<18x48x128xf32, #tpu.memory_space<vmem>>, vector<1x18x128xf32>,
    %c17 = arith.constant 17 : index
    %c15_14 = arith.constant 15 : index
    %c0_15 = arith.constant 0 : index
    %15 = vector.load %arg11[%c17, %c15_14, %c0_15] : memref<18x48x128xf32, #tpu.memory_space<vmem>>, vector<1x18x128xf32>
    tpu.vector_store %arg11[%c17, %c15_14, %c0_15], %12 {strides = array<i32>} : memref<18x48x128xf32, #tpu.memory_space<vmem>>, vector<1x18x128xf32>,
    %c1 = arith.constant 1 : index
    %c15_16 = arith.constant 15 : index
    %c0_17 = arith.constant 0 : index
    %16 = vector.load %arg11[%c1, %c15_16, %c0_17] : memref<18x48x128xf32, #tpu.memory_space<vmem>>, vector<16x1x128xf32>
    tpu.vector_store %arg11[%c1, %c15_16, %c0_17], %13 {strides = array<i32>} : memref<18x48x128xf32, #tpu.memory_space<vmem>>, vector<16x1x128xf32>,
    %c1_18 = arith.constant 1 : index
    %c32 = arith.constant 32 : index
    %c0_19 = arith.constant 0 : index
    %17 = vector.load %arg11[%c1_18, %c32, %c0_19] : memref<18x48x128xf32, #tpu.memory_space<vmem>>, vector<16x1x128xf32>
    tpu.vector_store %arg11[%c1_18, %c32, %c0_19], %13 {strides = array<i32>} : memref<18x48x128xf32, #tpu.memory_space<vmem>>, vector<16x1x128xf32>,
    %c0_20 = arith.constant 0 : index
    %c15_21 = arith.constant 15 : index
    %c0_22 = arith.constant 0 : index
    %18 = vector.load %arg12[%c0_20, %c15_21, %c0_22] : memref<18x48x128xf32, #tpu.memory_space<vmem>>, vector<1x18x128xf32>
    tpu.vector_store %arg12[%c0_20, %c15_21, %c0_22], %12 {strides = array<i32>} : memref<18x48x128xf32, #tpu.memory_space<vmem>>, vector<1x18x128xf32>,
    %c17_23 = arith.constant 17 : index
    %c15_24 = arith.constant 15 : index
    %c0_25 = arith.constant 0 : index
    %19 = vector.load %arg12[%c17_23, %c15_24, %c0_25] : memref<18x48x128xf32, #tpu.memory_space<vmem>>, vector<1x18x128xf32>
    tpu.vector_store %arg12[%c17_23, %c15_24, %c0_25], %12 {strides = array<i32>} : memref<18x48x128xf32, #tpu.memory_space<vmem>>, vector<1x18x128xf32>,
    %c1_26 = arith.constant 1 : index
    %c15_27 = arith.constant 15 : index
    %c0_28 = arith.constant 0 : index
    %20 = vector.load %arg12[%c1_26, %c15_27, %c0_28] : memref<18x48x128xf32, #tpu.memory_space<vmem>>, vector<16x1x128xf32>
    tpu.vector_store %arg12[%c1_26, %c15_27, %c0_28], %13 {strides = array<i32>} : memref<18x48x128xf32, #tpu.memory_space<vmem>>, vector<16x1x128xf32>,
    %c1_29 = arith.constant 1 : index
    %c32_30 = arith.constant 32 : index
    %c0_31 = arith.constant 0 : index
    %21 = vector.load %arg12[%c1_29, %c32_30, %c0_31] : memref<18x48x128xf32, #tpu.memory_space<vmem>>, vector<16x1x128xf32>
    tpu.vector_store %arg12[%c1_29, %c32_30, %c0_31], %13 {strides = array<i32>} : memref<18x48x128xf32, #tpu.memory_space<vmem>>, vector<16x1x128xf32>,
    %c0_i32 = arith.constant 0 : i32
    %c2_i32 = arith.constant 2 : i32
    %22 = arith.addi %c0_i32, %c2_i32 : i32
    %c1_i32 = arith.constant 1 : i32
    scf.for %arg13 = %c0_i32 to %22 step %c1_i32  : i32 {
      %c8_i32 = arith.constant 8 : i32
      %25 = arith.muli %arg13, %c8_i32 : i32
      %26 = tpu.assume_multiple %25, 8 : i32
      %c0_41 = arith.constant 0 : index
      %27 = arith.index_cast %26 : i32 to index
      %c0_42 = arith.constant 0 : index
      %c0_43 = arith.constant 0 : index
      %28 = vector.load %arg1[%c0_41, %27, %c0_42, %c0_43] : memref<1x16x16x128xf32, #tpu.memory_space<vmem>>, vector<1x8x16x128xf32>
      %29 = vector.shape_cast %28 : vector<1x8x16x128xf32> to vector<8x16x128xf32>
      %30 = vector.shape_cast %1 : vector<128xf32> to vector<1x1x128xf32>
      %31 = vector.broadcast %30 : vector<1x1x128xf32> to vector<8x16x128xf32>
      %32 = arith.mulf %29, %31 : vector<8x16x128xf32>
      %33 = vector.shape_cast %3 : vector<128xf32> to vector<1x1x128xf32>
      %34 = vector.broadcast %33 : vector<1x1x128xf32> to vector<8x16x128xf32>
      %35 = arith.addf %32, %34 : vector<8x16x128xf32>
      %cst_44 = arith.constant 0.000000e+00 : f32
      %36 = vector.broadcast %cst_44 : f32 to vector<8x16x128xf32>
      %37 = arith.maximumf %35, %36 : vector<8x16x128xf32>
      %c1_i32_45 = arith.constant 1 : i32
      %38 = arith.addi %c1_i32_45, %26 : i32
      %39 = arith.index_cast %38 : i32 to index
      %c16 = arith.constant 16 : index
      %c0_46 = arith.constant 0 : index
      %40 = vector.load %arg11[%39, %c16, %c0_46] : memref<18x48x128xf32, #tpu.memory_space<vmem>>, vector<8x16x128xf32>
      tpu.vector_store %arg11[%39, %c16, %c0_46], %37 {strides = array<i32>} : memref<18x48x128xf32, #tpu.memory_space<vmem>>, vector<8x16x128xf32>,
    }
    %c2_i32_32 = arith.constant 2 : i32
    %c0_i32_33 = arith.constant 0 : i32
    %c2_i32_34 = arith.constant 2 : i32
    %23 = arith.addi %c0_i32_33, %c2_i32_34 : i32
    %c1_i32_35 = arith.constant 1 : i32
    scf.for %arg13 = %c0_i32_33 to %23 step %c1_i32_35  : i32 {
      %c8_i32 = arith.constant 8 : i32
      %25 = arith.muli %arg13, %c8_i32 : i32
      %26 = tpu.assume_multiple %25, 8 : i32
      %cst_41 = arith.constant 0.000000e+00 : f32
      %27 = vector.broadcast %cst_41 : f32 to vector<128x128xf32>
      %c0_i32_42 = arith.constant 0 : i32
      %28 = arith.addi %26, %c0_i32_42 : i32
      %29 = arith.index_cast %28 : i32 to index
      %c15_43 = arith.constant 15 : index
      %c0_44 = arith.constant 0 : index
      %30 = vector.load %arg11[%29, %c15_43, %c0_44] : memref<18x48x128xf32, #tpu.memory_space<vmem>>, vector<8x16x128xf32>
      %31 = vector.shape_cast %30 : vector<8x16x128xf32> to vector<128x128xf32>
      %c0_45 = arith.constant 0 : index
      %c0_46 = arith.constant 0 : index
      %c0_47 = arith.constant 0 : index
      %c0_48 = arith.constant 0 : index
      %32 = vector.load %arg4[%c0_45, %c0_46, %c0_47, %c0_48] : memref<3x3x128x128xf32, #tpu.memory_space<vmem>>, vector<1x1x128x128xf32>
      %33 = vector.shape_cast %32 : vector<1x1x128x128xf32> to vector<128x128xf32>
      %cst_49 = arith.constant dense<0.000000e+00> : vector<128x128xf32>
      %34 = tpu.matmul %31, %33, %cst_49 {dimension_numbers = #tpu.dot_dimension_numbers<[1], [0], [0], [1], [0, 0, 1, 1], [], []>} : vector<128x128xf32>, vector<128x128xf32>, vector<128x128xf32> -> vector<128x128xf32>
      %35 = arith.addf %27, %34 : vector<128x128xf32>
      %c0_i32_50 = arith.constant 0 : i32
      %36 = arith.addi %26, %c0_i32_50 : i32
      %37 = arith.index_cast %36 : i32 to index
      %c16 = arith.constant 16 : index
      %c0_51 = arith.constant 0 : index
      %38 = vector.load %arg11[%37, %c16, %c0_51] : memref<18x48x128xf32, #tpu.memory_space<vmem>>, vector<8x16x128xf32>
      %39 = vector.shape_cast %38 : vector<8x16x128xf32> to vector<128x128xf32>
      %c0_52 = arith.constant 0 : index
      %c1_53 = arith.constant 1 : index
      %c0_54 = arith.constant 0 : index
      %c0_55 = arith.constant 0 : index
      %40 = vector.load %arg4[%c0_52, %c1_53, %c0_54, %c0_55] : memref<3x3x128x128xf32, #tpu.memory_space<vmem>>, vector<1x1x128x128xf32>
      %41 = vector.shape_cast %40 : vector<1x1x128x128xf32> to vector<128x128xf32>
      %cst_56 = arith.constant dense<0.000000e+00> : vector<128x128xf32>
      %42 = tpu.matmul %39, %41, %cst_56 {dimension_numbers = #tpu.dot_dimension_numbers<[1], [0], [0], [1], [0, 0, 1, 1], [], []>} : vector<128x128xf32>, vector<128x128xf32>, vector<128x128xf32> -> vector<128x128xf32>
      %43 = arith.addf %35, %42 : vector<128x128xf32>
      %c0_i32_57 = arith.constant 0 : i32
      %44 = arith.addi %26, %c0_i32_57 : i32
      %45 = arith.index_cast %44 : i32 to index
      %c17_58 = arith.constant 17 : index
      %c0_59 = arith.constant 0 : index
      %46 = vector.load %arg11[%45, %c17_58, %c0_59] : memref<18x48x128xf32, #tpu.memory_space<vmem>>, vector<8x16x128xf32>
      %47 = vector.shape_cast %46 : vector<8x16x128xf32> to vector<128x128xf32>
      %c0_60 = arith.constant 0 : index
      %c2 = arith.constant 2 : index
      %c0_61 = arith.constant 0 : index
      %c0_62 = arith.constant 0 : index
      %48 = vector.load %arg4[%c0_60, %c2, %c0_61, %c0_62] : memref<3x3x128x128xf32, #tpu.memory_space<vmem>>, vector<1x1x128x128xf32>
      %49 = vector.shape_cast %48 : vector<1x1x128x128xf32> to vector<128x128xf32>
      %cst_63 = arith.constant dense<0.000000e+00> : vector<128x128xf32>
      %50 = tpu.matmul %47, %49, %cst_63 {dimension_numbers = #tpu.dot_dimension_numbers<[1], [0], [0], [1], [0, 0, 1, 1], [], []>} : vector<128x128xf32>, vector<128x128xf32>, vector<128x128xf32> -> vector<128x128xf32>
      %51 = arith.addf %43, %50 : vector<128x128xf32>
      %c1_i32_64 = arith.constant 1 : i32
      %52 = arith.addi %26, %c1_i32_64 : i32
      %53 = arith.index_cast %52 : i32 to index
      %c15_65 = arith.constant 15 : index
      %c0_66 = arith.constant 0 : index
      %54 = vector.load %arg11[%53, %c15_65, %c0_66] : memref<18x48x128xf32, #tpu.memory_space<vmem>>, vector<8x16x128xf32>
      %55 = vector.shape_cast %54 : vector<8x16x128xf32> to vector<128x128xf32>
      %c1_67 = arith.constant 1 : index
      %c0_68 = arith.constant 0 : index
      %c0_69 = arith.constant 0 : index
      %c0_70 = arith.constant 0 : index
      %56 = vector.load %arg4[%c1_67, %c0_68, %c0_69, %c0_70] : memref<3x3x128x128xf32, #tpu.memory_space<vmem>>, vector<1x1x128x128xf32>
      %57 = vector.shape_cast %56 : vector<1x1x128x128xf32> to vector<128x128xf32>
      %cst_71 = arith.constant dense<0.000000e+00> : vector<128x128xf32>
      %58 = tpu.matmul %55, %57, %cst_71 {dimension_numbers = #tpu.dot_dimension_numbers<[1], [0], [0], [1], [0, 0, 1, 1], [], []>} : vector<128x128xf32>, vector<128x128xf32>, vector<128x128xf32> -> vector<128x128xf32>
      %59 = arith.addf %51, %58 : vector<128x128xf32>
      %c1_i32_72 = arith.constant 1 : i32
      %60 = arith.addi %26, %c1_i32_72 : i32
      %61 = arith.index_cast %60 : i32 to index
      %c16_73 = arith.constant 16 : index
      %c0_74 = arith.constant 0 : index
      %62 = vector.load %arg11[%61, %c16_73, %c0_74] : memref<18x48x128xf32, #tpu.memory_space<vmem>>, vector<8x16x128xf32>
      %63 = vector.shape_cast %62 : vector<8x16x128xf32> to vector<128x128xf32>
      %c1_75 = arith.constant 1 : index
      %c1_76 = arith.constant 1 : index
      %c0_77 = arith.constant 0 : index
      %c0_78 = arith.constant 0 : index
      %64 = vector.load %arg4[%c1_75, %c1_76, %c0_77, %c0_78] : memref<3x3x128x128xf32, #tpu.memory_space<vmem>>, vector<1x1x128x128xf32>
      %65 = vector.shape_cast %64 : vector<1x1x128x128xf32> to vector<128x128xf32>
      %cst_79 = arith.constant dense<0.000000e+00> : vector<128x128xf32>
      %66 = tpu.matmul %63, %65, %cst_79 {dimension_numbers = #tpu.dot_dimension_numbers<[1], [0], [0], [1], [0, 0, 1, 1], [], []>} : vector<128x128xf32>, vector<128x128xf32>, vector<128x128xf32> -> vector<128x128xf32>
      %67 = arith.addf %59, %66 : vector<128x128xf32>
      %c1_i32_80 = arith.constant 1 : i32
      %68 = arith.addi %26, %c1_i32_80 : i32
      %69 = arith.index_cast %68 : i32 to index
      %c17_81 = arith.constant 17 : index
      %c0_82 = arith.constant 0 : index
      %70 = vector.load %arg11[%69, %c17_81, %c0_82] : memref<18x48x128xf32, #tpu.memory_space<vmem>>, vector<8x16x128xf32>
      %71 = vector.shape_cast %70 : vector<8x16x128xf32> to vector<128x128xf32>
      %c1_83 = arith.constant 1 : index
      %c2_84 = arith.constant 2 : index
      %c0_85 = arith.constant 0 : index
      %c0_86 = arith.constant 0 : index
      %72 = vector.load %arg4[%c1_83, %c2_84, %c0_85, %c0_86] : memref<3x3x128x128xf32, #tpu.memory_space<vmem>>, vector<1x1x128x128xf32>
      %73 = vector.shape_cast %72 : vector<1x1x128x128xf32> to vector<128x128xf32>
      %cst_87 = arith.constant dense<0.000000e+00> : vector<128x128xf32>
      %74 = tpu.matmul %71, %73, %cst_87 {dimension_numbers = #tpu.dot_dimension_numbers<[1], [0], [0], [1], [0, 0, 1, 1], [], []>} : vector<128x128xf32>, vector<128x128xf32>, vector<128x128xf32> -> vector<128x128xf32>
      %75 = arith.addf %67, %74 : vector<128x128xf32>
      %c2_i32_88 = arith.constant 2 : i32
      %76 = arith.addi %26, %c2_i32_88 : i32
      %77 = arith.index_cast %76 : i32 to index
      %c15_89 = arith.constant 15 : index
      %c0_90 = arith.constant 0 : index
      %78 = vector.load %arg11[%77, %c15_89, %c0_90] : memref<18x48x128xf32, #tpu.memory_space<vmem>>, vector<8x16x128xf32>
      %79 = vector.shape_cast %78 : vector<8x16x128xf32> to vector<128x128xf32>
      %c2_91 = arith.constant 2 : index
      %c0_92 = arith.constant 0 : index
      %c0_93 = arith.constant 0 : index
      %c0_94 = arith.constant 0 : index
      %80 = vector.load %arg4[%c2_91, %c0_92, %c0_93, %c0_94] : memref<3x3x128x128xf32, #tpu.memory_space<vmem>>, vector<1x1x128x128xf32>
      %81 = vector.shape_cast %80 : vector<1x1x128x128xf32> to vector<128x128xf32>
      %cst_95 = arith.constant dense<0.000000e+00> : vector<128x128xf32>
      %82 = tpu.matmul %79, %81, %cst_95 {dimension_numbers = #tpu.dot_dimension_numbers<[1], [0], [0], [1], [0, 0, 1, 1], [], []>} : vector<128x128xf32>, vector<128x128xf32>, vector<128x128xf32> -> vector<128x128xf32>
      %83 = arith.addf %75, %82 : vector<128x128xf32>
      %c2_i32_96 = arith.constant 2 : i32
      %84 = arith.addi %26, %c2_i32_96 : i32
      %85 = arith.index_cast %84 : i32 to index
      %c16_97 = arith.constant 16 : index
      %c0_98 = arith.constant 0 : index
      %86 = vector.load %arg11[%85, %c16_97, %c0_98] : memref<18x48x128xf32, #tpu.memory_space<vmem>>, vector<8x16x128xf32>
      %87 = vector.shape_cast %86 : vector<8x16x128xf32> to vector<128x128xf32>
      %c2_99 = arith.constant 2 : index
      %c1_100 = arith.constant 1 : index
      %c0_101 = arith.constant 0 : index
      %c0_102 = arith.constant 0 : index
      %88 = vector.load %arg4[%c2_99, %c1_100, %c0_101, %c0_102] : memref<3x3x128x128xf32, #tpu.memory_space<vmem>>, vector<1x1x128x128xf32>
      %89 = vector.shape_cast %88 : vector<1x1x128x128xf32> to vector<128x128xf32>
      %cst_103 = arith.constant dense<0.000000e+00> : vector<128x128xf32>
      %90 = tpu.matmul %87, %89, %cst_103 {dimension_numbers = #tpu.dot_dimension_numbers<[1], [0], [0], [1], [0, 0, 1, 1], [], []>} : vector<128x128xf32>, vector<128x128xf32>, vector<128x128xf32> -> vector<128x128xf32>
      %91 = arith.addf %83, %90 : vector<128x128xf32>
      %c2_i32_104 = arith.constant 2 : i32
      %92 = arith.addi %26, %c2_i32_104 : i32
      %93 = arith.index_cast %92 : i32 to index
      %c17_105 = arith.constant 17 : index
      %c0_106 = arith.constant 0 : index
      %94 = vector.load %arg11[%93, %c17_105, %c0_106] : memref<18x48x128xf32, #tpu.memory_space<vmem>>, vector<8x16x128xf32>
      %95 = vector.shape_cast %94 : vector<8x16x128xf32> to vector<128x128xf32>
      %c2_107 = arith.constant 2 : index
      %c2_108 = arith.constant 2 : index
      %c0_109 = arith.constant 0 : index
      %c0_110 = arith.constant 0 : index
      %96 = vector.load %arg4[%c2_107, %c2_108, %c0_109, %c0_110] : memref<3x3x128x128xf32, #tpu.memory_space<vmem>>, vector<1x1x128x128xf32>
      %97 = vector.shape_cast %96 : vector<1x1x128x128xf32> to vector<128x128xf32>
      %cst_111 = arith.constant dense<0.000000e+00> : vector<128x128xf32>
      %98 = tpu.matmul %95, %97, %cst_111 {dimension_numbers = #tpu.dot_dimension_numbers<[1], [0], [0], [1], [0, 0, 1, 1], [], []>} : vector<128x128xf32>, vector<128x128xf32>, vector<128x128xf32> -> vector<128x128xf32>
      %99 = arith.addf %91, %98 : vector<128x128xf32>
      %100 = vector.shape_cast %5 : vector<128xf32> to vector<1x128xf32>
      %101 = vector.broadcast %100 : vector<1x128xf32> to vector<128x128xf32>
      %102 = arith.addf %99, %101 : vector<128x128xf32>
      %103 = vector.shape_cast %7 : vector<128xf32> to vector<1x128xf32>
      %104 = vector.broadcast %103 : vector<1x128xf32> to vector<128x128xf32>
      %105 = arith.mulf %102, %104 : vector<128x128xf32>
      %106 = vector.shape_cast %9 : vector<128xf32> to vector<1x128xf32>
      %107 = vector.broadcast %106 : vector<1x128xf32> to vector<128x128xf32>
      %108 = arith.addf %105, %107 : vector<128x128xf32>
      %cst_112 = arith.constant 0.000000e+00 : f32
      %109 = vector.broadcast %cst_112 : f32 to vector<128x128xf32>
      %110 = arith.maximumf %108, %109 : vector<128x128xf32>
      %111 = vector.shape_cast %110 : vector<128x128xf32> to vector<8x16x128xf32>
      %c1_i32_113 = arith.constant 1 : i32
      %112 = arith.addi %c1_i32_113, %26 : i32
      %113 = arith.index_cast %112 : i32 to index
      %c16_114 = arith.constant 16 : index
      %c0_115 = arith.constant 0 : index
      %114 = vector.load %arg12[%113, %c16_114, %c0_115] : memref<18x48x128xf32, #tpu.memory_space<vmem>>, vector<8x16x128xf32>
      tpu.vector_store %arg12[%113, %c16_114, %c0_115], %111 {strides = array<i32>} : memref<18x48x128xf32, #tpu.memory_space<vmem>>, vector<8x16x128xf32>,
    }
    %c2_i32_36 = arith.constant 2 : i32
    %c0_i32_37 = arith.constant 0 : i32
    %c2_i32_38 = arith.constant 2 : i32
    %24 = arith.addi %c0_i32_37, %c2_i32_38 : i32
    %c1_i32_39 = arith.constant 1 : i32
    scf.for %arg13 = %c0_i32_37 to %24 step %c1_i32_39  : i32 {
      %c8_i32 = arith.constant 8 : i32
      %25 = arith.muli %arg13, %c8_i32 : i32
      %26 = tpu.assume_multiple %25, 8 : i32
      %cst_41 = arith.constant 0.000000e+00 : f32
      %27 = vector.broadcast %cst_41 : f32 to vector<128x128xf32>
      %c0_i32_42 = arith.constant 0 : i32
      %28 = arith.addi %26, %c0_i32_42 : i32
      %29 = arith.index_cast %28 : i32 to index
      %c15_43 = arith.constant 15 : index
      %c0_44 = arith.constant 0 : index
      %30 = vector.load %arg12[%29, %c15_43, %c0_44] : memref<18x48x128xf32, #tpu.memory_space<vmem>>, vector<8x16x128xf32>
      %31 = vector.shape_cast %30 : vector<8x16x128xf32> to vector<128x128xf32>
      %c0_45 = arith.constant 0 : index
      %c0_46 = arith.constant 0 : index
      %c0_47 = arith.constant 0 : index
      %c0_48 = arith.constant 0 : index
      %32 = vector.load %arg8[%c0_45, %c0_46, %c0_47, %c0_48] : memref<3x3x128x128xf32, #tpu.memory_space<vmem>>, vector<1x1x128x128xf32>
      %33 = vector.shape_cast %32 : vector<1x1x128x128xf32> to vector<128x128xf32>
      %cst_49 = arith.constant dense<0.000000e+00> : vector<128x128xf32>
      %34 = tpu.matmul %31, %33, %cst_49 {dimension_numbers = #tpu.dot_dimension_numbers<[1], [0], [0], [1], [0, 0, 1, 1], [], []>} : vector<128x128xf32>, vector<128x128xf32>, vector<128x128xf32> -> vector<128x128xf32>
      %35 = arith.addf %27, %34 : vector<128x128xf32>
      %c0_i32_50 = arith.constant 0 : i32
      %36 = arith.addi %26, %c0_i32_50 : i32
      %37 = arith.index_cast %36 : i32 to index
      %c16 = arith.constant 16 : index
      %c0_51 = arith.constant 0 : index
      %38 = vector.load %arg12[%37, %c16, %c0_51] : memref<18x48x128xf32, #tpu.memory_space<vmem>>, vector<8x16x128xf32>
      %39 = vector.shape_cast %38 : vector<8x16x128xf32> to vector<128x128xf32>
      %c0_52 = arith.constant 0 : index
      %c1_53 = arith.constant 1 : index
      %c0_54 = arith.constant 0 : index
      %c0_55 = arith.constant 0 : index
      %40 = vector.load %arg8[%c0_52, %c1_53, %c0_54, %c0_55] : memref<3x3x128x128xf32, #tpu.memory_space<vmem>>, vector<1x1x128x128xf32>
      %41 = vector.shape_cast %40 : vector<1x1x128x128xf32> to vector<128x128xf32>
      %cst_56 = arith.constant dense<0.000000e+00> : vector<128x128xf32>
      %42 = tpu.matmul %39, %41, %cst_56 {dimension_numbers = #tpu.dot_dimension_numbers<[1], [0], [0], [1], [0, 0, 1, 1], [], []>} : vector<128x128xf32>, vector<128x128xf32>, vector<128x128xf32> -> vector<128x128xf32>
      %43 = arith.addf %35, %42 : vector<128x128xf32>
      %c0_i32_57 = arith.constant 0 : i32
      %44 = arith.addi %26, %c0_i32_57 : i32
      %45 = arith.index_cast %44 : i32 to index
      %c17_58 = arith.constant 17 : index
      %c0_59 = arith.constant 0 : index
      %46 = vector.load %arg12[%45, %c17_58, %c0_59] : memref<18x48x128xf32, #tpu.memory_space<vmem>>, vector<8x16x128xf32>
      %47 = vector.shape_cast %46 : vector<8x16x128xf32> to vector<128x128xf32>
      %c0_60 = arith.constant 0 : index
      %c2 = arith.constant 2 : index
      %c0_61 = arith.constant 0 : index
      %c0_62 = arith.constant 0 : index
      %48 = vector.load %arg8[%c0_60, %c2, %c0_61, %c0_62] : memref<3x3x128x128xf32, #tpu.memory_space<vmem>>, vector<1x1x128x128xf32>
      %49 = vector.shape_cast %48 : vector<1x1x128x128xf32> to vector<128x128xf32>
      %cst_63 = arith.constant dense<0.000000e+00> : vector<128x128xf32>
      %50 = tpu.matmul %47, %49, %cst_63 {dimension_numbers = #tpu.dot_dimension_numbers<[1], [0], [0], [1], [0, 0, 1, 1], [], []>} : vector<128x128xf32>, vector<128x128xf32>, vector<128x128xf32> -> vector<128x128xf32>
      %51 = arith.addf %43, %50 : vector<128x128xf32>
      %c1_i32_64 = arith.constant 1 : i32
      %52 = arith.addi %26, %c1_i32_64 : i32
      %53 = arith.index_cast %52 : i32 to index
      %c15_65 = arith.constant 15 : index
      %c0_66 = arith.constant 0 : index
      %54 = vector.load %arg12[%53, %c15_65, %c0_66] : memref<18x48x128xf32, #tpu.memory_space<vmem>>, vector<8x16x128xf32>
      %55 = vector.shape_cast %54 : vector<8x16x128xf32> to vector<128x128xf32>
      %c1_67 = arith.constant 1 : index
      %c0_68 = arith.constant 0 : index
      %c0_69 = arith.constant 0 : index
      %c0_70 = arith.constant 0 : index
      %56 = vector.load %arg8[%c1_67, %c0_68, %c0_69, %c0_70] : memref<3x3x128x128xf32, #tpu.memory_space<vmem>>, vector<1x1x128x128xf32>
      %57 = vector.shape_cast %56 : vector<1x1x128x128xf32> to vector<128x128xf32>
      %cst_71 = arith.constant dense<0.000000e+00> : vector<128x128xf32>
      %58 = tpu.matmul %55, %57, %cst_71 {dimension_numbers = #tpu.dot_dimension_numbers<[1], [0], [0], [1], [0, 0, 1, 1], [], []>} : vector<128x128xf32>, vector<128x128xf32>, vector<128x128xf32> -> vector<128x128xf32>
      %59 = arith.addf %51, %58 : vector<128x128xf32>
      %c1_i32_72 = arith.constant 1 : i32
      %60 = arith.addi %26, %c1_i32_72 : i32
      %61 = arith.index_cast %60 : i32 to index
      %c16_73 = arith.constant 16 : index
      %c0_74 = arith.constant 0 : index
      %62 = vector.load %arg12[%61, %c16_73, %c0_74] : memref<18x48x128xf32, #tpu.memory_space<vmem>>, vector<8x16x128xf32>
      %63 = vector.shape_cast %62 : vector<8x16x128xf32> to vector<128x128xf32>
      %c1_75 = arith.constant 1 : index
      %c1_76 = arith.constant 1 : index
      %c0_77 = arith.constant 0 : index
      %c0_78 = arith.constant 0 : index
      %64 = vector.load %arg8[%c1_75, %c1_76, %c0_77, %c0_78] : memref<3x3x128x128xf32, #tpu.memory_space<vmem>>, vector<1x1x128x128xf32>
      %65 = vector.shape_cast %64 : vector<1x1x128x128xf32> to vector<128x128xf32>
      %cst_79 = arith.constant dense<0.000000e+00> : vector<128x128xf32>
      %66 = tpu.matmul %63, %65, %cst_79 {dimension_numbers = #tpu.dot_dimension_numbers<[1], [0], [0], [1], [0, 0, 1, 1], [], []>} : vector<128x128xf32>, vector<128x128xf32>, vector<128x128xf32> -> vector<128x128xf32>
      %67 = arith.addf %59, %66 : vector<128x128xf32>
      %c1_i32_80 = arith.constant 1 : i32
      %68 = arith.addi %26, %c1_i32_80 : i32
      %69 = arith.index_cast %68 : i32 to index
      %c17_81 = arith.constant 17 : index
      %c0_82 = arith.constant 0 : index
      %70 = vector.load %arg12[%69, %c17_81, %c0_82] : memref<18x48x128xf32, #tpu.memory_space<vmem>>, vector<8x16x128xf32>
      %71 = vector.shape_cast %70 : vector<8x16x128xf32> to vector<128x128xf32>
      %c1_83 = arith.constant 1 : index
      %c2_84 = arith.constant 2 : index
      %c0_85 = arith.constant 0 : index
      %c0_86 = arith.constant 0 : index
      %72 = vector.load %arg8[%c1_83, %c2_84, %c0_85, %c0_86] : memref<3x3x128x128xf32, #tpu.memory_space<vmem>>, vector<1x1x128x128xf32>
      %73 = vector.shape_cast %72 : vector<1x1x128x128xf32> to vector<128x128xf32>
      %cst_87 = arith.constant dense<0.000000e+00> : vector<128x128xf32>
      %74 = tpu.matmul %71, %73, %cst_87 {dimension_numbers = #tpu.dot_dimension_numbers<[1], [0], [0], [1], [0, 0, 1, 1], [], []>} : vector<128x128xf32>, vector<128x128xf32>, vector<128x128xf32> -> vector<128x128xf32>
      %75 = arith.addf %67, %74 : vector<128x128xf32>
      %c2_i32_88 = arith.constant 2 : i32
      %76 = arith.addi %26, %c2_i32_88 : i32
      %77 = arith.index_cast %76 : i32 to index
      %c15_89 = arith.constant 15 : index
      %c0_90 = arith.constant 0 : index
      %78 = vector.load %arg12[%77, %c15_89, %c0_90] : memref<18x48x128xf32, #tpu.memory_space<vmem>>, vector<8x16x128xf32>
      %79 = vector.shape_cast %78 : vector<8x16x128xf32> to vector<128x128xf32>
      %c2_91 = arith.constant 2 : index
      %c0_92 = arith.constant 0 : index
      %c0_93 = arith.constant 0 : index
      %c0_94 = arith.constant 0 : index
      %80 = vector.load %arg8[%c2_91, %c0_92, %c0_93, %c0_94] : memref<3x3x128x128xf32, #tpu.memory_space<vmem>>, vector<1x1x128x128xf32>
      %81 = vector.shape_cast %80 : vector<1x1x128x128xf32> to vector<128x128xf32>
      %cst_95 = arith.constant dense<0.000000e+00> : vector<128x128xf32>
      %82 = tpu.matmul %79, %81, %cst_95 {dimension_numbers = #tpu.dot_dimension_numbers<[1], [0], [0], [1], [0, 0, 1, 1], [], []>} : vector<128x128xf32>, vector<128x128xf32>, vector<128x128xf32> -> vector<128x128xf32>
      %83 = arith.addf %75, %82 : vector<128x128xf32>
      %c2_i32_96 = arith.constant 2 : i32
      %84 = arith.addi %26, %c2_i32_96 : i32
      %85 = arith.index_cast %84 : i32 to index
      %c16_97 = arith.constant 16 : index
      %c0_98 = arith.constant 0 : index
      %86 = vector.load %arg12[%85, %c16_97, %c0_98] : memref<18x48x128xf32, #tpu.memory_space<vmem>>, vector<8x16x128xf32>
      %87 = vector.shape_cast %86 : vector<8x16x128xf32> to vector<128x128xf32>
      %c2_99 = arith.constant 2 : index
      %c1_100 = arith.constant 1 : index
      %c0_101 = arith.constant 0 : index
      %c0_102 = arith.constant 0 : index
      %88 = vector.load %arg8[%c2_99, %c1_100, %c0_101, %c0_102] : memref<3x3x128x128xf32, #tpu.memory_space<vmem>>, vector<1x1x128x128xf32>
      %89 = vector.shape_cast %88 : vector<1x1x128x128xf32> to vector<128x128xf32>
      %cst_103 = arith.constant dense<0.000000e+00> : vector<128x128xf32>
      %90 = tpu.matmul %87, %89, %cst_103 {dimension_numbers = #tpu.dot_dimension_numbers<[1], [0], [0], [1], [0, 0, 1, 1], [], []>} : vector<128x128xf32>, vector<128x128xf32>, vector<128x128xf32> -> vector<128x128xf32>
      %91 = arith.addf %83, %90 : vector<128x128xf32>
      %c2_i32_104 = arith.constant 2 : i32
      %92 = arith.addi %26, %c2_i32_104 : i32
      %93 = arith.index_cast %92 : i32 to index
      %c17_105 = arith.constant 17 : index
      %c0_106 = arith.constant 0 : index
      %94 = vector.load %arg12[%93, %c17_105, %c0_106] : memref<18x48x128xf32, #tpu.memory_space<vmem>>, vector<8x16x128xf32>
      %95 = vector.shape_cast %94 : vector<8x16x128xf32> to vector<128x128xf32>
      %c2_107 = arith.constant 2 : index
      %c2_108 = arith.constant 2 : index
      %c0_109 = arith.constant 0 : index
      %c0_110 = arith.constant 0 : index
      %96 = vector.load %arg8[%c2_107, %c2_108, %c0_109, %c0_110] : memref<3x3x128x128xf32, #tpu.memory_space<vmem>>, vector<1x1x128x128xf32>
      %97 = vector.shape_cast %96 : vector<1x1x128x128xf32> to vector<128x128xf32>
      %cst_111 = arith.constant dense<0.000000e+00> : vector<128x128xf32>
      %98 = tpu.matmul %95, %97, %cst_111 {dimension_numbers = #tpu.dot_dimension_numbers<[1], [0], [0], [1], [0, 0, 1, 1], [], []>} : vector<128x128xf32>, vector<128x128xf32>, vector<128x128xf32> -> vector<128x128xf32>
      %99 = arith.addf %91, %98 : vector<128x128xf32>
      %c0_112 = arith.constant 0 : index
      %100 = arith.index_cast %26 : i32 to index
      %c0_113 = arith.constant 0 : index
      %c0_114 = arith.constant 0 : index
      %101 = vector.load %arg1[%c0_112, %100, %c0_113, %c0_114] : memref<1x16x16x128xf32, #tpu.memory_space<vmem>>, vector<1x8x16x128xf32>
      %102 = vector.shape_cast %101 : vector<1x8x16x128xf32> to vector<8x16x128xf32>
      %103 = vector.shape_cast %99 : vector<128x128xf32> to vector<8x16x128xf32>
      %104 = vector.shape_cast %11 : vector<128xf32> to vector<1x1x128xf32>
      %105 = vector.broadcast %104 : vector<1x1x128xf32> to vector<8x16x128xf32>
      %106 = arith.addf %103, %105 : vector<8x16x128xf32>
      %107 = arith.addf %106, %102 : vector<8x16x128xf32>
      %c0_115 = arith.constant 0 : index
      %108 = arith.index_cast %26 : i32 to index
      %c0_116 = arith.constant 0 : index
      %c0_117 = arith.constant 0 : index
      %109 = vector.load %arg10[%c0_115, %108, %c0_116, %c0_117] : memref<1x16x16x128xf32, #tpu.memory_space<vmem>>, vector<1x8x16x128xf32>
      %110 = vector.shape_cast %109 : vector<1x8x16x128xf32> to vector<8x16x128xf32>
      %111 = vector.shape_cast %107 : vector<8x16x128xf32> to vector<1x8x16x128xf32>
      tpu.vector_store %arg10[%c0_115, %108, %c0_116, %c0_117], %111 {strides = array<i32>} : memref<1x16x16x128xf32, #tpu.memory_space<vmem>>, vector<1x8x16x128xf32>,
    }
    %c2_i32_40 = arith.constant 2 : i32
    return
  }
  func.func @transform_0(%arg0: i32) -> (i32, i32, i32, i32) {
    %c0_i32 = arith.constant 0 : i32
    %c0_i32_0 = arith.constant 0 : i32
    %c0_i32_1 = arith.constant 0 : i32
    %c0_i32_2 = arith.constant 0 : i32
    return %arg0, %c0_i32, %c0_i32_0, %c0_i32_1 : i32, i32, i32, i32
  }
  func.func @transform_1(%arg0: i32) -> (i32, i32) {
    %c0_i32 = arith.constant 0 : i32
    %c0_i32_0 = arith.constant 0 : i32
    %c0_i32_1 = arith.constant 0 : i32
    return %c0_i32, %c0_i32_0 : i32, i32
  }
  func.func @transform_2(%arg0: i32) -> (i32, i32) {
    %c0_i32 = arith.constant 0 : i32
    %c0_i32_0 = arith.constant 0 : i32
    %c0_i32_1 = arith.constant 0 : i32
    return %c0_i32, %c0_i32_0 : i32, i32
  }
  func.func @transform_3(%arg0: i32) -> (i32, i32, i32, i32) {
    %c0_i32 = arith.constant 0 : i32
    %c0_i32_0 = arith.constant 0 : i32
    %c0_i32_1 = arith.constant 0 : i32
    %c0_i32_2 = arith.constant 0 : i32
    %c0_i32_3 = arith.constant 0 : i32
    return %c0_i32, %c0_i32_0, %c0_i32_1, %c0_i32_2 : i32, i32, i32, i32
  }
  func.func @transform_4(%arg0: i32) -> (i32, i32) {
    %c0_i32 = arith.constant 0 : i32
    %c0_i32_0 = arith.constant 0 : i32
    %c0_i32_1 = arith.constant 0 : i32
    return %c0_i32, %c0_i32_0 : i32, i32
  }
  func.func @transform_5(%arg0: i32) -> (i32, i32) {
    %c0_i32 = arith.constant 0 : i32
    %c0_i32_0 = arith.constant 0 : i32
    %c0_i32_1 = arith.constant 0 : i32
    return %c0_i32, %c0_i32_0 : i32, i32
  }
  func.func @transform_6(%arg0: i32) -> (i32, i32) {
    %c0_i32 = arith.constant 0 : i32
    %c0_i32_0 = arith.constant 0 : i32
    %c0_i32_1 = arith.constant 0 : i32
    return %c0_i32, %c0_i32_0 : i32, i32
  }
  func.func @transform_7(%arg0: i32) -> (i32, i32, i32, i32) {
    %c0_i32 = arith.constant 0 : i32
    %c0_i32_0 = arith.constant 0 : i32
    %c0_i32_1 = arith.constant 0 : i32
    %c0_i32_2 = arith.constant 0 : i32
    %c0_i32_3 = arith.constant 0 : i32
    return %c0_i32, %c0_i32_0, %c0_i32_1, %c0_i32_2 : i32, i32, i32, i32
  }
  func.func @transform_8(%arg0: i32) -> (i32, i32) {
    %c0_i32 = arith.constant 0 : i32
    %c0_i32_0 = arith.constant 0 : i32
    %c0_i32_1 = arith.constant 0 : i32
    return %c0_i32, %c0_i32_0 : i32, i32
  }
  func.func @transform_9(%arg0: i32) -> (i32, i32, i32, i32) {
    %c0_i32 = arith.constant 0 : i32
    %c0_i32_0 = arith.constant 0 : i32
    %c0_i32_1 = arith.constant 0 : i32
    %c0_i32_2 = arith.constant 0 : i32
    return %arg0, %c0_i32, %c0_i32_0, %c0_i32_1 : i32, i32, i32, i32
  }
}

</mosaic_0001>

<llo_original>
// kernel: tpu_custom_call.1
$region0: #{tpu_custom_call.1}
  #allocation0 [shape = 'u32[]', space=smem, size = 0x4, offset = 0x4, fixed_abs, tag = 'smem constant byte address 0x4 - core index']
  #allocation1 [shape = 'u32[144,128]{1,0:T(1,128)}', space=vmem, size = 0x12000, scoped, tag = 'internal scratch']
  #allocation2 [shape = 'f32[18,48,128]{2,1,0:T(8,128)}', space=vmem, size = 0x6c000, scoped, tag = 'scratch operand']
  #allocation3 [shape = 'f32[18,48,128]{2,1,0:T(8,128)}', space=vmem, size = 0x6c000, scoped, tag = 'scratch operand']
  %s0 = inlined_call_operand.hbm [shape: f32[2,16,16,128], index: 0, kind: input, shape index: {}]
  %s1 = inlined_call_operand.vmem [shape: f32[1,128], index: 1, kind: input, shape index: {}]
  %s2 = inlined_call_operand.vmem [shape: f32[1,128], index: 2, kind: input, shape index: {}]
  %s3 = inlined_call_operand.hbm [shape: f32[3,3,128,128], index: 3, kind: input, shape index: {}]
  %s4 = inlined_call_operand.vmem [shape: f32[1,128], index: 4, kind: input, shape index: {}]
  %s5 = inlined_call_operand.vmem [shape: f32[1,128], index: 5, kind: input, shape index: {}]
  %s6 = inlined_call_operand.vmem [shape: f32[1,128], index: 6, kind: input, shape index: {}]
  %s7 = inlined_call_operand.hbm [shape: f32[3,3,128,128], index: 7, kind: input, shape index: {}]
  %s8 = inlined_call_operand.vmem [shape: f32[1,128], index: 8, kind: input, shape index: {}]
  %s9 = inlined_call_operand.hbm [shape: f32[2,16,16,128], index: 9, kind: output, shape index: {}]
  %s10 = sld [smem:[#allocation0]]
  $region102: #{tpu_custom_call.1} parent=0
    _
  %s12 = ssub.s32 1, %s10
  %s13 = scalar_select 0, %s12, %s10
  $region1: #{tpu_custom_call.1} parent=0
    #allocation4 [shape = 'u8[262144]{0}', space=vmem, size = 0x40000, scoped, tag = 'input window, operand 0']
    #allocation5 [shape = 's32[2]{0}', space=sflag, size = 0x8, scoped, tag = 'scoped memory for tpu_custom_call.1']
    #allocation6 [shape = 's32[2]{0}', space=sflag, size = 0x8, scoped, tag = 'scoped memory for tpu_custom_call.1']
    #allocation7 [shape = 'u8[589824]{0}', space=vmem, size = 0x90000, scoped, tag = 'input window, operand 3, single buffered']
    #allocation8 [shape = 's32[1]{0}', space=sflag, size = 0x4, scoped, tag = 'scoped memory for tpu_custom_call.1']
    #allocation9 [shape = 'u8[589824]{0}', space=vmem, size = 0x90000, scoped, tag = 'input window, operand 7, single buffered']
    #allocation10 [shape = 'u8[262144]{0}', space=vmem, size = 0x40000, scoped, tag = 'output window, operand 0']
    %14 = vsyncpa [#allocation5], 0
    %s15 = scalar_lea.sflag [#allocation5], 1
    %16 = vsyncpa %s15, 0
    %17 = vsyncpa [#allocation8], 0
    %18 = vsyncpa [#allocation6], 0
    %s19 = scalar_lea.sflag [#allocation6], 1
    %20 = vsyncpa %s19, 0
    loop: start=0, step=1, limit=4
    $region2: #{tpu_custom_call.1} parent=1 // loop_pre_header
      _
    $region3: #{tpu_custom_call.1} parent=1 // loop_header
      %s22 = sphi 0, %s26
      %p23 = scmp.ge.s32.totalorder %s22, 4
      %s32 = sphi 0, %s34
      %s35 = sphi 0, %s32
      %s36 = sphi 0, %s35
      %s52 = sphi 0, %s36
      %s56 = sphi 0, %s56
      %s58 = sphi 0, %s56
      %s59 = sphi 0, %s58
      %s73 = sphi 0, %s59
      %s77 = sphi 0, %s77
      %s79 = sphi 0, %s77
      %s80 = sphi 0, %s79
      %s94 = sphi 0, %s80
      %s98 = sphi 0, %s98
      %s100 = sphi 0, %s98
      %s101 = sphi 0, %s100
      %s115 = sphi 0, %s101
      %s119 = sphi 0, %s119
      %s121 = sphi 0, %s119
      %s122 = sphi 0, %s121
      %s136 = sphi 0, %s122
      %s140 = sphi 0, %s140
      %s142 = sphi 0, %s140
      %s143 = sphi 0, %s142
      %s157 = sphi 0, %s143
      %s161 = sphi 0, %s161
      %s163 = sphi 0, %s161
      %s164 = sphi 0, %s163
      %s178 = sphi 0, %s164
      %s182 = sphi 0, %s182
      %s184 = sphi 0, %s182
      %s185 = sphi 0, %s184
      %s199 = sphi 0, %s185
      %s203 = sphi 0, %s203
      %s205 = sphi 0, %s203
      %s206 = sphi 0, %s205
      %s220 = sphi 0, %s206
      %s226 = sphi 0, %s228
      %s229 = sphi 0, %s226
      %s230 = sphi 0, %s229
      %s246 = sphi 0, %s230
    $region4: #{tpu_custom_call.1} parent=1 // loop_header_branch
      %25 = sbr.rel (%p23) target = $region8
    $region5: #{tpu_custom_call.1} parent=1 // loop_body
      %s27 = ssub.s32 %s22, 1
      %s28 = ssub.s32 %s22, 2
      %s29 = sadd.s32 %s22, 1
      %s30 = ssub.s32 %s22, %s29
      %p31 = scmp.eq.s32.totalorder %s30, 0
      %s33 = sadd.s32 %s32, 1
      %s34 = scalar_select %p31, %s32, %s33
      %p37 = pneg %p31
      %p38 = scmp.eq.s32.totalorder %s22, 1
      %p39 = por %p37, %p38
      %p40 = scmp.ne.s32.totalorder %s32, %s35
      %p41 = scmp.eq.s32.totalorder %s22, 0
      %p42 = por %p40, %p41
      %p43 = scmp.ne.s32.totalorder %s32, %s35
      %p44 = scmp.eq.s32.totalorder %s27, 1
      %p45 = por %p43, %p44
      %p46 = scmp.ne.s32.totalorder %s35, %s36
      %p47 = scmp.eq.s32.totalorder %s27, 0
      %p48 = por %p46, %p47
      %p49 = scmp.ne.s32.totalorder %s35, %s36
      %p50 = scmp.eq.s32.totalorder %s28, 1
      %p51 = por %p49, %p50
      %p53 = scmp.ne.s32.totalorder %s36, %s52
      %p54 = scmp.eq.s32.totalorder %s28, 0
      %p55 = por %p53, %p54
      %s57 = sadd.s32 %s56, 1
      %p60 = scmp.eq.s32.totalorder %s22, 1
      %p61 = scmp.ne.s32.totalorder %s56, %s58
      %p62 = scmp.eq.s32.totalorder %s22, 0
      %p63 = por %p61, %p62
      %p64 = scmp.ne.s32.totalorder %s56, %s58
      %p65 = scmp.eq.s32.totalorder %s27, 1
      %p66 = por %p64, %p65
      %p67 = scmp.ne.s32.totalorder %s58, %s59
      %p68 = scmp.eq.s32.totalorder %s27, 0
      %p69 = por %p67, %p68
      %p70 = scmp.ne.s32.totalorder %s58, %s59
      %p71 = scmp.eq.s32.totalorder %s28, 1
      %p72 = por %p70, %p71
      %p74 = scmp.ne.s32.totalorder %s59, %s73
      %p75 = scmp.eq.s32.totalorder %s28, 0
      %p76 = por %p74, %p75
      %s78 = sadd.s32 %s77, 1
      %p81 = scmp.eq.s32.totalorder %s22, 1
      %p82 = scmp.ne.s32.totalorder %s77, %s79
      %p83 = scmp.eq.s32.totalorder %s22, 0
      %p84 = por %p82, %p83
      %p85 = scmp.ne.s32.totalorder %s77, %s79
      %p86 = scmp.eq.s32.totalorder %s27, 1
      %p87 = por %p85, %p86
      %p88 = scmp.ne.s32.totalorder %s79, %s80
      %p89 = scmp.eq.s32.totalorder %s27, 0
      %p90 = por %p88, %p89
      %p91 = scmp.ne.s32.totalorder %s79, %s80
      %p92 = scmp.eq.s32.totalorder %s28, 1
      %p93 = por %p91, %p92
      %p95 = scmp.ne.s32.totalorder %s80, %s94
      %p96 = scmp.eq.s32.totalorder %s28, 0
      %p97 = por %p95, %p96
      %s99 = sadd.s32 %s98, 1
      %p102 = scmp.eq.s32.totalorder %s22, 1
      %p103 = scmp.ne.s32.totalorder %s98, %s100
      %p104 = scmp.eq.s32.totalorder %s22, 0
      %p105 = por %p103, %p104
      %p106 = scmp.ne.s32.totalorder %s98, %s100
      %p107 = scmp.eq.s32.totalorder %s27, 1
      %p108 = por %p106, %p107
      %p109 = scmp.ne.s32.totalorder %s100, %s101
      %p110 = scmp.eq.s32.totalorder %s27, 0
      %p111 = por %p109, %p110
      %p112 = scmp.ne.s32.totalorder %s100, %s101
      %p113 = scmp.eq.s32.totalorder %s28, 1
      %p114 = por %p112, %p113
      %p116 = scmp.ne.s32.totalorder %s101, %s115
      %p117 = scmp.eq.s32.totalorder %s28, 0
      %p118 = por %p116, %p117
      %s120 = sadd.s32 %s119, 1
      %p123 = scmp.eq.s32.totalorder %s22, 1
      %p124 = scmp.ne.s32.totalorder %s119, %s121
      %p125 = scmp.eq.s32.totalorder %s22, 0
      %p126 = por %p124, %p125
      %p127 = scmp.ne.s32.totalorder %s119, %s121
      %p128 = scmp.eq.s32.totalorder %s27, 1
      %p129 = por %p127, %p128
      %p130 = scmp.ne.s32.totalorder %s121, %s122
      %p131 = scmp.eq.s32.totalorder %s27, 0
      %p132 = por %p130, %p131
      %p133 = scmp.ne.s32.totalorder %s121, %s122
      %p134 = scmp.eq.s32.totalorder %s28, 1
      %p135 = por %p133, %p134
      %p137 = scmp.ne.s32.totalorder %s122, %s136
      %p138 = scmp.eq.s32.totalorder %s28, 0
      %p139 = por %p137, %p138
      %s141 = sadd.s32 %s140, 1
      %p144 = scmp.eq.s32.totalorder %s22, 1
      %p145 = scmp.ne.s32.totalorder %s140, %s142
      %p146 = scmp.eq.s32.totalorder %s22, 0
      %p147 = por %p145, %p146
      %p148 = scmp.ne.s32.totalorder %s140, %s142
      %p149 = scmp.eq.s32.totalorder %s27, 1
      %p150 = por %p148, %p149
      %p151 = scmp.ne.s32.totalorder %s142, %s143
      %p152 = scmp.eq.s32.totalorder %s27, 0
      %p153 = por %p151, %p152
      %p154 = scmp.ne.s32.totalorder %s142, %s143
      %p155 = scmp.eq.s32.totalorder %s28, 1
      %p156 = por %p154, %p155
      %p158 = scmp.ne.s32.totalorder %s143, %s157
      %p159 = scmp.eq.s32.totalorder %s28, 0
      %p160 = por %p158, %p159
      %s162 = sadd.s32 %s161, 1
      %p165 = scmp.eq.s32.totalorder %s22, 1
      %p166 = scmp.ne.s32.totalorder %s161, %s163
      %p167 = scmp.eq.s32.totalorder %s22, 0
      %p168 = por %p166, %p167
      %p169 = scmp.ne.s32.totalorder %s161, %s163
      %p170 = scmp.eq.s32.totalorder %s27, 1
      %p171 = por %p169, %p170
      %p172 = scmp.ne.s32.totalorder %s163, %s164
      %p173 = scmp.eq.s32.totalorder %s27, 0
      %p174 = por %p172, %p173
      %p175 = scmp.ne.s32.totalorder %s163, %s164
      %p176 = scmp.eq.s32.totalorder %s28, 1
      %p177 = por %p175, %p176
      %p179 = scmp.ne.s32.totalorder %s164, %s178
      %p180 = scmp.eq.s32.totalorder %s28, 0
      %p181 = por %p179, %p180
      %s183 = sadd.s32 %s182, 1
      %p186 = scmp.eq.s32.totalorder %s22, 1
      %p187 = scmp.ne.s32.totalorder %s182, %s184
      %p188 = scmp.eq.s32.totalorder %s22, 0
      %p189 = por %p187, %p188
      %p190 = scmp.ne.s32.totalorder %s182, %s184
      %p191 = scmp.eq.s32.totalorder %s27, 1
      %p192 = por %p190, %p191
      %p193 = scmp.ne.s32.totalorder %s184, %s185
      %p194 = scmp.eq.s32.totalorder %s27, 0
      %p195 = por %p193, %p194
      %p196 = scmp.ne.s32.totalorder %s184, %s185
      %p197 = scmp.eq.s32.totalorder %s28, 1
      %p198 = por %p196, %p197
      %p200 = scmp.ne.s32.totalorder %s185, %s199
      %p201 = scmp.eq.s32.totalorder %s28, 0
      %p202 = por %p200, %p201
      %s204 = sadd.s32 %s203, 1
      %p207 = scmp.eq.s32.totalorder %s22, 1
      %p208 = scmp.ne.s32.totalorder %s203, %s205
      %p209 = scmp.eq.s32.totalorder %s22, 0
      %p210 = por %p208, %p209
      %p211 = scmp.ne.s32.totalorder %s203, %s205
      %p212 = scmp.eq.s32.totalorder %s27, 1
      %p213 = por %p211, %p212
      %p214 = scmp.ne.s32.totalorder %s205, %s206
      %p215 = scmp.eq.s32.totalorder %s27, 0
      %p216 = por %p214, %p215
      %p217 = scmp.ne.s32.totalorder %s205, %s206
      %p218 = scmp.eq.s32.totalorder %s28, 1
      %p219 = por %p217, %p218
      %p221 = scmp.ne.s32.totalorder %s206, %s220
      %p222 = scmp.eq.s32.totalorder %s28, 0
      %p223 = por %p221, %p222
      %s224 = ssub.s32 %s22, %s29
      %p225 = scmp.eq.s32.totalorder %s224, 0
      %s227 = sadd.s32 %s226, 1
      %s228 = scalar_select %p225, %s226, %s227
      %p231 = pneg %p225
      %p232 = scmp.eq.s32.totalorder %s22, 1
      %p233 = por %p231, %p232
      %p234 = scmp.ne.s32.totalorder %s226, %s229
      %p235 = scmp.eq.s32.totalorder %s22, 0
      %p236 = por %p234, %p235
      %p237 = scmp.ne.s32.totalorder %s226, %s229
      %p238 = scmp.eq.s32.totalorder %s27, 1
      %p239 = por %p237, %p238
      %p240 = scmp.ne.s32.totalorder %s229, %s230
      %p241 = scmp.eq.s32.totalorder %s27, 0
      %p242 = por %p240, %p241
      %p243 = scmp.ne.s32.totalorder %s229, %s230
      %p244 = scmp.eq.s32.totalorder %s28, 1
      %p245 = por %p243, %p244
      %p247 = scmp.ne.s32.totalorder %s230, %s246
      %p248 = scmp.eq.s32.totalorder %s28, 0
      %p249 = por %p247, %p248
      %p250 = scmp.le.s32.totalorder 1, %s22
      %p251 = scmp.lt.s32.totalorder %s22, 3
      %p252 = pnand %p250, %p251
      %p253 = pneg %p252
      // Predicated region
      $region9: #{tpu_custom_call.1} parent=5 // pred_check
        _
      $region10: #{tpu_custom_call.1} parent=5 // pred_check_branch
        %255 = sbr.rel (%p252) target = $region12
      $region11: #{tpu_custom_call.1} parent=5 // pred_region
        %s256 = ssub.s32 %s22, 1
        // Predicated region
        $region13: #{tpu_custom_call.1} parent=11 // pred_check
          %p257 = pneg %p69
        $region14: #{tpu_custom_call.1} parent=11 // pred_check_branch
          %259 = sbr.rel (%p257) target = $region16
        $region15: #{tpu_custom_call.1} parent=11 // pred_region
          _
        $region16: #{tpu_custom_call.1} parent=11 // pred_fallthru
          _
        // Predicated region
        $region17: #{tpu_custom_call.1} parent=11 // pred_check
          %p260 = pneg %p90
        $region18: #{tpu_custom_call.1} parent=11 // pred_check_branch
          %262 = sbr.rel (%p260) target = $region20
        $region19: #{tpu_custom_call.1} parent=11 // pred_region
          _
        $region20: #{tpu_custom_call.1} parent=11 // pred_fallthru
          _
        // Predicated region
        $region21: #{tpu_custom_call.1} parent=11 // pred_check
          %p263 = pneg %p111
        $region22: #{tpu_custom_call.1} parent=11 // pred_check_branch
          %265 = sbr.rel (%p263) target = $region24
        $region23: #{tpu_custom_call.1} parent=11 // pred_region
          %s267 = ssub.s32 18432, 18432
          %268 = vsyncadd [#allocation8], %s267
          %s269 = sshll.u32 [#allocation7], 4
          %s270 = int_to_ptr.vmem [resolvable:$true] %s269
          %275 = dma.hbm_to_vmem [thread:$0]  %s3, 18432, %s270, [#allocation8], 128, 128, 8
        $region24: #{tpu_custom_call.1} parent=11 // pred_fallthru
          _
        // Predicated region
        $region25: #{tpu_custom_call.1} parent=11 // pred_check
          %p276 = pneg %p132
        $region26: #{tpu_custom_call.1} parent=11 // pred_check_branch
          %278 = sbr.rel (%p276) target = $region28
        $region27: #{tpu_custom_call.1} parent=11 // pred_region
          _
        $region28: #{tpu_custom_call.1} parent=11 // pred_fallthru
          _
        // Predicated region
        $region29: #{tpu_custom_call.1} parent=11 // pred_check
          %p279 = pneg %p153
        $region30: #{tpu_custom_call.1} parent=11 // pred_check_branch
          %281 = sbr.rel (%p279) target = $region32
        $region31: #{tpu_custom_call.1} parent=11 // pred_region
          _
        $region32: #{tpu_custom_call.1} parent=11 // pred_fallthru
          _
        // Predicated region
        $region33: #{tpu_custom_call.1} parent=11 // pred_check
          %p282 = pneg %p174
        $region34: #{tpu_custom_call.1} parent=11 // pred_check_branch
          %284 = sbr.rel (%p282) target = $region36
        $region35: #{tpu_custom_call.1} parent=11 // pred_region
          _
        $region36: #{tpu_custom_call.1} parent=11 // pred_fallthru
          _
        // Predicated region
        $region37: #{tpu_custom_call.1} parent=11 // pred_check
          %p285 = pneg %p195
        $region38: #{tpu_custom_call.1} parent=11 // pred_check_branch
          %287 = sbr.rel (%p285) target = $region40
        $region39: #{tpu_custom_call.1} parent=11 // pred_region
          %s289 = ssub.s32 18432, 18432
          %290 = vsyncadd [#allocation8], %s289
          %s291 = sshll.u32 [#allocation9], 4
          %s292 = int_to_ptr.vmem [resolvable:$true] %s291
          %297 = dma.hbm_to_vmem [thread:$0]  %s7, 18432, %s292, [#allocation8], 128, 128, 8
        $region40: #{tpu_custom_call.1} parent=11 // pred_fallthru
          _
        // Predicated region
        $region41: #{tpu_custom_call.1} parent=11 // pred_check
          %p298 = pneg %p216
        $region42: #{tpu_custom_call.1} parent=11 // pred_check_branch
          %300 = sbr.rel (%p298) target = $region44
        $region43: #{tpu_custom_call.1} parent=11 // pred_region
          _
        $region44: #{tpu_custom_call.1} parent=11 // pred_fallthru
          _
      $region12: #{tpu_custom_call.1} parent=5 // pred_fallthru
        _
      %p301 = scmp.lt.s32.totalorder %s22, 2
      // Predicated region
      $region45: #{tpu_custom_call.1} parent=5 // pred_check
        %p302 = pneg %p301
      $region46: #{tpu_custom_call.1} parent=5 // pred_check_branch
        %304 = sbr.rel (%p302) target = $region48
      $region47: #{tpu_custom_call.1} parent=5 // pred_region
        // Predicated region
        $region49: #{tpu_custom_call.1} parent=47 // pred_check
          %p305 = pneg %p42
        $region50: #{tpu_custom_call.1} parent=47 // pred_check_branch
          %307 = sbr.rel (%p305) target = $region52
        $region51: #{tpu_custom_call.1} parent=47 // pred_region
          %s308 = sand.u32 %s32, 1
          %s309 = scalar_lea.sflag [#allocation5], %s308
          %s310 = sand.u32 %s32, 1
          %s311 = smul.addr %s310, 256
          %s312 = scalar_lea.vmem [#allocation4], %s311
          %s314 = ssub.s32 4096, 4096
          %315 = vsyncadd %s309, %s314
          %s316 = smul.addr %s22, 32
          %s317 = smul.addr %s316, 128
          %s318 = scalar_lea.hbm %s0, %s317
          %s319 = sshll.u32 %s312, 4
          %s320 = int_to_ptr.vmem [resolvable:$true] %s319
          %325 = dma.hbm_to_vmem [thread:$0]  %s318, 4096, %s320, %s309, 128, 128, 8
        $region52: #{tpu_custom_call.1} parent=47 // pred_fallthru
          _
      $region48: #{tpu_custom_call.1} parent=5 // pred_fallthru
        _
      %p326 = scmp.le.s32.totalorder 1, %s22
      %p327 = scmp.lt.s32.totalorder %s22, 3
      %p328 = pnand %p326, %p327
      %p329 = pneg %p328
      // Predicated region
      $region53: #{tpu_custom_call.1} parent=5 // pred_check
        _
      $region54: #{tpu_custom_call.1} parent=5 // pred_check_branch
        %331 = sbr.rel (%p328) target = $region56
      $region55: #{tpu_custom_call.1} parent=5 // pred_region
        %s332 = ssub.s32 %s22, 1
        %s333 = sand.u32 %s35, 1
        %s334 = scalar_lea.sflag [#allocation5], %s333
        %s335 = sand.u32 %s35, 1
        %s336 = smul.addr %s335, 256
        %s337 = scalar_lea.vmem [#allocation4], %s336
        // Predicated region
        $region57: #{tpu_custom_call.1} parent=55 // pred_check
          %p338 = pneg %p48
        $region58: #{tpu_custom_call.1} parent=55 // pred_check_branch
          %340 = sbr.rel (%p338) target = $region60
        $region59: #{tpu_custom_call.1} parent=55 // pred_region
          %341 = dma.done %s334, 4096
        $region60: #{tpu_custom_call.1} parent=55 // pred_fallthru
          _
        // Predicated region
        $region61: #{tpu_custom_call.1} parent=55 // pred_check
          %p342 = pneg %p111
        $region62: #{tpu_custom_call.1} parent=55 // pred_check_branch
          %344 = sbr.rel (%p342) target = $region64
        $region63: #{tpu_custom_call.1} parent=55 // pred_region
          %345 = dma.done [#allocation8], 18432
        $region64: #{tpu_custom_call.1} parent=55 // pred_fallthru
          _
        // Predicated region
        $region65: #{tpu_custom_call.1} parent=55 // pred_check
          %p346 = pneg %p195
        $region66: #{tpu_custom_call.1} parent=55 // pred_check_branch
          %348 = sbr.rel (%p346) target = $region68
        $region67: #{tpu_custom_call.1} parent=55 // pred_region
          %349 = dma.done [#allocation8], 18432
        $region68: #{tpu_custom_call.1} parent=55 // pred_fallthru
          _
        %s350 = sand.u32 %s35, 1
        %s351 = scalar_lea.sflag [#allocation5], %s350
        %s352 = sand.u32 %s35, 1
        %s353 = smul.addr %s352, 256
        %s354 = scalar_lea.vmem [#allocation4], %s353
        %p355 = pneg %p48
        %p356 = pneg %p45
        %p357 = pneg %p69
        %p358 = pneg %p66
        %p359 = pneg %p90
        %p360 = pneg %p87
        %p361 = pneg %p111
        %p362 = pneg %p108
        %p363 = pneg %p132
        %p364 = pneg %p129
        %p365 = pneg %p153
        %p366 = pneg %p150
        %p367 = pneg %p174
        %p368 = pneg %p171
        %p369 = pneg %p195
        %p370 = pneg %p192
        %p371 = pneg %p216
        %p372 = pneg %p213
        %p373 = pneg %p242
        %p374 = pneg %p239
        %s375 = sand.u32 %s229, 1
        %s376 = scalar_lea.sflag [#allocation6], %s375
        %s377 = sand.u32 %s229, 1
        %s378 = smul.addr %s377, 256
        %s379 = scalar_lea.vmem [#allocation10], %s378
        %v380 = vld [vmem:[%s1] sm:$0x1]
        %v381 = vld [vmem:[%s2] sm:$0x1]
        %v382 = vld [vmem:[%s4] sm:$0x1]
        %v383 = vld [vmem:[%s5] sm:$0x1]
        %v384 = vld [vmem:[%s6] sm:$0x1]
        %v385 = vld [vmem:[%s8] sm:$0x1]
        %386 = vst [vmem:[#allocation2 + $0xf] sm:$0xff] 0.0
        %387 = vst [vmem:[#allocation2 + $0x17] sm:$0xff] 0.0
        %388 = vst [vmem:[#allocation2 + $0x1f] sm:$0x3] 0.0
        %s389 = scalar_lea.vmem [#allocation2], 816
        %390 = vst [vmem:[%s389 + $0xf] sm:$0xff] 0.0
        %391 = vst [vmem:[%s389 + $0x17] sm:$0xff] 0.0
        %392 = vst [vmem:[%s389 + $0x1f] sm:$0x3] 0.0
        %s393 = scalar_lea.vmem [#allocation2], 48
        %394 = vst [vmem:[%s393 + $0xf] sm:$0x1] 0.0
        %395 = vst [vmem:[%s393 + $0x3f] sm:$0x1] 0.0
        %396 = vst [vmem:[%s393 + $0x6f] sm:$0x1] 0.0
        %397 = vst [vmem:[%s393 + $0x9f] sm:$0x1] 0.0
        %398 = vst [vmem:[%s393 + $0xcf] sm:$0x1] 0.0
        %399 = vst [vmem:[%s393 + $0xff] sm:$0x1] 0.0
        %400 = vst [vmem:[%s393 + $0x12f] sm:$0x1] 0.0
        %401 = vst [vmem:[%s393 + $0x15f] sm:$0x1] 0.0
        %402 = vst [vmem:[%s393 + $0x18f] sm:$0x1] 0.0
        %403 = vst [vmem:[%s393 + $0x1bf] sm:$0x1] 0.0
        %404 = vst [vmem:[%s393 + $0x1ef] sm:$0x1] 0.0
        %405 = vst [vmem:[%s393 + $0x21f] sm:$0x1] 0.0
        %406 = vst [vmem:[%s393 + $0x24f] sm:$0x1] 0.0
        %407 = vst [vmem:[%s393 + $0x27f] sm:$0x1] 0.0
        %408 = vst [vmem:[%s393 + $0x2af] sm:$0x1] 0.0
        %409 = vst [vmem:[%s393 + $0x2df] sm:$0x1] 0.0
        %410 = vst [vmem:[%s393 + $0x20] sm:$0x1] 0.0
        %411 = vst [vmem:[%s393 + $0x50] sm:$0x1] 0.0
        %412 = vst [vmem:[%s393 + $0x80] sm:$0x1] 0.0
        %413 = vst [vmem:[%s393 + $0xb0] sm:$0x1] 0.0
        %414 = vst [vmem:[%s393 + $0xe0] sm:$0x1] 0.0
        %415 = vst [vmem:[%s393 + $0x110] sm:$0x1] 0.0
        %416 = vst [vmem:[%s393 + $0x140] sm:$0x1] 0.0
        %417 = vst [vmem:[%s393 + $0x170] sm:$0x1] 0.0
        %418 = vst [vmem:[%s393 + $0x1a0] sm:$0x1] 0.0
        %419 = vst [vmem:[%s393 + $0x1d0] sm:$0x1] 0.0
        %420 = vst [vmem:[%s393 + $0x200] sm:$0x1] 0.0
        %421 = vst [vmem:[%s393 + $0x230] sm:$0x1] 0.0
        %422 = vst [vmem:[%s393 + $0x260] sm:$0x1] 0.0
        %423 = vst [vmem:[%s393 + $0x290] sm:$0x1] 0.0
        %424 = vst [vmem:[%s393 + $0x2c0] sm:$0x1] 0.0
        %425 = vst [vmem:[%s393 + $0x2f0] sm:$0x1] 0.0
        %426 = vst [vmem:[#allocation3 + $0xf] sm:$0xff] 0.0
        %427 = vst [vmem:[#allocation3 + $0x17] sm:$0xff] 0.0
        %428 = vst [vmem:[#allocation3 + $0x1f] sm:$0x3] 0.0
        %s429 = scalar_lea.vmem [#allocation3], 816
        %430 = vst [vmem:[%s429 + $0xf] sm:$0xff] 0.0
        %431 = vst [vmem:[%s429 + $0x17] sm:$0xff] 0.0
        %432 = vst [vmem:[%s429 + $0x1f] sm:$0x3] 0.0
        %s433 = scalar_lea.vmem [#allocation3], 48
        %434 = vst [vmem:[%s433 + $0xf] sm:$0x1] 0.0
        %435 = vst [vmem:[%s433 + $0x3f] sm:$0x1] 0.0
        %436 = vst [vmem:[%s433 + $0x6f] sm:$0x1] 0.0
        %437 = vst [vmem:[%s433 + $0x9f] sm:$0x1] 0.0
        %438 = vst [vmem:[%s433 + $0xcf] sm:$0x1] 0.0
        %439 = vst [vmem:[%s433 + $0xff] sm:$0x1] 0.0
        %440 = vst [vmem:[%s433 + $0x12f] sm:$0x1] 0.0
        %441 = vst [vmem:[%s433 + $0x15f] sm:$0x1] 0.0
        %442 = vst [vmem:[%s433 + $0x18f] sm:$0x1] 0.0
        %443 = vst [vmem:[%s433 + $0x1bf] sm:$0x1] 0.0
        %444 = vst [vmem:[%s433 + $0x1ef] sm:$0x1] 0.0
        %445 = vst [vmem:[%s433 + $0x21f] sm:$0x1] 0.0
        %446 = vst [vmem:[%s433 + $0x24f] sm:$0x1] 0.0
        %447 = vst [vmem:[%s433 + $0x27f] sm:$0x1] 0.0
        %448 = vst [vmem:[%s433 + $0x2af] sm:$0x1] 0.0
        %449 = vst [vmem:[%s433 + $0x2df] sm:$0x1] 0.0
        %450 = vst [vmem:[%s433 + $0x20] sm:$0x1] 0.0
        %451 = vst [vmem:[%s433 + $0x50] sm:$0x1] 0.0
        %452 = vst [vmem:[%s433 + $0x80] sm:$0x1] 0.0
        %453 = vst [vmem:[%s433 + $0xb0] sm:$0x1] 0.0
        %454 = vst [vmem:[%s433 + $0xe0] sm:$0x1] 0.0
        %455 = vst [vmem:[%s433 + $0x110] sm:$0x1] 0.0
        %456 = vst [vmem:[%s433 + $0x140] sm:$0x1] 0.0
        %457 = vst [vmem:[%s433 + $0x170] sm:$0x1] 0.0
        %458 = vst [vmem:[%s433 + $0x1a0] sm:$0x1] 0.0
        %459 = vst [vmem:[%s433 + $0x1d0] sm:$0x1] 0.0
        %460 = vst [vmem:[%s433 + $0x200] sm:$0x1] 0.0
        %461 = vst [vmem:[%s433 + $0x230] sm:$0x1] 0.0
        %462 = vst [vmem:[%s433 + $0x260] sm:$0x1] 0.0
        %463 = vst [vmem:[%s433 + $0x290] sm:$0x1] 0.0
        %464 = vst [vmem:[%s433 + $0x2c0] sm:$0x1] 0.0
        %465 = vst [vmem:[%s433 + $0x2f0] sm:$0x1] 0.0
        loop: start=0, step=1, limit=2
        $region69: #{tpu_custom_call.1} parent=55 // loop_pre_header
          _
        $region70: #{tpu_custom_call.1} parent=55 // loop_header
          %s467 = sphi 0, %s471
          %p468 = scmp.ge.s32.totalorder %s467, 2
        $region71: #{tpu_custom_call.1} parent=55 // loop_header_branch
          %470 = sbr.rel (%p468) target = $region75
        $region72: #{tpu_custom_call.1} parent=55 // loop_body
          %s472 = smul.u32 %s467, 8
          %s473 = smul.u32 %s472, 16
          %s474 = scalar_lea.vmem %s337, %s473 [#allocation4]
          %v475 = vld [vmem:[%s474] sm:$0xff]
          %v476 = vld [vmem:[%s474 + $0x8] sm:$0xff]
          %v477 = vld [vmem:[%s474 + $0x10] sm:$0xff]
          %v478 = vld [vmem:[%s474 + $0x18] sm:$0xff]
          %v479 = vld [vmem:[%s474 + $0x20] sm:$0xff]
          %v480 = vld [vmem:[%s474 + $0x28] sm:$0xff]
          %v481 = vld [vmem:[%s474 + $0x30] sm:$0xff]
          %v482 = vld [vmem:[%s474 + $0x38] sm:$0xff]
          %v483 = vld [vmem:[%s474 + $0x40] sm:$0xff]
          %v484 = vld [vmem:[%s474 + $0x48] sm:$0xff]
          %v485 = vld [vmem:[%s474 + $0x50] sm:$0xff]
          %v486 = vld [vmem:[%s474 + $0x58] sm:$0xff]
          %v487 = vld [vmem:[%s474 + $0x60] sm:$0xff]
          %v488 = vld [vmem:[%s474 + $0x68] sm:$0xff]
          %v489 = vld [vmem:[%s474 + $0x70] sm:$0xff]
          %v490 = vld [vmem:[%s474 + $0x78] sm:$0xff]
          %v492 = vlaneseq
          %v493 = vshrl.u32 %v492, 7
          %v494 = vsub.s32 0, %v493
          %v495 = vrot.slane %v380, %v494
          %v497 = vmul.f32 %v475, %v495
          %v498 = vmul.f32 %v476, %v495
          %v499 = vmul.f32 %v477, %v495
          %v500 = vmul.f32 %v478, %v495
          %v501 = vmul.f32 %v479, %v495
          %v502 = vmul.f32 %v480, %v495
          %v503 = vmul.f32 %v481, %v495
          %v504 = vmul.f32 %v482, %v495
          %v505 = vmul.f32 %v483, %v495
          %v506 = vmul.f32 %v484, %v495
          %v507 = vmul.f32 %v485, %v495
          %v508 = vmul.f32 %v486, %v495
          %v509 = vmul.f32 %v487, %v495
          %v510 = vmul.f32 %v488, %v495
          %v511 = vmul.f32 %v489, %v495
          %v512 = vmul.f32 %v490, %v495
          %v514 = vlaneseq
          %v515 = vshrl.u32 %v514, 7
          %v516 = vsub.s32 0, %v515
          %v517 = vrot.slane %v381, %v516
          %v519 = vadd.f32 %v497, %v517
          %v520 = vadd.f32 %v498, %v517
          %v521 = vadd.f32 %v499, %v517
          %v522 = vadd.f32 %v500, %v517
          %v523 = vadd.f32 %v501, %v517
          %v524 = vadd.f32 %v502, %v517
          %v525 = vadd.f32 %v503, %v517
          %v526 = vadd.f32 %v504, %v517
          %v527 = vadd.f32 %v505, %v517
          %v528 = vadd.f32 %v506, %v517
          %v529 = vadd.f32 %v507, %v517
          %v530 = vadd.f32 %v508, %v517
          %v531 = vadd.f32 %v509, %v517
          %v532 = vadd.f32 %v510, %v517
          %v533 = vadd.f32 %v511, %v517
          %v534 = vadd.f32 %v512, %v517
          %v535 = vmax.f32 %v519, 0.0
          %v536 = vmax.f32 %v520, 0.0
          %v537 = vmax.f32 %v521, 0.0
          %v538 = vmax.f32 %v522, 0.0
          %v539 = vmax.f32 %v523, 0.0
          %v540 = vmax.f32 %v524, 0.0
          %v541 = vmax.f32 %v525, 0.0
          %v542 = vmax.f32 %v526, 0.0
          %v543 = vmax.f32 %v527, 0.0
          %v544 = vmax.f32 %v528, 0.0
          %v545 = vmax.f32 %v529, 0.0
          %v546 = vmax.f32 %v530, 0.0
          %v547 = vmax.f32 %v531, 0.0
          %v548 = vmax.f32 %v532, 0.0
          %v549 = vmax.f32 %v533, 0.0
          %v550 = vmax.f32 %v534, 0.0
          %s551 = sadd.s32 %s472, 1
          %s552 = smul.u32 %s551, 48
          %s553 = scalar_lea.vmem [#allocation2], %s552
          %554 = vst [vmem:[%s553 + $0x10] sm:$0xff] %v535
          %555 = vst [vmem:[%s553 + $0x18] sm:$0xff] %v536
          %556 = vst [vmem:[%s553 + $0x40] sm:$0xff] %v537
          %557 = vst [vmem:[%s553 + $0x48] sm:$0xff] %v538
          %558 = vst [vmem:[%s553 + $0x70] sm:$0xff] %v539
          %559 = vst [vmem:[%s553 + $0x78] sm:$0xff] %v540
          %560 = vst [vmem:[%s553 + $0xa0] sm:$0xff] %v541
          %561 = vst [vmem:[%s553 + $0xa8] sm:$0xff] %v542
          %562 = vst [vmem:[%s553 + $0xd0] sm:$0xff] %v543
          %563 = vst [vmem:[%s553 + $0xd8] sm:$0xff] %v544
          %564 = vst [vmem:[%s553 + $0x100] sm:$0xff] %v545
          %565 = vst [vmem:[%s553 + $0x108] sm:$0xff] %v546
          %566 = vst [vmem:[%s553 + $0x130] sm:$0xff] %v547
          %567 = vst [vmem:[%s553 + $0x138] sm:$0xff] %v548
          %568 = vst [vmem:[%s553 + $0x160] sm:$0xff] %v549
          %569 = vst [vmem:[%s553 + $0x168] sm:$0xff] %v550
        $region73: #{tpu_custom_call.1} parent=55 // loop_footer
          %s471 = sadd.s32 1, %s467
        $region74: #{tpu_custom_call.1} parent=55 // loop_footer_branch
          %466 = sbr.rel target = $region70
        $region75: #{tpu_custom_call.1} parent=55 // loop_exit
          _
        loop: start=0, step=1, limit=2
        $region76: #{tpu_custom_call.1} parent=55 // loop_pre_header
          _
        $region77: #{tpu_custom_call.1} parent=55 // loop_header
          %s571 = sphi 0, %s575
          %p572 = scmp.ge.s32.totalorder %s571, 2
        $region78: #{tpu_custom_call.1} parent=55 // loop_header_branch
          %574 = sbr.rel (%p572) target = $region82
        $region79: #{tpu_custom_call.1} parent=55 // loop_body
          %s576 = smul.u32 %s571, 8
          %s577 = smul.u32 %s576, 48
          %s578 = scalar_lea.vmem [#allocation2], %s577
          %v579 = vld [vmem:[%s578 + $0xf] sm:$0xff]
          %v580 = vld [vmem:[%s578 + $0x17] sm:$0xff]
          %v581 = vld [vmem:[%s578 + $0x3f] sm:$0xff]
          %v582 = vld [vmem:[%s578 + $0x47] sm:$0xff]
          %v583 = vld [vmem:[%s578 + $0x6f] sm:$0xff]
          %v584 = vld [vmem:[%s578 + $0x77] sm:$0xff]
          %v585 = vld [vmem:[%s578 + $0x9f] sm:$0xff]
          %v586 = vld [vmem:[%s578 + $0xa7] sm:$0xff]
          %v587 = vld [vmem:[%s578 + $0xcf] sm:$0xff]
          %v588 = vld [vmem:[%s578 + $0xd7] sm:$0xff]
          %v589 = vld [vmem:[%s578 + $0xff] sm:$0xff]
          %v590 = vld [vmem:[%s578 + $0x107] sm:$0xff]
          %v591 = vld [vmem:[%s578 + $0x12f] sm:$0xff]
          %v592 = vld [vmem:[%s578 + $0x137] sm:$0xff]
          %v593 = vld [vmem:[%s578 + $0x15f] sm:$0xff]
          %v594 = vld [vmem:[%s578 + $0x167] sm:$0xff]
          %v595 = vld [vmem:[#allocation7] sm:$0xff]
          %v596 = vld [vmem:[#allocation7 + $0x8] sm:$0xff]
          %v597 = vld [vmem:[#allocation7 + $0x10] sm:$0xff]
          %v598 = vld [vmem:[#allocation7 + $0x18] sm:$0xff]
          %v599 = vld [vmem:[#allocation7 + $0x20] sm:$0xff]
          %v600 = vld [vmem:[#allocation7 + $0x28] sm:$0xff]
          %v601 = vld [vmem:[#allocation7 + $0x30] sm:$0xff]
          %v602 = vld [vmem:[#allocation7 + $0x38] sm:$0xff]
          %v603 = vld [vmem:[#allocation7 + $0x40] sm:$0xff]
          %v604 = vld [vmem:[#allocation7 + $0x48] sm:$0xff]
          %v605 = vld [vmem:[#allocation7 + $0x50] sm:$0xff]
          %v606 = vld [vmem:[#allocation7 + $0x58] sm:$0xff]
          %v607 = vld [vmem:[#allocation7 + $0x60] sm:$0xff]
          %v608 = vld [vmem:[#allocation7 + $0x68] sm:$0xff]
          %v609 = vld [vmem:[#allocation7 + $0x70] sm:$0xff]
          %v610 = vld [vmem:[#allocation7 + $0x78] sm:$0xff]
          %v611 = vld [vmem:[%s578 + $0x10] sm:$0xff]
          %v612 = vld [vmem:[%s578 + $0x18] sm:$0xff]
          %v613 = vld [vmem:[%s578 + $0x40] sm:$0xff]
          %v614 = vld [vmem:[%s578 + $0x48] sm:$0xff]
          %v615 = vld [vmem:[%s578 + $0x70] sm:$0xff]
          %v616 = vld [vmem:[%s578 + $0x78] sm:$0xff]
          %v617 = vld [vmem:[%s578 + $0xa0] sm:$0xff]
          %v618 = vld [vmem:[%s578 + $0xa8] sm:$0xff]
          %v619 = vld [vmem:[%s578 + $0xd0] sm:$0xff]
          %v620 = vld [vmem:[%s578 + $0xd8] sm:$0xff]
          %v621 = vld [vmem:[%s578 + $0x100] sm:$0xff]
          %v622 = vld [vmem:[%s578 + $0x108] sm:$0xff]
          %v623 = vld [vmem:[%s578 + $0x130] sm:$0xff]
          %v624 = vld [vmem:[%s578 + $0x138] sm:$0xff]
          %v625 = vld [vmem:[%s578 + $0x160] sm:$0xff]
          %v626 = vld [vmem:[%s578 + $0x168] sm:$0xff]
          %s627 = scalar_lea.vmem [#allocation7], 128
          %v628 = vld [vmem:[%s627] sm:$0xff]
          %v629 = vld [vmem:[%s627 + $0x8] sm:$0xff]
          %v630 = vld [vmem:[%s627 + $0x10] sm:$0xff]
          %v631 = vld [vmem:[%s627 + $0x18] sm:$0xff]
          %v632 = vld [vmem:[%s627 + $0x20] sm:$0xff]
          %v633 = vld [vmem:[%s627 + $0x28] sm:$0xff]
          %v634 = vld [vmem:[%s627 + $0x30] sm:$0xff]
          %v635 = vld [vmem:[%s627 + $0x38] sm:$0xff]
          %v636 = vld [vmem:[%s627 + $0x40] sm:$0xff]
          %v637 = vld [vmem:[%s627 + $0x48] sm:$0xff]
          %v638 = vld [vmem:[%s627 + $0x50] sm:$0xff]
          %v639 = vld [vmem:[%s627 + $0x58] sm:$0xff]
          %v640 = vld [vmem:[%s627 + $0x60] sm:$0xff]
          %v641 = vld [vmem:[%s627 + $0x68] sm:$0xff]
          %v642 = vld [vmem:[%s627 + $0x70] sm:$0xff]
          %v643 = vld [vmem:[%s627 + $0x78] sm:$0xff]
          %644 = vmatprep.subr.mxu0 0.0
          %645 = vmatpush1.msra.mxu0 %v628
          %646 = vmatprep.subr.mxu0 0.0
          %647 = vmatpush1.msra.mxu0 %v629
          %648 = vmatprep.subr.mxu0 0.0
          %649 = vmatpush1.msra.mxu0 %v630
          %650 = vmatprep.subr.mxu0 0.0
          %651 = vmatpush1.msra.mxu0 %v631
          %652 = vmatprep.subr.mxu0 0.0
          %653 = vmatpush1.msra.mxu0 %v632
          %654 = vmatprep.subr.mxu0 0.0
          %655 = vmatpush1.msra.mxu0 %v633
          %656 = vmatprep.subr.mxu0 0.0
          %657 = vmatpush1.msra.mxu0 %v634
          %658 = vmatprep.subr.mxu0 0.0
          %659 = vmatpush1.msra.mxu0 %v635
          %660 = vmatprep.subr.mxu0 0.0
          %661 = vmatpush1.msra.mxu0 %v636
          %662 = vmatprep.subr.mxu0 0.0
          %663 = vmatpush1.msra.mxu0 %v637
          %664 = vmatprep.subr.mxu0 0.0
          %665 = vmatpush1.msra.mxu0 %v638
          %666 = vmatprep.subr.mxu0 0.0
          %667 = vmatpush1.msra.mxu0 %v639
          %668 = vmatprep.subr.mxu0 0.0
          %669 = vmatpush1.msra.mxu0 %v640
          %670 = vmatprep.subr.mxu0 0.0
          %671 = vmatpush1.msra.mxu0 %v641
          %672 = vmatprep.subr.mxu0 0.0
          %673 = vmatpush1.msra.mxu0 %v642
          %674 = vmatprep.subr.mxu0 0.0
          %675 = vmatpush1.msra.mxu0 %v643
          %676 = vmatprep.subr.mxu0 0.0
          %677 = vmatpush1.msra.mxu0 0.0
          %678 = vmatprep.subr.mxu0 0.0
          %679 = vmatpush1.msra.mxu0 0.0
          %680 = vmatprep.subr.mxu0 0.0
          %681 = vmatpush1.msra.mxu0 0.0
          %682 = vmatprep.subr.mxu0 0.0
          %683 = vmatpush1.msra.mxu0 0.0
          %684 = vmatprep.subr.mxu0 0.0
          %685 = vmatpush1.msra.mxu0 0.0
          %686 = vmatprep.subr.mxu0 0.0
          %687 = vmatpush1.msra.mxu0 0.0
          %688 = vmatprep.subr.mxu0 0.0
          %689 = vmatpush1.msra.mxu0 0.0
          %690 = vmatprep.subr.mxu0 0.0
          %691 = vmatpush1.msra.mxu0 0.0
          %692 = vmatprep.subr.mxu0 0.0
          %693 = vmatpush1.msra.mxu0 0.0
          %694 = vmatprep.subr.mxu0 0.0
          %695 = vmatpush1.msra.mxu0 0.0
          %696 = vmatprep.subr.mxu0 0.0
          %697 = vmatpush1.msra.mxu0 0.0
          %698 = vmatprep.subr.mxu0 0.0
          %699 = vmatpush1.msra.mxu0 0.0
          %700 = vmatprep.subr.mxu0 0.0
          %701 = vmatpush1.msra.mxu0 0.0
          %702 = vmatprep.subr.mxu0 0.0
          %703 = vmatpush1.msra.mxu0 0.0
          %704 = vmatprep.subr.mxu0 0.0
          %705 = vmatpush1.msra.mxu0 0.0
          %706 = vmatprep.subr.mxu0 0.0
          %707 = vmatpush1.msra.mxu0 0.0
          %708 = vmatprep.mubr.f32.mxu0 0.0
          %709 = vmatmul.mubr.f32.gmra.mrb[0].mxu0 %v611
          %v710 = vpop.f32.mrb[0].mxu0
          %v711 = vadd.f32 0.0, %v710
          %v712 = vpop.f32.mrb[0].mxu0
          %713 = vmatprep.mubr.f32.mxu0 0.0
          %714 = vmatmul.mubr.f32.gmra.mrb[0].mxu0 %v612
          %v715 = vpop.f32.mrb[0].mxu0
          %v716 = vadd.f32 0.0, %v715
          %v717 = vpop.f32.mrb[0].mxu0
          %718 = vmatprep.mubr.f32.mxu0 0.0
          %719 = vmatmul.mubr.f32.gmra.mrb[0].mxu0 %v613
          %v720 = vpop.f32.mrb[0].mxu0
          %v721 = vadd.f32 0.0, %v720
          %v722 = vpop.f32.mrb[0].mxu0
          %723 = vmatprep.mubr.f32.mxu0 0.0
          %724 = vmatmul.mubr.f32.gmra.mrb[0].mxu0 %v614
          %v725 = vpop.f32.mrb[0].mxu0
          %v726 = vadd.f32 0.0, %v725
          %v727 = vpop.f32.mrb[0].mxu0
          %728 = vmatprep.mubr.f32.mxu0 0.0
          %729 = vmatmul.mubr.f32.gmra.mrb[0].mxu0 %v615
          %v730 = vpop.f32.mrb[0].mxu0
          %v731 = vadd.f32 0.0, %v730
          %v732 = vpop.f32.mrb[0].mxu0
          %733 = vmatprep.mubr.f32.mxu0 0.0
          %734 = vmatmul.mubr.f32.gmra.mrb[0].mxu0 %v616
          %v735 = vpop.f32.mrb[0].mxu0
          %v736 = vadd.f32 0.0, %v735
          %v737 = vpop.f32.mrb[0].mxu0
          %738 = vmatprep.mubr.f32.mxu0 0.0
          %739 = vmatmul.mubr.f32.gmra.mrb[0].mxu0 %v617
          %v740 = vpop.f32.mrb[0].mxu0
          %v741 = vadd.f32 0.0, %v740
          %v742 = vpop.f32.mrb[0].mxu0
          %743 = vmatprep.mubr.f32.mxu0 0.0
          %744 = vmatmul.mubr.f32.gmra.mrb[0].mxu0 %v618
          %v745 = vpop.f32.mrb[0].mxu0
          %v746 = vadd.f32 0.0, %v745
          %v747 = vpop.f32.mrb[0].mxu0
          %748 = vmatprep.mubr.f32.mxu0 0.0
          %749 = vmatmul.mubr.f32.gmra.mrb[0].mxu0 %v619
          %v750 = vpop.f32.mrb[0].mxu0
          %v751 = vadd.f32 0.0, %v750
          %v752 = vpop.f32.mrb[0].mxu0
          %753 = vmatprep.mubr.f32.mxu0 0.0
          %754 = vmatmul.mubr.f32.gmra.mrb[0].mxu0 %v620
          %v755 = vpop.f32.mrb[0].mxu0
          %v756 = vadd.f32 0.0, %v755
          %v757 = vpop.f32.mrb[0].mxu0
          %758 = vmatprep.mubr.f32.mxu0 0.0
          %759 = vmatmul.mubr.f32.gmra.mrb[0].mxu0 %v621
          %v760 = vpop.f32.mrb[0].mxu0
          %v761 = vadd.f32 0.0, %v760
          %v762 = vpop.f32.mrb[0].mxu0
          %763 = vmatprep.mubr.f32.mxu0 0.0
          %764 = vmatmul.mubr.f32.gmra.mrb[0].mxu0 %v622
          %v765 = vpop.f32.mrb[0].mxu0
          %v766 = vadd.f32 0.0, %v765
          %v767 = vpop.f32.mrb[0].mxu0
          %768 = vmatprep.mubr.f32.mxu0 0.0
          %769 = vmatmul.mubr.f32.gmra.mrb[0].mxu0 %v623
          %v770 = vpop.f32.mrb[0].mxu0
          %v771 = vadd.f32 0.0, %v770
          %v772 = vpop.f32.mrb[0].mxu0
          %773 = vmatprep.mubr.f32.mxu0 0.0
          %774 = vmatmul.mubr.f32.gmra.mrb[0].mxu0 %v624
          %v775 = vpop.f32.mrb[0].mxu0
          %v776 = vadd.f32 0.0, %v775
          %v777 = vpop.f32.mrb[0].mxu0
          %778 = vmatprep.mubr.f32.mxu0 0.0
          %779 = vmatmul.mubr.f32.gmra.mrb[0].mxu0 %v625
          %v780 = vpop.f32.mrb[0].mxu0
          %v781 = vadd.f32 0.0, %v780
          %v782 = vpop.f32.mrb[0].mxu0
          %783 = vmatprep.mubr.f32.mxu0 0.0
          %784 = vmatmul.mubr.f32.gmra.mrb[0].mxu0 %v626
          %v785 = vpop.f32.mrb[0].mxu0
          %v786 = vadd.f32 0.0, %v785
          %v787 = vpop.f32.mrb[0].mxu0
          %788 = vdwg.mxu0
          %789 = vmatprep.subr.mxu0 0.0
          %790 = vmatpush1.msra.mxu0 %v595
          %791 = vmatprep.subr.mxu0 0.0
          %792 = vmatpush1.msra.mxu0 %v596
          %793 = vmatprep.subr.mxu0 0.0
          %794 = vmatpush1.msra.mxu0 %v597
          %795 = vmatprep.subr.mxu0 0.0
          %796 = vmatpush1.msra.mxu0 %v598
          %797 = vmatprep.subr.mxu0 0.0
          %798 = vmatpush1.msra.mxu0 %v599
          %799 = vmatprep.subr.mxu0 0.0
          %800 = vmatpush1.msra.mxu0 %v600
          %801 = vmatprep.subr.mxu0 0.0
          %802 = vmatpush1.msra.mxu0 %v601
          %803 = vmatprep.subr.mxu0 0.0
          %804 = vmatpush1.msra.mxu0 %v602
          %805 = vmatprep.subr.mxu0 0.0
          %806 = vmatpush1.msra.mxu0 %v603
          %807 = vmatprep.subr.mxu0 0.0
          %808 = vmatpush1.msra.mxu0 %v604
          %809 = vmatprep.subr.mxu0 0.0
          %810 = vmatpush1.msra.mxu0 %v605
          %811 = vmatprep.subr.mxu0 0.0
          %812 = vmatpush1.msra.mxu0 %v606
          %813 = vmatprep.subr.mxu0 0.0
          %814 = vmatpush1.msra.mxu0 %v607
          %815 = vmatprep.subr.mxu0 0.0
          %816 = vmatpush1.msra.mxu0 %v608
          %817 = vmatprep.subr.mxu0 0.0
          %818 = vmatpush1.msra.mxu0 %v609
          %819 = vmatprep.subr.mxu0 0.0
          %820 = vmatpush1.msra.mxu0 %v610
          %821 = vmatprep.subr.mxu0 0.0
          %822 = vmatpush1.msra.mxu0 0.0
          %823 = vmatprep.subr.mxu0 0.0
          %824 = vmatpush1.msra.mxu0 0.0
          %825 = vmatprep.subr.mxu0 0.0
          %826 = vmatpush1.msra.mxu0 0.0
          %827 = vmatprep.subr.mxu0 0.0
          %828 = vmatpush1.msra.mxu0 0.0
          %829 = vmatprep.subr.mxu0 0.0
          %830 = vmatpush1.msra.mxu0 0.0
          %831 = vmatprep.subr.mxu0 0.0
          %832 = vmatpush1.msra.mxu0 0.0
          %833 = vmatprep.subr.mxu0 0.0
          %834 = vmatpush1.msra.mxu0 0.0
          %835 = vmatprep.subr.mxu0 0.0
          %836 = vmatpush1.msra.mxu0 0.0
          %837 = vmatprep.subr.mxu0 0.0
          %838 = vmatpush1.msra.mxu0 0.0
          %839 = vmatprep.subr.mxu0 0.0
          %840 = vmatpush1.msra.mxu0 0.0
          %841 = vmatprep.subr.mxu0 0.0
          %842 = vmatpush1.msra.mxu0 0.0
          %843 = vmatprep.subr.mxu0 0.0
          %844 = vmatpush1.msra.mxu0 0.0
          %845 = vmatprep.subr.mxu0 0.0
          %846 = vmatpush1.msra.mxu0 0.0
          %847 = vmatprep.subr.mxu0 0.0
          %848 = vmatpush1.msra.mxu0 0.0
          %849 = vmatprep.subr.mxu0 0.0
          %850 = vmatpush1.msra.mxu0 0.0
          %851 = vmatprep.subr.mxu0 0.0
          %852 = vmatpush1.msra.mxu0 0.0
          %853 = vmatprep.mubr.f32.mxu0 0.0
          %854 = vmatmul.mubr.f32.gmra.mrb[0].mxu0 %v579
          %v855 = vpop.f32.mrb[0].mxu0
          %v856 = vadd.f32 %v711, %v855
          %v857 = vpop.f32.mrb[0].mxu0
          %858 = vmatprep.mubr.f32.mxu0 0.0
          %859 = vmatmul.mubr.f32.gmra.mrb[0].mxu0 %v580
          %v860 = vpop.f32.mrb[0].mxu0
          %v861 = vadd.f32 %v716, %v860
          %v862 = vpop.f32.mrb[0].mxu0
          %863 = vmatprep.mubr.f32.mxu0 0.0
          %864 = vmatmul.mubr.f32.gmra.mrb[0].mxu0 %v581
          %v865 = vpop.f32.mrb[0].mxu0
          %v866 = vadd.f32 %v721, %v865
          %v867 = vpop.f32.mrb[0].mxu0
          %868 = vmatprep.mubr.f32.mxu0 0.0
          %869 = vmatmul.mubr.f32.gmra.mrb[0].mxu0 %v582
          %v870 = vpop.f32.mrb[0].mxu0
          %v871 = vadd.f32 %v726, %v870
          %v872 = vpop.f32.mrb[0].mxu0
          %873 = vmatprep.mubr.f32.mxu0 0.0
          %874 = vmatmul.mubr.f32.gmra.mrb[0].mxu0 %v583
          %v875 = vpop.f32.mrb[0].mxu0
          %v876 = vadd.f32 %v731, %v875
          %v877 = vpop.f32.mrb[0].mxu0
          %878 = vmatprep.mubr.f32.mxu0 0.0
          %879 = vmatmul.mubr.f32.gmra.mrb[0].mxu0 %v584
          %v880 = vpop.f32.mrb[0].mxu0
          %v881 = vadd.f32 %v736, %v880
          %v882 = vpop.f32.mrb[0].mxu0
          %883 = vmatprep.mubr.f32.mxu0 0.0
          %884 = vmatmul.mubr.f32.gmra.mrb[0].mxu0 %v585
          %v885 = vpop.f32.mrb[0].mxu0
          %v886 = vadd.f32 %v741, %v885
          %v887 = vpop.f32.mrb[0].mxu0
          %888 = vmatprep.mubr.f32.mxu0 0.0
          %889 = vmatmul.mubr.f32.gmra.mrb[0].mxu0 %v586
          %v890 = vpop.f32.mrb[0].mxu0
          %v891 = vadd.f32 %v746, %v890
          %v892 = vpop.f32.mrb[0].mxu0
          %893 = vmatprep.mubr.f32.mxu0 0.0
          %894 = vmatmul.mubr.f32.gmra.mrb[0].mxu0 %v587
          %v895 = vpop.f32.mrb[0].mxu0
          %v896 = vadd.f32 %v751, %v895
          %v897 = vpop.f32.mrb[0].mxu0
          %898 = vmatprep.mubr.f32.mxu0 0.0
          %899 = vmatmul.mubr.f32.gmra.mrb[0].mxu0 %v588
          %v900 = vpop.f32.mrb[0].mxu0
          %v901 = vadd.f32 %v756, %v900
          %v902 = vpop.f32.mrb[0].mxu0
          %903 = vmatprep.mubr.f32.mxu0 0.0
          %904 = vmatmul.mubr.f32.gmra.mrb[0].mxu0 %v589
          %v905 = vpop.f32.mrb[0].mxu0
          %v906 = vadd.f32 %v761, %v905
          %v907 = vpop.f32.mrb[0].mxu0
          %908 = vmatprep.mubr.f32.mxu0 0.0
          %909 = vmatmul.mubr.f32.gmra.mrb[0].mxu0 %v590
          %v910 = vpop.f32.mrb[0].mxu0
          %v911 = vadd.f32 %v766, %v910
          %v912 = vpop.f32.mrb[0].mxu0
          %913 = vmatprep.mubr.f32.mxu0 0.0
          %914 = vmatmul.mubr.f32.gmra.mrb[0].mxu0 %v591
          %v915 = vpop.f32.mrb[0].mxu0
          %v916 = vadd.f32 %v771, %v915
          %v917 = vpop.f32.mrb[0].mxu0
          %918 = vmatprep.mubr.f32.mxu0 0.0
          %919 = vmatmul.mubr.f32.gmra.mrb[0].mxu0 %v592
          %v920 = vpop.f32.mrb[0].mxu0
          %v921 = vadd.f32 %v776, %v920
          %v922 = vpop.f32.mrb[0].mxu0
          %923 = vmatprep.mubr.f32.mxu0 0.0
          %924 = vmatmul.mubr.f32.gmra.mrb[0].mxu0 %v593
          %v925 = vpop.f32.mrb[0].mxu0
          %v926 = vadd.f32 %v781, %v925
          %v927 = vpop.f32.mrb[0].mxu0
          %928 = vmatprep.mubr.f32.mxu0 0.0
          %929 = vmatmul.mubr.f32.gmra.mrb[0].mxu0 %v594
          %v930 = vpop.f32.mrb[0].mxu0
          %v931 = vadd.f32 %v786, %v930
          %v932 = vpop.f32.mrb[0].mxu0
          %933 = vdwg.mxu0
          %v934 = vld [vmem:[%s578 + $0x11] sm:$0xff]
          %v935 = vld [vmem:[%s578 + $0x19] sm:$0xff]
          %v936 = vld [vmem:[%s578 + $0x41] sm:$0xff]
          %v937 = vld [vmem:[%s578 + $0x49] sm:$0xff]
          %v938 = vld [vmem:[%s578 + $0x71] sm:$0xff]
          %v939 = vld [vmem:[%s578 + $0x79] sm:$0xff]
          %v940 = vld [vmem:[%s578 + $0xa1] sm:$0xff]
          %v941 = vld [vmem:[%s578 + $0xa9] sm:$0xff]
          %v942 = vld [vmem:[%s578 + $0xd1] sm:$0xff]
          %v943 = vld [vmem:[%s578 + $0xd9] sm:$0xff]
          %v944 = vld [vmem:[%s578 + $0x101] sm:$0xff]
          %v945 = vld [vmem:[%s578 + $0x109] sm:$0xff]
          %v946 = vld [vmem:[%s578 + $0x131] sm:$0xff]
          %v947 = vld [vmem:[%s578 + $0x139] sm:$0xff]
          %v948 = vld [vmem:[%s578 + $0x161] sm:$0xff]
          %v949 = vld [vmem:[%s578 + $0x169] sm:$0xff]
          %s950 = scalar_lea.vmem [#allocation7], 256
          %v951 = vld [vmem:[%s950] sm:$0xff]
          %v952 = vld [vmem:[%s950 + $0x8] sm:$0xff]
          %v953 = vld [vmem:[%s950 + $0x10] sm:$0xff]
          %v954 = vld [vmem:[%s950 + $0x18] sm:$0xff]
          %v955 = vld [vmem:[%s950 + $0x20] sm:$0xff]
          %v956 = vld [vmem:[%s950 + $0x28] sm:$0xff]
          %v957 = vld [vmem:[%s950 + $0x30] sm:$0xff]
          %v958 = vld [vmem:[%s950 + $0x38] sm:$0xff]
          %v959 = vld [vmem:[%s950 + $0x40] sm:$0xff]
          %v960 = vld [vmem:[%s950 + $0x48] sm:$0xff]
          %v961 = vld [vmem:[%s950 + $0x50] sm:$0xff]
          %v962 = vld [vmem:[%s950 + $0x58] sm:$0xff]
          %v963 = vld [vmem:[%s950 + $0x60] sm:$0xff]
          %v964 = vld [vmem:[%s950 + $0x68] sm:$0xff]
          %v965 = vld [vmem:[%s950 + $0x70] sm:$0xff]
          %v966 = vld [vmem:[%s950 + $0x78] sm:$0xff]
          %967 = vmatprep.subr.mxu0 0.0
          %968 = vmatpush1.msra.mxu0 %v951
          %969 = vmatprep.subr.mxu0 0.0
          %970 = vmatpush1.msra.mxu0 %v952
          %971 = vmatprep.subr.mxu0 0.0
          %972 = vmatpush1.msra.mxu0 %v953
          %973 = vmatprep.subr.mxu0 0.0
          %974 = vmatpush1.msra.mxu0 %v954
          %975 = vmatprep.subr.mxu0 0.0
          %976 = vmatpush1.msra.mxu0 %v955
          %977 = vmatprep.subr.mxu0 0.0
          %978 = vmatpush1.msra.mxu0 %v956
          %979 = vmatprep.subr.mxu0 0.0
          %980 = vmatpush1.msra.mxu0 %v957
          %981 = vmatprep.subr.mxu0 0.0
          %982 = vmatpush1.msra.mxu0 %v958
          %983 = vmatprep.subr.mxu0 0.0
          %984 = vmatpush1.msra.mxu0 %v959
          %985 = vmatprep.subr.mxu0 0.0
          %986 = vmatpush1.msra.mxu0 %v960
          %987 = vmatprep.subr.mxu0 0.0
          %988 = vmatpush1.msra.mxu0 %v961
          %989 = vmatprep.subr.mxu0 0.0
          %990 = vmatpush1.msra.mxu0 %v962
          %991 = vmatprep.subr.mxu0 0.0
          %992 = vmatpush1.msra.mxu0 %v963
          %993 = vmatprep.subr.mxu0 0.0
          %994 = vmatpush1.msra.mxu0 %v964
          %995 = vmatprep.subr.mxu0 0.0
          %996 = vmatpush1.msra.mxu0 %v965
          %997 = vmatprep.subr.mxu0 0.0
          %998 = vmatpush1.msra.mxu0 %v966
          %999 = vmatprep.subr.mxu0 0.0
          %1000 = vmatpush1.msra.mxu0 0.0
          %1001 = vmatprep.subr.mxu0 0.0
          %1002 = vmatpush1.msra.mxu0 0.0
          %1003 = vmatprep.subr.mxu0 0.0
          %1004 = vmatpush1.msra.mxu0 0.0
          %1005 = vmatprep.subr.mxu0 0.0
          %1006 = vmatpush1.msra.mxu0 0.0
          %1007 = vmatprep.subr.mxu0 0.0
          %1008 = vmatpush1.msra.mxu0 0.0
          %1009 = vmatprep.subr.mxu0 0.0
          %1010 = vmatpush1.msra.mxu0 0.0
          %1011 = vmatprep.subr.mxu0 0.0
          %1012 = vmatpush1.msra.mxu0 0.0
          %1013 = vmatprep.subr.mxu0 0.0
          %1014 = vmatpush1.msra.mxu0 0.0
          %1015 = vmatprep.subr.mxu0 0.0
          %1016 = vmatpush1.msra.mxu0 0.0
          %1017 = vmatprep.subr.mxu0 0.0
          %1018 = vmatpush1.msra.mxu0 0.0
          %1019 = vmatprep.subr.mxu0 0.0
          %1020 = vmatpush1.msra.mxu0 0.0
          %1021 = vmatprep.subr.mxu0 0.0
          %1022 = vmatpush1.msra.mxu0 0.0
          %1023 = vmatprep.subr.mxu0 0.0
          %1024 = vmatpush1.msra.mxu0 0.0
          %1025 = vmatprep.subr.mxu0 0.0
          %1026 = vmatpush1.msra.mxu0 0.0
          %1027 = vmatprep.subr.mxu0 0.0
          %1028 = vmatpush1.msra.mxu0 0.0
          %1029 = vmatprep.subr.mxu0 0.0
          %1030 = vmatpush1.msra.mxu0 0.0
          %1031 = vmatprep.mubr.f32.mxu0 0.0
          %1032 = vmatmul.mubr.f32.gmra.mrb[0].mxu0 %v934
          %v1033 = vpop.f32.mrb[0].mxu0
          %v1034 = vadd.f32 0.0, %v1033
          %v1035 = vpop.f32.mrb[0].mxu0
          %1036 = vmatprep.mubr.f32.mxu0 0.0
          %1037 = vmatmul.mubr.f32.gmra.mrb[0].mxu0 %v935
          %v1038 = vpop.f32.mrb[0].mxu0
          %v1039 = vadd.f32 0.0, %v1038
          %v1040 = vpop.f32.mrb[0].mxu0
          %1041 = vmatprep.mubr.f32.mxu0 0.0
          %1042 = vmatmul.mubr.f32.gmra.mrb[0].mxu0 %v936
          %v1043 = vpop.f32.mrb[0].mxu0
          %v1044 = vadd.f32 0.0, %v1043
          %v1045 = vpop.f32.mrb[0].mxu0
          %1046 = vmatprep.mubr.f32.mxu0 0.0
          %1047 = vmatmul.mubr.f32.gmra.mrb[0].mxu0 %v937
          %v1048 = vpop.f32.mrb[0].mxu0
          %v1049 = vadd.f32 0.0, %v1048
          %v1050 = vpop.f32.mrb[0].mxu0
          %1051 = vmatprep.mubr.f32.mxu0 0.0
          %1052 = vmatmul.mubr.f32.gmra.mrb[0].mxu0 %v938
          %v1053 = vpop.f32.mrb[0].mxu0
          %v1054 = vadd.f32 0.0, %v1053
          %v1055 = vpop.f32.mrb[0].mxu0
          %1056 = vmatprep.mubr.f32.mxu0 0.0
          %1057 = vmatmul.mubr.f32.gmra.mrb[0].mxu0 %v939
          %v1058 = vpop.f32.mrb[0].mxu0
          %v1059 = vadd.f32 0.0, %v1058
          %v1060 = vpop.f32.mrb[0].mxu0
          %1061 = vmatprep.mubr.f32.mxu0 0.0
          %1062 = vmatmul.mubr.f32.gmra.mrb[0].mxu0 %v940
          %v1063 = vpop.f32.mrb[0].mxu0
          %v1064 = vadd.f32 0.0, %v1063
          %v1065 = vpop.f32.mrb[0].mxu0
          %1066 = vmatprep.mubr.f32.mxu0 0.0
          %1067 = vmatmul.mubr.f32.gmra.mrb[0].mxu0 %v941
          %v1068 = vpop.f32.mrb[0].mxu0
          %v1069 = vadd.f32 0.0, %v1068
          %v1070 = vpop.f32.mrb[0].mxu0
          %1071 = vmatprep.mubr.f32.mxu0 0.0
          %1072 = vmatmul.mubr.f32.gmra.mrb[0].mxu0 %v942
          %v1073 = vpop.f32.mrb[0].mxu0
          %v1074 = vadd.f32 0.0, %v1073
          %v1075 = vpop.f32.mrb[0].mxu0
          %1076 = vmatprep.mubr.f32.mxu0 0.0
          %1077 = vmatmul.mubr.f32.gmra.mrb[0].mxu0 %v943
          %v1078 = vpop.f32.mrb[0].mxu0
          %v1079 = vadd.f32 0.0, %v1078
          %v1080 = vpop.f32.mrb[0].mxu0
          %1081 = vmatprep.mubr.f32.mxu0 0.0
          %1082 = vmatmul.mubr.f32.gmra.mrb[0].mxu0 %v944
          %v1083 = vpop.f32.mrb[0].mxu0
          %v1084 = vadd.f32 0.0, %v1083
          %v1085 = vpop.f32.mrb[0].mxu0
          %1086 = vmatprep.mubr.f32.mxu0 0.0
          %1087 = vmatmul.mubr.f32.gmra.mrb[0].mxu0 %v945
          %v1088 = vpop.f32.mrb[0].mxu0
          %v1089 = vadd.f32 0.0, %v1088
          %v1090 = vpop.f32.mrb[0].mxu0
          %1091 = vmatprep.mubr.f32.mxu0 0.0
          %1092 = vmatmul.mubr.f32.gmra.mrb[0].mxu0 %v946
          %v1093 = vpop.f32.mrb[0].mxu0
          %v1094 = vadd.f32 0.0, %v1093
          %v1095 = vpop.f32.mrb[0].mxu0
          %1096 = vmatprep.mubr.f32.mxu0 0.0
          %1097 = vmatmul.mubr.f32.gmra.mrb[0].mxu0 %v947
          %v1098 = vpop.f32.mrb[0].mxu0
          %v1099 = vadd.f32 0.0, %v1098
          %v1100 = vpop.f32.mrb[0].mxu0
          %1101 = vmatprep.mubr.f32.mxu0 0.0
          %1102 = vmatmul.mubr.f32.gmra.mrb[0].mxu0 %v948
          %v1103 = vpop.f32.mrb[0].mxu0
          %v1104 = vadd.f32 0.0, %v1103
          %v1105 = vpop.f32.mrb[0].mxu0
          %1106 = vmatprep.mubr.f32.mxu0 0.0
          %1107 = vmatmul.mubr.f32.gmra.mrb[0].mxu0 %v949
          %v1108 = vpop.f32.mrb[0].mxu0
          %v1109 = vadd.f32 0.0, %v1108
          %v1110 = vpop.f32.mrb[0].mxu0
          %1111 = vdwg.mxu0
          %v1112 = vadd.f32 %v856, %v1034
          %v1113 = vadd.f32 %v861, %v1039
          %v1114 = vadd.f32 %v866, %v1044
          %v1115 = vadd.f32 %v871, %v1049
          %v1116 = vadd.f32 %v876, %v1054
          %v1117 = vadd.f32 %v881, %v1059
          %v1118 = vadd.f32 %v886, %v1064
          %v1119 = vadd.f32 %v891, %v1069
          %v1120 = vadd.f32 %v896, %v1074
          %v1121 = vadd.f32 %v901, %v1079
          %v1122 = vadd.f32 %v906, %v1084
          %v1123 = vadd.f32 %v911, %v1089
          %v1124 = vadd.f32 %v916, %v1094
          %v1125 = vadd.f32 %v921, %v1099
          %v1126 = vadd.f32 %v926, %v1104
          %v1127 = vadd.f32 %v931, %v1109
          %s1128 = sadd.s32 %s576, 1
          %s1129 = smul.u32 %s1128, 48
          %s1130 = scalar_lea.vmem [#allocation2], %s1129
          %v1131 = vld [vmem:[%s1130 + $0xf] sm:$0xff]
          %v1132 = vld [vmem:[%s1130 + $0x17] sm:$0xff]
          %v1133 = vld [vmem:[%s1130 + $0x3f] sm:$0xff]
          %v1134 = vld [vmem:[%s1130 + $0x47] sm:$0xff]
          %v1135 = vld [vmem:[%s1130 + $0x6f] sm:$0xff]
          %v1136 = vld [vmem:[%s1130 + $0x77] sm:$0xff]
          %v1137 = vld [vmem:[%s1130 + $0x9f] sm:$0xff]
          %v1138 = vld [vmem:[%s1130 + $0xa7] sm:$0xff]
          %v1139 = vld [vmem:[%s1130 + $0xcf] sm:$0xff]
          %v1140 = vld [vmem:[%s1130 + $0xd7] sm:$0xff]
          %v1141 = vld [vmem:[%s1130 + $0xff] sm:$0xff]
          %v1142 = vld [vmem:[%s1130 + $0x107] sm:$0xff]
          %v1143 = vld [vmem:[%s1130 + $0x12f] sm:$0xff]
          %v1144 = vld [vmem:[%s1130 + $0x137] sm:$0xff]
          %v1145 = vld [vmem:[%s1130 + $0x15f] sm:$0xff]
          %v1146 = vld [vmem:[%s1130 + $0x167] sm:$0xff]
          %s1147 = scalar_lea.vmem [#allocation7], 384
          %v1148 = vld [vmem:[%s1147] sm:$0xff]
          %v1149 = vld [vmem:[%s1147 + $0x8] sm:$0xff]
          %v1150 = vld [vmem:[%s1147 + $0x10] sm:$0xff]
          %v1151 = vld [vmem:[%s1147 + $0x18] sm:$0xff]
          %v1152 = vld [vmem:[%s1147 + $0x20] sm:$0xff]
          %v1153 = vld [vmem:[%s1147 + $0x28] sm:$0xff]
          %v1154 = vld [vmem:[%s1147 + $0x30] sm:$0xff]
          %v1155 = vld [vmem:[%s1147 + $0x38] sm:$0xff]
          %v1156 = vld [vmem:[%s1147 + $0x40] sm:$0xff]
          %v1157 = vld [vmem:[%s1147 + $0x48] sm:$0xff]
          %v1158 = vld [vmem:[%s1147 + $0x50] sm:$0xff]
          %v1159 = vld [vmem:[%s1147 + $0x58] sm:$0xff]
          %v1160 = vld [vmem:[%s1147 + $0x60] sm:$0xff]
          %v1161 = vld [vmem:[%s1147 + $0x68] sm:$0xff]
          %v1162 = vld [vmem:[%s1147 + $0x70] sm:$0xff]
          %v1163 = vld [vmem:[%s1147 + $0x78] sm:$0xff]
          %1164 = vmatprep.subr.mxu0 0.0
          %1165 = vmatpush1.msra.mxu0 %v1148
          %1166 = vmatprep.subr.mxu0 0.0
          %1167 = vmatpush1.msra.mxu0 %v1149
          %1168 = vmatprep.subr.mxu0 0.0
          %1169 = vmatpush1.msra.mxu0 %v1150
          %1170 = vmatprep.subr.mxu0 0.0
          %1171 = vmatpush1.msra.mxu0 %v1151
          %1172 = vmatprep.subr.mxu0 0.0
          %1173 = vmatpush1.msra.mxu0 %v1152
          %1174 = vmatprep.subr.mxu0 0.0
          %1175 = vmatpush1.msra.mxu0 %v1153
          %1176 = vmatprep.subr.mxu0 0.0
          %1177 = vmatpush1.msra.mxu0 %v1154
          %1178 = vmatprep.subr.mxu0 0.0
          %1179 = vmatpush1.msra.mxu0 %v1155
          %1180 = vmatprep.subr.mxu0 0.0
          %1181 = vmatpush1.msra.mxu0 %v1156
          %1182 = vmatprep.subr.mxu0 0.0
          %1183 = vmatpush1.msra.mxu0 %v1157
          %1184 = vmatprep.subr.mxu0 0.0
          %1185 = vmatpush1.msra.mxu0 %v1158
          %1186 = vmatprep.subr.mxu0 0.0
          %1187 = vmatpush1.msra.mxu0 %v1159
          %1188 = vmatprep.subr.mxu0 0.0
          %1189 = vmatpush1.msra.mxu0 %v1160
          %1190 = vmatprep.subr.mxu0 0.0
          %1191 = vmatpush1.msra.mxu0 %v1161
          %1192 = vmatprep.subr.mxu0 0.0
          %1193 = vmatpush1.msra.mxu0 %v1162
          %1194 = vmatprep.subr.mxu0 0.0
          %1195 = vmatpush1.msra.mxu0 %v1163
          %1196 = vmatprep.subr.mxu0 0.0
          %1197 = vmatpush1.msra.mxu0 0.0
          %1198 = vmatprep.subr.mxu0 0.0
          %1199 = vmatpush1.msra.mxu0 0.0
          %1200 = vmatprep.subr.mxu0 0.0
          %1201 = vmatpush1.msra.mxu0 0.0
          %1202 = vmatprep.subr.mxu0 0.0
          %1203 = vmatpush1.msra.mxu0 0.0
          %1204 = vmatprep.subr.mxu0 0.0
          %1205 = vmatpush1.msra.mxu0 0.0
          %1206 = vmatprep.subr.mxu0 0.0
          %1207 = vmatpush1.msra.mxu0 0.0
          %1208 = vmatprep.subr.mxu0 0.0
          %1209 = vmatpush1.msra.mxu0 0.0
          %1210 = vmatprep.subr.mxu0 0.0
          %1211 = vmatpush1.msra.mxu0 0.0
          %1212 = vmatprep.subr.mxu0 0.0
          %1213 = vmatpush1.msra.mxu0 0.0
          %1214 = vmatprep.subr.mxu0 0.0
          %1215 = vmatpush1.msra.mxu0 0.0
          %1216 = vmatprep.subr.mxu0 0.0
          %1217 = vmatpush1.msra.mxu0 0.0
          %1218 = vmatprep.subr.mxu0 0.0
          %1219 = vmatpush1.msra.mxu0 0.0
          %1220 = vmatprep.subr.mxu0 0.0
          %1221 = vmatpush1.msra.mxu0 0.0
          %1222 = vmatprep.subr.mxu0 0.0
          %1223 = vmatpush1.msra.mxu0 0.0
          %1224 = vmatprep.subr.mxu0 0.0
          %1225 = vmatpush1.msra.mxu0 0.0
          %1226 = vmatprep.subr.mxu0 0.0
          %1227 = vmatpush1.msra.mxu0 0.0
          %1228 = vmatprep.mubr.f32.mxu0 0.0
          %1229 = vmatmul.mubr.f32.gmra.mrb[0].mxu0 %v1131
          %v1230 = vpop.f32.mrb[0].mxu0
          %v1231 = vadd.f32 0.0, %v1230
          %v1232 = vpop.f32.mrb[0].mxu0
          %1233 = vmatprep.mubr.f32.mxu0 0.0
          %1234 = vmatmul.mubr.f32.gmra.mrb[0].mxu0 %v1132
          %v1235 = vpop.f32.mrb[0].mxu0
          %v1236 = vadd.f32 0.0, %v1235
          %v1237 = vpop.f32.mrb[0].mxu0
          %1238 = vmatprep.mubr.f32.mxu0 0.0
          %1239 = vmatmul.mubr.f32.gmra.mrb[0].mxu0 %v1133
          %v1240 = vpop.f32.mrb[0].mxu0
          %v1241 = vadd.f32 0.0, %v1240
          %v1242 = vpop.f32.mrb[0].mxu0
          %1243 = vmatprep.mubr.f32.mxu0 0.0
          %1244 = vmatmul.mubr.f32.gmra.mrb[0].mxu0 %v1134
          %v1245 = vpop.f32.mrb[0].mxu0
          %v1246 = vadd.f32 0.0, %v1245
          %v1247 = vpop.f32.mrb[0].mxu0
          %1248 = vmatprep.mubr.f32.mxu0 0.0
          %1249 = vmatmul.mubr.f32.gmra.mrb[0].mxu0 %v1135
          %v1250 = vpop.f32.mrb[0].mxu0
          %v1251 = vadd.f32 0.0, %v1250
          %v1252 = vpop.f32.mrb[0].mxu0
          %1253 = vmatprep.mubr.f32.mxu0 0.0
          %1254 = vmatmul.mubr.f32.gmra.mrb[0].mxu0 %v1136
          %v1255 = vpop.f32.mrb[0].mxu0
          %v1256 = vadd.f32 0.0, %v1255
          %v1257 = vpop.f32.mrb[0].mxu0
          %1258 = vmatprep.mubr.f32.mxu0 0.0
          %1259 = vmatmul.mubr.f32.gmra.mrb[0].mxu0 %v1137
          %v1260 = vpop.f32.mrb[0].mxu0
          %v1261 = vadd.f32 0.0, %v1260
          %v1262 = vpop.f32.mrb[0].mxu0
          %1263 = vmatprep.mubr.f32.mxu0 0.0
          %1264 = vmatmul.mubr.f32.gmra.mrb[0].mxu0 %v1138
          %v1265 = vpop.f32.mrb[0].mxu0
          %v1266 = vadd.f32 0.0, %v1265
          %v1267 = vpop.f32.mrb[0].mxu0
          %1268 = vmatprep.mubr.f32.mxu0 0.0
          %1269 = vmatmul.mubr.f32.gmra.mrb[0].mxu0 %v1139
          %v1270 = vpop.f32.mrb[0].mxu0
          %v1271 = vadd.f32 0.0, %v1270
          %v1272 = vpop.f32.mrb[0].mxu0
          %1273 = vmatprep.mubr.f32.mxu0 0.0
          %1274 = vmatmul.mubr.f32.gmra.mrb[0].mxu0 %v1140
          %v1275 = vpop.f32.mrb[0].mxu0
          %v1276 = vadd.f32 0.0, %v1275
          %v1277 = vpop.f32.mrb[0].mxu0
          %1278 = vmatprep.mubr.f32.mxu0 0.0
          %1279 = vmatmul.mubr.f32.gmra.mrb[0].mxu0 %v1141
          %v1280 = vpop.f32.mrb[0].mxu0
          %v1281 = vadd.f32 0.0, %v1280
          %v1282 = vpop.f32.mrb[0].mxu0
          %1283 = vmatprep.mubr.f32.mxu0 0.0
          %1284 = vmatmul.mubr.f32.gmra.mrb[0].mxu0 %v1142
          %v1285 = vpop.f32.mrb[0].mxu0
          %v1286 = vadd.f32 0.0, %v1285
          %v1287 = vpop.f32.mrb[0].mxu0
          %1288 = vmatprep.mubr.f32.mxu0 0.0
          %1289 = vmatmul.mubr.f32.gmra.mrb[0].mxu0 %v1143
          %v1290 = vpop.f32.mrb[0].mxu0
          %v1291 = vadd.f32 0.0, %v1290
          %v1292 = vpop.f32.mrb[0].mxu0
          %1293 = vmatprep.mubr.f32.mxu0 0.0
          %1294 = vmatmul.mubr.f32.gmra.mrb[0].mxu0 %v1144
          %v1295 = vpop.f32.mrb[0].mxu0
          %v1296 = vadd.f32 0.0, %v1295
          %v1297 = vpop.f32.mrb[0].mxu0
          %1298 = vmatprep.mubr.f32.mxu0 0.0
          %1299 = vmatmul.mubr.f32.gmra.mrb[0].mxu0 %v1145
          %v1300 = vpop.f32.mrb[0].mxu0
          %v1301 = vadd.f32 0.0, %v1300
          %v1302 = vpop.f32.mrb[0].mxu0
          %1303 = vmatprep.mubr.f32.mxu0 0.0
          %1304 = vmatmul.mubr.f32.gmra.mrb[0].mxu0 %v1146
          %v1305 = vpop.f32.mrb[0].mxu0
          %v1306 = vadd.f32 0.0, %v1305
          %v1307 = vpop.f32.mrb[0].mxu0
          %1308 = vdwg.mxu0
          %v1309 = vadd.f32 %v1112, %v1231
          %v1310 = vadd.f32 %v1113, %v1236
          %v1311 = vadd.f32 %v1114, %v1241
          %v1312 = vadd.f32 %v1115, %v1246
          %v1313 = vadd.f32 %v1116, %v1251
          %v1314 = vadd.f32 %v1117, %v1256
          %v1315 = vadd.f32 %v1118, %v1261
          %v1316 = vadd.f32 %v1119, %v1266
          %v1317 = vadd.f32 %v1120, %v1271
          %v1318 = vadd.f32 %v1121, %v1276
          %v1319 = vadd.f32 %v1122, %v1281
          %v1320 = vadd.f32 %v1123, %v1286
          %v1321 = vadd.f32 %v1124, %v1291
          %v1322 = vadd.f32 %v1125, %v1296
          %v1323 = vadd.f32 %v1126, %v1301
          %v1324 = vadd.f32 %v1127, %v1306
          %v1325 = vld [vmem:[%s1130 + $0x10] sm:$0xff]
          %v1326 = vld [vmem:[%s1130 + $0x18] sm:$0xff]
          %v1327 = vld [vmem:[%s1130 + $0x40] sm:$0xff]
          %v1328 = vld [vmem:[%s1130 + $0x48] sm:$0xff]
          %v1329 = vld [vmem:[%s1130 + $0x70] sm:$0xff]
          %v1330 = vld [vmem:[%s1130 + $0x78] sm:$0xff]
          %v1331 = vld [vmem:[%s1130 + $0xa0] sm:$0xff]
          %v1332 = vld [vmem:[%s1130 + $0xa8] sm:$0xff]
          %v1333 = vld [vmem:[%s1130 + $0xd0] sm:$0xff]
          %v1334 = vld [vmem:[%s1130 + $0xd8] sm:$0xff]
          %v1335 = vld [vmem:[%s1130 + $0x100] sm:$0xff]
          %v1336 = vld [vmem:[%s1130 + $0x108] sm:$0xff]
          %v1337 = vld [vmem:[%s1130 + $0x130] sm:$0xff]
          %v1338 = vld [vmem:[%s1130 + $0x138] sm:$0xff]
          %v1339 = vld [vmem:[%s1130 + $0x160] sm:$0xff]
          %v1340 = vld [vmem:[%s1130 + $0x168] sm:$0xff]
          %s1341 = scalar_lea.vmem [#allocation7], 512
          %v1342 = vld [vmem:[%s1341] sm:$0xff]
          %v1343 = vld [vmem:[%s1341 + $0x8] sm:$0xff]
          %v1344 = vld [vmem:[%s1341 + $0x10] sm:$0xff]
          %v1345 = vld [vmem:[%s1341 + $0x18] sm:$0xff]
          %v1346 = vld [vmem:[%s1341 + $0x20] sm:$0xff]
          %v1347 = vld [vmem:[%s1341 + $0x28] sm:$0xff]
          %v1348 = vld [vmem:[%s1341 + $0x30] sm:$0xff]
          %v1349 = vld [vmem:[%s1341 + $0x38] sm:$0xff]
          %v1350 = vld [vmem:[%s1341 + $0x40] sm:$0xff]
          %v1351 = vld [vmem:[%s1341 + $0x48] sm:$0xff]
          %v1352 = vld [vmem:[%s1341 + $0x50] sm:$0xff]
          %v1353 = vld [vmem:[%s1341 + $0x58] sm:$0xff]
          %v1354 = vld [vmem:[%s1341 + $0x60] sm:$0xff]
          %v1355 = vld [vmem:[%s1341 + $0x68] sm:$0xff]
          %v1356 = vld [vmem:[%s1341 + $0x70] sm:$0xff]
          %v1357 = vld [vmem:[%s1341 + $0x78] sm:$0xff]
          %1358 = vmatprep.subr.mxu0 0.0
          %1359 = vmatpush1.msra.mxu0 %v1342
          %1360 = vmatprep.subr.mxu0 0.0
          %1361 = vmatpush1.msra.mxu0 %v1343
          %1362 = vmatprep.subr.mxu0 0.0
          %1363 = vmatpush1.msra.mxu0 %v1344
          %1364 = vmatprep.subr.mxu0 0.0
          %1365 = vmatpush1.msra.mxu0 %v1345
          %1366 = vmatprep.subr.mxu0 0.0
          %1367 = vmatpush1.msra.mxu0 %v1346
          %1368 = vmatprep.subr.mxu0 0.0
          %1369 = vmatpush1.msra.mxu0 %v1347
          %1370 = vmatprep.subr.mxu0 0.0
          %1371 = vmatpush1.msra.mxu0 %v1348
          %1372 = vmatprep.subr.mxu0 0.0
          %1373 = vmatpush1.msra.mxu0 %v1349
          %1374 = vmatprep.subr.mxu0 0.0
          %1375 = vmatpush1.msra.mxu0 %v1350
          %1376 = vmatprep.subr.mxu0 0.0
          %1377 = vmatpush1.msra.mxu0 %v1351
          %1378 = vmatprep.subr.mxu0 0.0
          %1379 = vmatpush1.msra.mxu0 %v1352
          %1380 = vmatprep.subr.mxu0 0.0
          %1381 = vmatpush1.msra.mxu0 %v1353
          %1382 = vmatprep.subr.mxu0 0.0
          %1383 = vmatpush1.msra.mxu0 %v1354
          %1384 = vmatprep.subr.mxu0 0.0
          %1385 = vmatpush1.msra.mxu0 %v1355
          %1386 = vmatprep.subr.mxu0 0.0
          %1387 = vmatpush1.msra.mxu0 %v1356
          %1388 = vmatprep.subr.mxu0 0.0
          %1389 = vmatpush1.msra.mxu0 %v1357
          %1390 = vmatprep.subr.mxu0 0.0
          %1391 = vmatpush1.msra.mxu0 0.0
          %1392 = vmatprep.subr.mxu0 0.0
          %1393 = vmatpush1.msra.mxu0 0.0
          %1394 = vmatprep.subr.mxu0 0.0
          %1395 = vmatpush1.msra.mxu0 0.0
          %1396 = vmatprep.subr.mxu0 0.0
          %1397 = vmatpush1.msra.mxu0 0.0
          %1398 = vmatprep.subr.mxu0 0.0
          %1399 = vmatpush1.msra.mxu0 0.0
          %1400 = vmatprep.subr.mxu0 0.0
          %1401 = vmatpush1.msra.mxu0 0.0
          %1402 = vmatprep.subr.mxu0 0.0
          %1403 = vmatpush1.msra.mxu0 0.0
          %1404 = vmatprep.subr.mxu0 0.0
          %1405 = vmatpush1.msra.mxu0 0.0
          %1406 = vmatprep.subr.mxu0 0.0
          %1407 = vmatpush1.msra.mxu0 0.0
          %1408 = vmatprep.subr.mxu0 0.0
          %1409 = vmatpush1.msra.mxu0 0.0
          %1410 = vmatprep.subr.mxu0 0.0
          %1411 = vmatpush1.msra.mxu0 0.0
          %1412 = vmatprep.subr.mxu0 0.0
          %1413 = vmatpush1.msra.mxu0 0.0
          %1414 = vmatprep.subr.mxu0 0.0
          %1415 = vmatpush1.msra.mxu0 0.0
          %1416 = vmatprep.subr.mxu0 0.0
          %1417 = vmatpush1.msra.mxu0 0.0
          %1418 = vmatprep.subr.mxu0 0.0
          %1419 = vmatpush1.msra.mxu0 0.0
          %1420 = vmatprep.subr.mxu0 0.0
          %1421 = vmatpush1.msra.mxu0 0.0
          %1422 = vmatprep.mubr.f32.mxu0 0.0
          %1423 = vmatmul.mubr.f32.gmra.mrb[0].mxu0 %v1325
          %v1424 = vpop.f32.mrb[0].mxu0
          %v1425 = vadd.f32 0.0, %v1424
          %v1426 = vpop.f32.mrb[0].mxu0
          %1427 = vmatprep.mubr.f32.mxu0 0.0
          %1428 = vmatmul.mubr.f32.gmra.mrb[0].mxu0 %v1326
          %v1429 = vpop.f32.mrb[0].mxu0
          %v1430 = vadd.f32 0.0, %v1429
          %v1431 = vpop.f32.mrb[0].mxu0
          %1432 = vmatprep.mubr.f32.mxu0 0.0
          %1433 = vmatmul.mubr.f32.gmra.mrb[0].mxu0 %v1327
          %v1434 = vpop.f32.mrb[0].mxu0
          %v1435 = vadd.f32 0.0, %v1434
          %v1436 = vpop.f32.mrb[0].mxu0
          %1437 = vmatprep.mubr.f32.mxu0 0.0
          %1438 = vmatmul.mubr.f32.gmra.mrb[0].mxu0 %v1328
          %v1439 = vpop.f32.mrb[0].mxu0
          %v1440 = vadd.f32 0.0, %v1439
          %v1441 = vpop.f32.mrb[0].mxu0
          %1442 = vmatprep.mubr.f32.mxu0 0.0
          %1443 = vmatmul.mubr.f32.gmra.mrb[0].mxu0 %v1329
          %v1444 = vpop.f32.mrb[0].mxu0
          %v1445 = vadd.f32 0.0, %v1444
          %v1446 = vpop.f32.mrb[0].mxu0
          %1447 = vmatprep.mubr.f32.mxu0 0.0
          %1448 = vmatmul.mubr.f32.gmra.mrb[0].mxu0 %v1330
          %v1449 = vpop.f32.mrb[0].mxu0
          %v1450 = vadd.f32 0.0, %v1449
          %v1451 = vpop.f32.mrb[0].mxu0
          %1452 = vmatprep.mubr.f32.mxu0 0.0
          %1453 = vmatmul.mubr.f32.gmra.mrb[0].mxu0 %v1331
          %v1454 = vpop.f32.mrb[0].mxu0
          %v1455 = vadd.f32 0.0, %v1454
          %v1456 = vpop.f32.mrb[0].mxu0
          %1457 = vmatprep.mubr.f32.mxu0 0.0
          %1458 = vmatmul.mubr.f32.gmra.mrb[0].mxu0 %v1332
          %v1459 = vpop.f32.mrb[0].mxu0
          %v1460 = vadd.f32 0.0, %v1459
          %v1461 = vpop.f32.mrb[0].mxu0
          %1462 = vmatprep.mubr.f32.mxu0 0.0
          %1463 = vmatmul.mubr.f32.gmra.mrb[0].mxu0 %v1333
          %v1464 = vpop.f32.mrb[0].mxu0
          %v1465 = vadd.f32 0.0, %v1464
          %v1466 = vpop.f32.mrb[0].mxu0
          %1467 = vmatprep.mubr.f32.mxu0 0.0
          %1468 = vmatmul.mubr.f32.gmra.mrb[0].mxu0 %v1334
          %v1469 = vpop.f32.mrb[0].mxu0
          %v1470 = vadd.f32 0.0, %v1469
          %v1471 = vpop.f32.mrb[0].mxu0
          %1472 = vmatprep.mubr.f32.mxu0 0.0
          %1473 = vmatmul.mubr.f32.gmra.mrb[0].mxu0 %v1335
          %v1474 = vpop.f32.mrb[0].mxu0
          %v1475 = vadd.f32 0.0, %v1474
          %v1476 = vpop.f32.mrb[0].mxu0
          %1477 = vmatprep.mubr.f32.mxu0 0.0
          %1478 = vmatmul.mubr.f32.gmra.mrb[0].mxu0 %v1336
          %v1479 = vpop.f32.mrb[0].mxu0
          %v1480 = vadd.f32 0.0, %v1479
          %v1481 = vpop.f32.mrb[0].mxu0
          %1482 = vmatprep.mubr.f32.mxu0 0.0
          %1483 = vmatmul.mubr.f32.gmra.mrb[0].mxu0 %v1337
          %v1484 = vpop.f32.mrb[0].mxu0
          %v1485 = vadd.f32 0.0, %v1484
          %v1486 = vpop.f32.mrb[0].mxu0
          %1487 = vmatprep.mubr.f32.mxu0 0.0
          %1488 = vmatmul.mubr.f32.gmra.mrb[0].mxu0 %v1338
          %v1489 = vpop.f32.mrb[0].mxu0
          %v1490 = vadd.f32 0.0, %v1489
          %v1491 = vpop.f32.mrb[0].mxu0
          %1492 = vmatprep.mubr.f32.mxu0 0.0
          %1493 = vmatmul.mubr.f32.gmra.mrb[0].mxu0 %v1339
          %v1494 = vpop.f32.mrb[0].mxu0
          %v1495 = vadd.f32 0.0, %v1494
          %v1496 = vpop.f32.mrb[0].mxu0
          %1497 = vmatprep.mubr.f32.mxu0 0.0
          %1498 = vmatmul.mubr.f32.gmra.mrb[0].mxu0 %v1340
          %v1499 = vpop.f32.mrb[0].mxu0
          %v1500 = vadd.f32 0.0, %v1499
          %v1501 = vpop.f32.mrb[0].mxu0
          %1502 = vdwg.mxu0
          %v1503 = vadd.f32 %v1309, %v1425
          %v1504 = vadd.f32 %v1310, %v1430
          %v1505 = vadd.f32 %v1311, %v1435
          %v1506 = vadd.f32 %v1312, %v1440
          %v1507 = vadd.f32 %v1313, %v1445
          %v1508 = vadd.f32 %v1314, %v1450
          %v1509 = vadd.f32 %v1315, %v1455
          %v1510 = vadd.f32 %v1316, %v1460
          %v1511 = vadd.f32 %v1317, %v1465
          %v1512 = vadd.f32 %v1318, %v1470
          %v1513 = vadd.f32 %v1319, %v1475
          %v1514 = vadd.f32 %v1320, %v1480
          %v1515 = vadd.f32 %v1321, %v1485
          %v1516 = vadd.f32 %v1322, %v1490
          %v1517 = vadd.f32 %v1323, %v1495
          %v1518 = vadd.f32 %v1324, %v1500
          %v1519 = vld [vmem:[%s1130 + $0x11] sm:$0xff]
          %v1520 = vld [vmem:[%s1130 + $0x19] sm:$0xff]
          %v1521 = vld [vmem:[%s1130 + $0x41] sm:$0xff]
          %v1522 = vld [vmem:[%s1130 + $0x49] sm:$0xff]
          %v1523 = vld [vmem:[%s1130 + $0x71] sm:$0xff]
          %v1524 = vld [vmem:[%s1130 + $0x79] sm:$0xff]
          %v1525 = vld [vmem:[%s1130 + $0xa1] sm:$0xff]
          %v1526 = vld [vmem:[%s1130 + $0xa9] sm:$0xff]
          %v1527 = vld [vmem:[%s1130 + $0xd1] sm:$0xff]
          %v1528 = vld [vmem:[%s1130 + $0xd9] sm:$0xff]
          %v1529 = vld [vmem:[%s1130 + $0x101] sm:$0xff]
          %v1530 = vld [vmem:[%s1130 + $0x109] sm:$0xff]
          %v1531 = vld [vmem:[%s1130 + $0x131] sm:$0xff]
          %v1532 = vld [vmem:[%s1130 + $0x139] sm:$0xff]
          %v1533 = vld [vmem:[%s1130 + $0x161] sm:$0xff]
          %v1534 = vld [vmem:[%s1130 + $0x169] sm:$0xff]
          %s1535 = scalar_lea.vmem [#allocation7], 640
          %v1536 = vld [vmem:[%s1535] sm:$0xff]
          %v1537 = vld [vmem:[%s1535 + $0x8] sm:$0xff]
          %v1538 = vld [vmem:[%s1535 + $0x10] sm:$0xff]
          %v1539 = vld [vmem:[%s1535 + $0x18] sm:$0xff]
          %v1540 = vld [vmem:[%s1535 + $0x20] sm:$0xff]
          %v1541 = vld [vmem:[%s1535 + $0x28] sm:$0xff]
          %v1542 = vld [vmem:[%s1535 + $0x30] sm:$0xff]
          %v1543 = vld [vmem:[%s1535 + $0x38] sm:$0xff]
          %v1544 = vld [vmem:[%s1535 + $0x40] sm:$0xff]
          %v1545 = vld [vmem:[%s1535 + $0x48] sm:$0xff]
          %v1546 = vld [vmem:[%s1535 + $0x50] sm:$0xff]
          %v1547 = vld [vmem:[%s1535 + $0x58] sm:$0xff]
          %v1548 = vld [vmem:[%s1535 + $0x60] sm:$0xff]
          %v1549 = vld [vmem:[%s1535 + $0x68] sm:$0xff]
          %v1550 = vld [vmem:[%s1535 + $0x70] sm:$0xff]
          %v1551 = vld [vmem:[%s1535 + $0x78] sm:$0xff]
          %1552 = vmatprep.subr.mxu0 0.0
          %1553 = vmatpush1.msra.mxu0 %v1536
          %1554 = vmatprep.subr.mxu0 0.0
          %1555 = vmatpush1.msra.mxu0 %v1537
          %1556 = vmatprep.subr.mxu0 0.0
          %1557 = vmatpush1.msra.mxu0 %v1538
          %1558 = vmatprep.subr.mxu0 0.0
          %1559 = vmatpush1.msra.mxu0 %v1539
          %1560 = vmatprep.subr.mxu0 0.0
          %1561 = vmatpush1.msra.mxu0 %v1540
          %1562 = vmatprep.subr.mxu0 0.0
          %1563 = vmatpush1.msra.mxu0 %v1541
          %1564 = vmatprep.subr.mxu0 0.0
          %1565 = vmatpush1.msra.mxu0 %v1542
          %1566 = vmatprep.subr.mxu0 0.0
          %1567 = vmatpush1.msra.mxu0 %v1543
          %1568 = vmatprep.subr.mxu0 0.0
          %1569 = vmatpush1.msra.mxu0 %v1544
          %1570 = vmatprep.subr.mxu0 0.0
          %1571 = vmatpush1.msra.mxu0 %v1545
          %1572 = vmatprep.subr.mxu0 0.0
          %1573 = vmatpush1.msra.mxu0 %v1546
          %1574 = vmatprep.subr.mxu0 0.0
          %1575 = vmatpush1.msra.mxu0 %v1547
          %1576 = vmatprep.subr.mxu0 0.0
          %1577 = vmatpush1.msra.mxu0 %v1548
          %1578 = vmatprep.subr.mxu0 0.0
          %1579 = vmatpush1.msra.mxu0 %v1549
          %1580 = vmatprep.subr.mxu0 0.0
          %1581 = vmatpush1.msra.mxu0 %v1550
          %1582 = vmatprep.subr.mxu0 0.0
          %1583 = vmatpush1.msra.mxu0 %v1551
          %1584 = vmatprep.subr.mxu0 0.0
          %1585 = vmatpush1.msra.mxu0 0.0
          %1586 = vmatprep.subr.mxu0 0.0
          %1587 = vmatpush1.msra.mxu0 0.0
          %1588 = vmatprep.subr.mxu0 0.0
          %1589 = vmatpush1.msra.mxu0 0.0
          %1590 = vmatprep.subr.mxu0 0.0
          %1591 = vmatpush1.msra.mxu0 0.0
          %1592 = vmatprep.subr.mxu0 0.0
          %1593 = vmatpush1.msra.mxu0 0.0
          %1594 = vmatprep.subr.mxu0 0.0
          %1595 = vmatpush1.msra.mxu0 0.0
          %1596 = vmatprep.subr.mxu0 0.0
          %1597 = vmatpush1.msra.mxu0 0.0
          %1598 = vmatprep.subr.mxu0 0.0
          %1599 = vmatpush1.msra.mxu0 0.0
          %1600 = vmatprep.subr.mxu0 0.0
          %1601 = vmatpush1.msra.mxu0 0.0
          %1602 = vmatprep.subr.mxu0 0.0
          %1603 = vmatpush1.msra.mxu0 0.0
          %1604 = vmatprep.subr.mxu0 0.0
          %1605 = vmatpush1.msra.mxu0 0.0
          %1606 = vmatprep.subr.mxu0 0.0
          %1607 = vmatpush1.msra.mxu0 0.0
          %1608 = vmatprep.subr.mxu0 0.0
          %1609 = vmatpush1.msra.mxu0 0.0
          %1610 = vmatprep.subr.mxu0 0.0
          %1611 = vmatpush1.msra.mxu0 0.0
          %1612 = vmatprep.subr.mxu0 0.0
          %1613 = vmatpush1.msra.mxu0 0.0
          %1614 = vmatprep.subr.mxu0 0.0
          %1615 = vmatpush1.msra.mxu0 0.0
          %1616 = vmatprep.mubr.f32.mxu0 0.0
          %1617 = vmatmul.mubr.f32.gmra.mrb[0].mxu0 %v1519
          %v1618 = vpop.f32.mrb[0].mxu0
          %v1619 = vadd.f32 0.0, %v1618
          %v1620 = vpop.f32.mrb[0].mxu0
          %1621 = vmatprep.mubr.f32.mxu0 0.0
          %1622 = vmatmul.mubr.f32.gmra.mrb[0].mxu0 %v1520
          %v1623 = vpop.f32.mrb[0].mxu0
          %v1624 = vadd.f32 0.0, %v1623
          %v1625 = vpop.f32.mrb[0].mxu0
          %1626 = vmatprep.mubr.f32.mxu0 0.0
          %1627 = vmatmul.mubr.f32.gmra.mrb[0].mxu0 %v1521
          %v1628 = vpop.f32.mrb[0].mxu0
          %v1629 = vadd.f32 0.0, %v1628
          %v1630 = vpop.f32.mrb[0].mxu0
          %1631 = vmatprep.mubr.f32.mxu0 0.0
          %1632 = vmatmul.mubr.f32.gmra.mrb[0].mxu0 %v1522
          %v1633 = vpop.f32.mrb[0].mxu0
          %v1634 = vadd.f32 0.0, %v1633
          %v1635 = vpop.f32.mrb[0].mxu0
          %1636 = vmatprep.mubr.f32.mxu0 0.0
          %1637 = vmatmul.mubr.f32.gmra.mrb[0].mxu0 %v1523
          %v1638 = vpop.f32.mrb[0].mxu0
          %v1639 = vadd.f32 0.0, %v1638
          %v1640 = vpop.f32.mrb[0].mxu0
          %1641 = vmatprep.mubr.f32.mxu0 0.0
          %1642 = vmatmul.mubr.f32.gmra.mrb[0].mxu0 %v1524
          %v1643 = vpop.f32.mrb[0].mxu0
          %v1644 = vadd.f32 0.0, %v1643
          %v1645 = vpop.f32.mrb[0].mxu0
          %1646 = vmatprep.mubr.f32.mxu0 0.0
          %1647 = vmatmul.mubr.f32.gmra.mrb[0].mxu0 %v1525
          %v1648 = vpop.f32.mrb[0].mxu0
          %v1649 = vadd.f32 0.0, %v1648
          %v1650 = vpop.f32.mrb[0].mxu0
          %1651 = vmatprep.mubr.f32.mxu0 0.0
          %1652 = vmatmul.mubr.f32.gmra.mrb[0].mxu0 %v1526
          %v1653 = vpop.f32.mrb[0].mxu0
          %v1654 = vadd.f32 0.0, %v1653
          %v1655 = vpop.f32.mrb[0].mxu0
          %1656 = vmatprep.mubr.f32.mxu0 0.0
          %1657 = vmatmul.mubr.f32.gmra.mrb[0].mxu0 %v1527
          %v1658 = vpop.f32.mrb[0].mxu0
          %v1659 = vadd.f32 0.0, %v1658
          %v1660 = vpop.f32.mrb[0].mxu0
          %1661 = vmatprep.mubr.f32.mxu0 0.0
          %1662 = vmatmul.mubr.f32.gmra.mrb[0].mxu0 %v1528
          %v1663 = vpop.f32.mrb[0].mxu0
          %v1664 = vadd.f32 0.0, %v1663
          %v1665 = vpop.f32.mrb[0].mxu0
          %1666 = vmatprep.mubr.f32.mxu0 0.0
          %1667 = vmatmul.mubr.f32.gmra.mrb[0].mxu0 %v1529
          %v1668 = vpop.f32.mrb[0].mxu0
          %v1669 = vadd.f32 0.0, %v1668
          %v1670 = vpop.f32.mrb[0].mxu0
          %1671 = vmatprep.mubr.f32.mxu0 0.0
          %1672 = vmatmul.mubr.f32.gmra.mrb[0].mxu0 %v1530
          %v1673 = vpop.f32.mrb[0].mxu0
          %v1674 = vadd.f32 0.0, %v1673
          %v1675 = vpop.f32.mrb[0].mxu0
          %1676 = vmatprep.mubr.f32.mxu0 0.0
          %1677 = vmatmul.mubr.f32.gmra.mrb[0].mxu0 %v1531
          %v1678 = vpop.f32.mrb[0].mxu0
          %v1679 = vadd.f32 0.0, %v1678
          %v1680 = vpop.f32.mrb[0].mxu0
          %1681 = vmatprep.mubr.f32.mxu0 0.0
          %1682 = vmatmul.mubr.f32.gmra.mrb[0].mxu0 %v1532
          %v1683 = vpop.f32.mrb[0].mxu0
          %v1684 = vadd.f32 0.0, %v1683
          %v1685 = vpop.f32.mrb[0].mxu0
          %1686 = vmatprep.mubr.f32.mxu0 0.0
          %1687 = vmatmul.mubr.f32.gmra.mrb[0].mxu0 %v1533
          %v1688 = vpop.f32.mrb[0].mxu0
          %v1689 = vadd.f32 0.0, %v1688
          %v1690 = vpop.f32.mrb[0].mxu0
          %1691 = vmatprep.mubr.f32.mxu0 0.0
          %1692 = vmatmul.mubr.f32.gmra.mrb[0].mxu0 %v1534
          %v1693 = vpop.f32.mrb[0].mxu0
          %v1694 = vadd.f32 0.0, %v1693
          %v1695 = vpop.f32.mrb[0].mxu0
          %1696 = vdwg.mxu0
          %v1697 = vadd.f32 %v1503, %v1619
          %v1698 = vadd.f32 %v1504, %v1624
          %v1699 = vadd.f32 %v1505, %v1629
          %v1700 = vadd.f32 %v1506, %v1634
          %v1701 = vadd.f32 %v1507, %v1639
          %v1702 = vadd.f32 %v1508, %v1644
          %v1703 = vadd.f32 %v1509, %v1649
          %v1704 = vadd.f32 %v1510, %v1654
          %v1705 = vadd.f32 %v1511, %v1659
          %v1706 = vadd.f32 %v1512, %v1664
          %v1707 = vadd.f32 %v1513, %v1669
          %v1708 = vadd.f32 %v1514, %v1674
          %v1709 = vadd.f32 %v1515, %v1679
          %v1710 = vadd.f32 %v1516, %v1684
          %v1711 = vadd.f32 %v1517, %v1689
          %v1712 = vadd.f32 %v1518, %v1694
          %s1713 = sadd.s32 %s576, 2
          %s1714 = smul.u32 %s1713, 48
          %s1715 = scalar_lea.vmem [#allocation2], %s1714
          %v1716 = vld [vmem:[%s1715 + $0xf] sm:$0xff]
          %v1717 = vld [vmem:[%s1715 + $0x17] sm:$0xff]
          %v1718 = vld [vmem:[%s1715 + $0x3f] sm:$0xff]
          %v1719 = vld [vmem:[%s1715 + $0x47] sm:$0xff]
          %v1720 = vld [vmem:[%s1715 + $0x6f] sm:$0xff]
          %v1721 = vld [vmem:[%s1715 + $0x77] sm:$0xff]
          %v1722 = vld [vmem:[%s1715 + $0x9f] sm:$0xff]
          %v1723 = vld [vmem:[%s1715 + $0xa7] sm:$0xff]
          %v1724 = vld [vmem:[%s1715 + $0xcf] sm:$0xff]
          %v1725 = vld [vmem:[%s1715 + $0xd7] sm:$0xff]
          %v1726 = vld [vmem:[%s1715 + $0xff] sm:$0xff]
          %v1727 = vld [vmem:[%s1715 + $0x107] sm:$0xff]
          %v1728 = vld [vmem:[%s1715 + $0x12f] sm:$0xff]
          %v1729 = vld [vmem:[%s1715 + $0x137] sm:$0xff]
          %v1730 = vld [vmem:[%s1715 + $0x15f] sm:$0xff]
          %v1731 = vld [vmem:[%s1715 + $0x167] sm:$0xff]
          %s1732 = scalar_lea.vmem [#allocation7], 768
          %v1733 = vld [vmem:[%s1732] sm:$0xff]
          %v1734 = vld [vmem:[%s1732 + $0x8] sm:$0xff]
          %v1735 = vld [vmem:[%s1732 + $0x10] sm:$0xff]
          %v1736 = vld [vmem:[%s1732 + $0x18] sm:$0xff]
          %v1737 = vld [vmem:[%s1732 + $0x20] sm:$0xff]
          %v1738 = vld [vmem:[%s1732 + $0x28] sm:$0xff]
          %v1739 = vld [vmem:[%s1732 + $0x30] sm:$0xff]
          %v1740 = vld [vmem:[%s1732 + $0x38] sm:$0xff]
          %v1741 = vld [vmem:[%s1732 + $0x40] sm:$0xff]
          %v1742 = vld [vmem:[%s1732 + $0x48] sm:$0xff]
          %v1743 = vld [vmem:[%s1732 + $0x50] sm:$0xff]
          %v1744 = vld [vmem:[%s1732 + $0x58] sm:$0xff]
          %v1745 = vld [vmem:[%s1732 + $0x60] sm:$0xff]
          %v1746 = vld [vmem:[%s1732 + $0x68] sm:$0xff]
          %v1747 = vld [vmem:[%s1732 + $0x70] sm:$0xff]
          %v1748 = vld [vmem:[%s1732 + $0x78] sm:$0xff]
          %1749 = vmatprep.subr.mxu0 0.0
          %1750 = vmatpush1.msra.mxu0 %v1733
          %1751 = vmatprep.subr.mxu0 0.0
          %1752 = vmatpush1.msra.mxu0 %v1734
          %1753 = vmatprep.subr.mxu0 0.0
          %1754 = vmatpush1.msra.mxu0 %v1735
          %1755 = vmatprep.subr.mxu0 0.0
          %1756 = vmatpush1.msra.mxu0 %v1736
          %1757 = vmatprep.subr.mxu0 0.0
          %1758 = vmatpush1.msra.mxu0 %v1737
          %1759 = vmatprep.subr.mxu0 0.0
          %1760 = vmatpush1.msra.mxu0 %v1738
          %1761 = vmatprep.subr.mxu0 0.0
          %1762 = vmatpush1.msra.mxu0 %v1739
          %1763 = vmatprep.subr.mxu0 0.0
          %1764 = vmatpush1.msra.mxu0 %v1740
          %1765 = vmatprep.subr.mxu0 0.0
          %1766 = vmatpush1.msra.mxu0 %v1741
          %1767 = vmatprep.subr.mxu0 0.0
          %1768 = vmatpush1.msra.mxu0 %v1742
          %1769 = vmatprep.subr.mxu0 0.0
          %1770 = vmatpush1.msra.mxu0 %v1743
          %1771 = vmatprep.subr.mxu0 0.0
          %1772 = vmatpush1.msra.mxu0 %v1744
          %1773 = vmatprep.subr.mxu0 0.0
          %1774 = vmatpush1.msra.mxu0 %v1745
          %1775 = vmatprep.subr.mxu0 0.0
          %1776 = vmatpush1.msra.mxu0 %v1746
          %1777 = vmatprep.subr.mxu0 0.0
          %1778 = vmatpush1.msra.mxu0 %v1747
          %1779 = vmatprep.subr.mxu0 0.0
          %1780 = vmatpush1.msra.mxu0 %v1748
          %1781 = vmatprep.subr.mxu0 0.0
          %1782 = vmatpush1.msra.mxu0 0.0
          %1783 = vmatprep.subr.mxu0 0.0
          %1784 = vmatpush1.msra.mxu0 0.0
          %1785 = vmatprep.subr.mxu0 0.0
          %1786 = vmatpush1.msra.mxu0 0.0
          %1787 = vmatprep.subr.mxu0 0.0
          %1788 = vmatpush1.msra.mxu0 0.0
          %1789 = vmatprep.subr.mxu0 0.0
          %1790 = vmatpush1.msra.mxu0 0.0
          %1791 = vmatprep.subr.mxu0 0.0
          %1792 = vmatpush1.msra.mxu0 0.0
          %1793 = vmatprep.subr.mxu0 0.0
          %1794 = vmatpush1.msra.mxu0 0.0
          %1795 = vmatprep.subr.mxu0 0.0
          %1796 = vmatpush1.msra.mxu0 0.0
          %1797 = vmatprep.subr.mxu0 0.0
          %1798 = vmatpush1.msra.mxu0 0.0
          %1799 = vmatprep.subr.mxu0 0.0
          %1800 = vmatpush1.msra.mxu0 0.0
          %1801 = vmatprep.subr.mxu0 0.0
          %1802 = vmatpush1.msra.mxu0 0.0
          %1803 = vmatprep.subr.mxu0 0.0
          %1804 = vmatpush1.msra.mxu0 0.0
          %1805 = vmatprep.subr.mxu0 0.0
          %1806 = vmatpush1.msra.mxu0 0.0
          %1807 = vmatprep.subr.mxu0 0.0
          %1808 = vmatpush1.msra.mxu0 0.0
          %1809 = vmatprep.subr.mxu0 0.0
          %1810 = vmatpush1.msra.mxu0 0.0
          %1811 = vmatprep.subr.mxu0 0.0
          %1812 = vmatpush1.msra.mxu0 0.0
          %1813 = vmatprep.mubr.f32.mxu0 0.0
          %1814 = vmatmul.mubr.f32.gmra.mrb[0].mxu0 %v1716
          %v1815 = vpop.f32.mrb[0].mxu0
          %v1816 = vadd.f32 0.0, %v1815
          %v1817 = vpop.f32.mrb[0].mxu0
          %1818 = vmatprep.mubr.f32.mxu0 0.0
          %1819 = vmatmul.mubr.f32.gmra.mrb[0].mxu0 %v1717
          %v1820 = vpop.f32.mrb[0].mxu0
          %v1821 = vadd.f32 0.0, %v1820
          %v1822 = vpop.f32.mrb[0].mxu0
          %1823 = vmatprep.mubr.f32.mxu0 0.0
          %1824 = vmatmul.mubr.f32.gmra.mrb[0].mxu0 %v1718
          %v1825 = vpop.f32.mrb[0].mxu0
          %v1826 = vadd.f32 0.0, %v1825
          %v1827 = vpop.f32.mrb[0].mxu0
          %1828 = vmatprep.mubr.f32.mxu0 0.0
          %1829 = vmatmul.mubr.f32.gmra.mrb[0].mxu0 %v1719
          %v1830 = vpop.f32.mrb[0].mxu0
          %v1831 = vadd.f32 0.0, %v1830
          %v1832 = vpop.f32.mrb[0].mxu0
          %1833 = vmatprep.mubr.f32.mxu0 0.0
          %1834 = vmatmul.mubr.f32.gmra.mrb[0].mxu0 %v1720
          %v1835 = vpop.f32.mrb[0].mxu0
          %v1836 = vadd.f32 0.0, %v1835
          %v1837 = vpop.f32.mrb[0].mxu0
          %1838 = vmatprep.mubr.f32.mxu0 0.0
          %1839 = vmatmul.mubr.f32.gmra.mrb[0].mxu0 %v1721
          %v1840 = vpop.f32.mrb[0].mxu0
          %v1841 = vadd.f32 0.0, %v1840
          %v1842 = vpop.f32.mrb[0].mxu0
          %1843 = vmatprep.mubr.f32.mxu0 0.0
          %1844 = vmatmul.mubr.f32.gmra.mrb[0].mxu0 %v1722
          %v1845 = vpop.f32.mrb[0].mxu0
          %v1846 = vadd.f32 0.0, %v1845
          %v1847 = vpop.f32.mrb[0].mxu0
          %1848 = vmatprep.mubr.f32.mxu0 0.0
          %1849 = vmatmul.mubr.f32.gmra.mrb[0].mxu0 %v1723
          %v1850 = vpop.f32.mrb[0].mxu0
          %v1851 = vadd.f32 0.0, %v1850
          %v1852 = vpop.f32.mrb[0].mxu0
          %1853 = vmatprep.mubr.f32.mxu0 0.0
          %1854 = vmatmul.mubr.f32.gmra.mrb[0].mxu0 %v1724
          %v1855 = vpop.f32.mrb[0].mxu0
          %v1856 = vadd.f32 0.0, %v1855
          %v1857 = vpop.f32.mrb[0].mxu0
          %1858 = vmatprep.mubr.f32.mxu0 0.0
          %1859 = vmatmul.mubr.f32.gmra.mrb[0].mxu0 %v1725
          %v1860 = vpop.f32.mrb[0].mxu0
          %v1861 = vadd.f32 0.0, %v1860
          %v1862 = vpop.f32.mrb[0].mxu0
          %1863 = vmatprep.mubr.f32.mxu0 0.0
          %1864 = vmatmul.mubr.f32.gmra.mrb[0].mxu0 %v1726
          %v1865 = vpop.f32.mrb[0].mxu0
          %v1866 = vadd.f32 0.0, %v1865
          %v1867 = vpop.f32.mrb[0].mxu0
          %1868 = vmatprep.mubr.f32.mxu0 0.0
          %1869 = vmatmul.mubr.f32.gmra.mrb[0].mxu0 %v1727
          %v1870 = vpop.f32.mrb[0].mxu0
          %v1871 = vadd.f32 0.0, %v1870
          %v1872 = vpop.f32.mrb[0].mxu0
          %1873 = vmatprep.mubr.f32.mxu0 0.0
          %1874 = vmatmul.mubr.f32.gmra.mrb[0].mxu0 %v1728
          %v1875 = vpop.f32.mrb[0].mxu0
          %v1876 = vadd.f32 0.0, %v1875
          %v1877 = vpop.f32.mrb[0].mxu0
          %1878 = vmatprep.mubr.f32.mxu0 0.0
          %1879 = vmatmul.mubr.f32.gmra.mrb[0].mxu0 %v1729
          %v1880 = vpop.f32.mrb[0].mxu0
          %v1881 = vadd.f32 0.0, %v1880
          %v1882 = vpop.f32.mrb[0].mxu0
          %1883 = vmatprep.mubr.f32.mxu0 0.0
          %1884 = vmatmul.mubr.f32.gmra.mrb[0].mxu0 %v1730
          %v1885 = vpop.f32.mrb[0].mxu0
          %v1886 = vadd.f32 0.0, %v1885
          %v1887 = vpop.f32.mrb[0].mxu0
          %1888 = vmatprep.mubr.f32.mxu0 0.0
          %1889 = vmatmul.mubr.f32.gmra.mrb[0].mxu0 %v1731
          %v1890 = vpop.f32.mrb[0].mxu0
          %v1891 = vadd.f32 0.0, %v1890
          %v1892 = vpop.f32.mrb[0].mxu0
          %1893 = vdwg.mxu0
          %v1894 = vadd.f32 %v1697, %v1816
          %v1895 = vadd.f32 %v1698, %v1821
          %v1896 = vadd.f32 %v1699, %v1826
          %v1897 = vadd.f32 %v1700, %v1831
          %v1898 = vadd.f32 %v1701, %v1836
          %v1899 = vadd.f32 %v1702, %v1841
          %v1900 = vadd.f32 %v1703, %v1846
          %v1901 = vadd.f32 %v1704, %v1851
          %v1902 = vadd.f32 %v1705, %v1856
          %v1903 = vadd.f32 %v1706, %v1861
          %v1904 = vadd.f32 %v1707, %v1866
          %v1905 = vadd.f32 %v1708, %v1871
          %v1906 = vadd.f32 %v1709, %v1876
          %v1907 = vadd.f32 %v1710, %v1881
          %v1908 = vadd.f32 %v1711, %v1886
          %v1909 = vadd.f32 %v1712, %v1891
          %v1910 = vld [vmem:[%s1715 + $0x10] sm:$0xff]
          %v1911 = vld [vmem:[%s1715 + $0x18] sm:$0xff]
          %v1912 = vld [vmem:[%s1715 + $0x40] sm:$0xff]
          %v1913 = vld [vmem:[%s1715 + $0x48] sm:$0xff]
          %v1914 = vld [vmem:[%s1715 + $0x70] sm:$0xff]
          %v1915 = vld [vmem:[%s1715 + $0x78] sm:$0xff]
          %v1916 = vld [vmem:[%s1715 + $0xa0] sm:$0xff]
          %v1917 = vld [vmem:[%s1715 + $0xa8] sm:$0xff]
          %v1918 = vld [vmem:[%s1715 + $0xd0] sm:$0xff]
          %v1919 = vld [vmem:[%s1715 + $0xd8] sm:$0xff]
          %v1920 = vld [vmem:[%s1715 + $0x100] sm:$0xff]
          %v1921 = vld [vmem:[%s1715 + $0x108] sm:$0xff]
          %v1922 = vld [vmem:[%s1715 + $0x130] sm:$0xff]
          %v1923 = vld [vmem:[%s1715 + $0x138] sm:$0xff]
          %v1924 = vld [vmem:[%s1715 + $0x160] sm:$0xff]
          %v1925 = vld [vmem:[%s1715 + $0x168] sm:$0xff]
          %s1926 = scalar_lea.vmem [#allocation7], 896
          %v1927 = vld [vmem:[%s1926] sm:$0xff]
          %v1928 = vld [vmem:[%s1926 + $0x8] sm:$0xff]
          %v1929 = vld [vmem:[%s1926 + $0x10] sm:$0xff]
          %v1930 = vld [vmem:[%s1926 + $0x18] sm:$0xff]
          %v1931 = vld [vmem:[%s1926 + $0x20] sm:$0xff]
          %v1932 = vld [vmem:[%s1926 + $0x28] sm:$0xff]
          %v1933 = vld [vmem:[%s1926 + $0x30] sm:$0xff]
          %v1934 = vld [vmem:[%s1926 + $0x38] sm:$0xff]
          %v1935 = vld [vmem:[%s1926 + $0x40] sm:$0xff]
          %v1936 = vld [vmem:[%s1926 + $0x48] sm:$0xff]
          %v1937 = vld [vmem:[%s1926 + $0x50] sm:$0xff]
          %v1938 = vld [vmem:[%s1926 + $0x58] sm:$0xff]
          %v1939 = vld [vmem:[%s1926 + $0x60] sm:$0xff]
          %v1940 = vld [vmem:[%s1926 + $0x68] sm:$0xff]
          %v1941 = vld [vmem:[%s1926 + $0x70] sm:$0xff]
          %v1942 = vld [vmem:[%s1926 + $0x78] sm:$0xff]
          %1943 = vmatprep.subr.mxu0 0.0
          %1944 = vmatpush1.msra.mxu0 %v1927
          %1945 = vmatprep.subr.mxu0 0.0
          %1946 = vmatpush1.msra.mxu0 %v1928
          %1947 = vmatprep.subr.mxu0 0.0
          %1948 = vmatpush1.msra.mxu0 %v1929
          %1949 = vmatprep.subr.mxu0 0.0
          %1950 = vmatpush1.msra.mxu0 %v1930
          %1951 = vmatprep.subr.mxu0 0.0
          %1952 = vmatpush1.msra.mxu0 %v1931
          %1953 = vmatprep.subr.mxu0 0.0
          %1954 = vmatpush1.msra.mxu0 %v1932
          %1955 = vmatprep.subr.mxu0 0.0
          %1956 = vmatpush1.msra.mxu0 %v1933
          %1957 = vmatprep.subr.mxu0 0.0
          %1958 = vmatpush1.msra.mxu0 %v1934
          %1959 = vmatprep.subr.mxu0 0.0
          %1960 = vmatpush1.msra.mxu0 %v1935
          %1961 = vmatprep.subr.mxu0 0.0
          %1962 = vmatpush1.msra.mxu0 %v1936
          %1963 = vmatprep.subr.mxu0 0.0
          %1964 = vmatpush1.msra.mxu0 %v1937
          %1965 = vmatprep.subr.mxu0 0.0
          %1966 = vmatpush1.msra.mxu0 %v1938
          %1967 = vmatprep.subr.mxu0 0.0
          %1968 = vmatpush1.msra.mxu0 %v1939
          %1969 = vmatprep.subr.mxu0 0.0
          %1970 = vmatpush1.msra.mxu0 %v1940
          %1971 = vmatprep.subr.mxu0 0.0
          %1972 = vmatpush1.msra.mxu0 %v1941
          %1973 = vmatprep.subr.mxu0 0.0
          %1974 = vmatpush1.msra.mxu0 %v1942
          %1975 = vmatprep.subr.mxu0 0.0
          %1976 = vmatpush1.msra.mxu0 0.0
          %1977 = vmatprep.subr.mxu0 0.0
          %1978 = vmatpush1.msra.mxu0 0.0
          %1979 = vmatprep.subr.mxu0 0.0
          %1980 = vmatpush1.msra.mxu0 0.0
          %1981 = vmatprep.subr.mxu0 0.0
          %1982 = vmatpush1.msra.mxu0 0.0
          %1983 = vmatprep.subr.mxu0 0.0
          %1984 = vmatpush1.msra.mxu0 0.0
          %1985 = vmatprep.subr.mxu0 0.0
          %1986 = vmatpush1.msra.mxu0 0.0
          %1987 = vmatprep.subr.mxu0 0.0
          %1988 = vmatpush1.msra.mxu0 0.0
          %1989 = vmatprep.subr.mxu0 0.0
          %1990 = vmatpush1.msra.mxu0 0.0
          %1991 = vmatprep.subr.mxu0 0.0
          %1992 = vmatpush1.msra.mxu0 0.0
          %1993 = vmatprep.subr.mxu0 0.0
          %1994 = vmatpush1.msra.mxu0 0.0
          %1995 = vmatprep.subr.mxu0 0.0
          %1996 = vmatpush1.msra.mxu0 0.0
          %1997 = vmatprep.subr.mxu0 0.0
          %1998 = vmatpush1.msra.mxu0 0.0
          %1999 = vmatprep.subr.mxu0 0.0
          %2000 = vmatpush1.msra.mxu0 0.0
          %2001 = vmatprep.subr.mxu0 0.0
          %2002 = vmatpush1.msra.mxu0 0.0
          %2003 = vmatprep.subr.mxu0 0.0
          %2004 = vmatpush1.msra.mxu0 0.0
          %2005 = vmatprep.subr.mxu0 0.0
          %2006 = vmatpush1.msra.mxu0 0.0
          %2007 = vmatprep.mubr.f32.mxu0 0.0
          %2008 = vmatmul.mubr.f32.gmra.mrb[0].mxu0 %v1910
          %v2009 = vpop.f32.mrb[0].mxu0
          %v2010 = vadd.f32 0.0, %v2009
          %v2011 = vpop.f32.mrb[0].mxu0
          %2012 = vmatprep.mubr.f32.mxu0 0.0
          %2013 = vmatmul.mubr.f32.gmra.mrb[0].mxu0 %v1911
          %v2014 = vpop.f32.mrb[0].mxu0
          %v2015 = vadd.f32 0.0, %v2014
          %v2016 = vpop.f32.mrb[0].mxu0
          %2017 = vmatprep.mubr.f32.mxu0 0.0
          %2018 = vmatmul.mubr.f32.gmra.mrb[0].mxu0 %v1912
          %v2019 = vpop.f32.mrb[0].mxu0
          %v2020 = vadd.f32 0.0, %v2019
          %v2021 = vpop.f32.mrb[0].mxu0
          %2022 = vmatprep.mubr.f32.mxu0 0.0
          %2023 = vmatmul.mubr.f32.gmra.mrb[0].mxu0 %v1913
          %v2024 = vpop.f32.mrb[0].mxu0
          %v2025 = vadd.f32 0.0, %v2024
          %v2026 = vpop.f32.mrb[0].mxu0
          %2027 = vmatprep.mubr.f32.mxu0 0.0
          %2028 = vmatmul.mubr.f32.gmra.mrb[0].mxu0 %v1914
          %v2029 = vpop.f32.mrb[0].mxu0
          %v2030 = vadd.f32 0.0, %v2029
          %v2031 = vpop.f32.mrb[0].mxu0
          %2032 = vmatprep.mubr.f32.mxu0 0.0
          %2033 = vmatmul.mubr.f32.gmra.mrb[0].mxu0 %v1915
          %v2034 = vpop.f32.mrb[0].mxu0
          %v2035 = vadd.f32 0.0, %v2034
          %v2036 = vpop.f32.mrb[0].mxu0
          %2037 = vmatprep.mubr.f32.mxu0 0.0
          %2038 = vmatmul.mubr.f32.gmra.mrb[0].mxu0 %v1916
          %v2039 = vpop.f32.mrb[0].mxu0
          %v2040 = vadd.f32 0.0, %v2039
          %v2041 = vpop.f32.mrb[0].mxu0
          %2042 = vmatprep.mubr.f32.mxu0 0.0
          %2043 = vmatmul.mubr.f32.gmra.mrb[0].mxu0 %v1917
          %v2044 = vpop.f32.mrb[0].mxu0
          %v2045 = vadd.f32 0.0, %v2044
          %v2046 = vpop.f32.mrb[0].mxu0
          %2047 = vmatprep.mubr.f32.mxu0 0.0
          %2048 = vmatmul.mubr.f32.gmra.mrb[0].mxu0 %v1918
          %v2049 = vpop.f32.mrb[0].mxu0
          %v2050 = vadd.f32 0.0, %v2049
          %v2051 = vpop.f32.mrb[0].mxu0
          %2052 = vmatprep.mubr.f32.mxu0 0.0
          %2053 = vmatmul.mubr.f32.gmra.mrb[0].mxu0 %v1919
          %v2054 = vpop.f32.mrb[0].mxu0
          %v2055 = vadd.f32 0.0, %v2054
          %v2056 = vpop.f32.mrb[0].mxu0
          %2057 = vmatprep.mubr.f32.mxu0 0.0
          %2058 = vmatmul.mubr.f32.gmra.mrb[0].mxu0 %v1920
          %v2059 = vpop.f32.mrb[0].mxu0
          %v2060 = vadd.f32 0.0, %v2059
          %v2061 = vpop.f32.mrb[0].mxu0
          %2062 = vmatprep.mubr.f32.mxu0 0.0
          %2063 = vmatmul.mubr.f32.gmra.mrb[0].mxu0 %v1921
          %v2064 = vpop.f32.mrb[0].mxu0
          %v2065 = vadd.f32 0.0, %v2064
          %v2066 = vpop.f32.mrb[0].mxu0
          %2067 = vmatprep.mubr.f32.mxu0 0.0
          %2068 = vmatmul.mubr.f32.gmra.mrb[0].mxu0 %v1922
          %v2069 = vpop.f32.mrb[0].mxu0
          %v2070 = vadd.f32 0.0, %v2069
          %v2071 = vpop.f32.mrb[0].mxu0
          %2072 = vmatprep.mubr.f32.mxu0 0.0
          %2073 = vmatmul.mubr.f32.gmra.mrb[0].mxu0 %v1923
          %v2074 = vpop.f32.mrb[0].mxu0
          %v2075 = vadd.f32 0.0, %v2074
          %v2076 = vpop.f32.mrb[0].mxu0
          %2077 = vmatprep.mubr.f32.mxu0 0.0
          %2078 = vmatmul.mubr.f32.gmra.mrb[0].mxu0 %v1924
          %v2079 = vpop.f32.mrb[0].mxu0
          %v2080 = vadd.f32 0.0, %v2079
          %v2081 = vpop.f32.mrb[0].mxu0
          %2082 = vmatprep.mubr.f32.mxu0 0.0
          %2083 = vmatmul.mubr.f32.gmra.mrb[0].mxu0 %v1925
          %v2084 = vpop.f32.mrb[0].mxu0
          %v2085 = vadd.f32 0.0, %v2084
          %v2086 = vpop.f32.mrb[0].mxu0
          %2087 = vdwg.mxu0
          %v2088 = vadd.f32 %v1894, %v2010
          %v2089 = vadd.f32 %v1895, %v2015
          %v2090 = vadd.f32 %v1896, %v2020
          %v2091 = vadd.f32 %v1897, %v2025
          %v2092 = vadd.f32 %v1898, %v2030
          %v2093 = vadd.f32 %v1899, %v2035
          %v2094 = vadd.f32 %v1900, %v2040
          %v2095 = vadd.f32 %v1901, %v2045
          %v2096 = vadd.f32 %v1902, %v2050
          %v2097 = vadd.f32 %v1903, %v2055
          %v2098 = vadd.f32 %v1904, %v2060
          %v2099 = vadd.f32 %v1905, %v2065
          %v2100 = vadd.f32 %v1906, %v2070
          %v2101 = vadd.f32 %v1907, %v2075
          %v2102 = vadd.f32 %v1908, %v2080
          %v2103 = vadd.f32 %v1909, %v2085
          %v2104 = vld [vmem:[%s1715 + $0x11] sm:$0xff]
          %v2105 = vld [vmem:[%s1715 + $0x19] sm:$0xff]
          %v2106 = vld [vmem:[%s1715 + $0x41] sm:$0xff]
          %v2107 = vld [vmem:[%s1715 + $0x49] sm:$0xff]
          %v2108 = vld [vmem:[%s1715 + $0x71] sm:$0xff]
          %v2109 = vld [vmem:[%s1715 + $0x79] sm:$0xff]
          %v2110 = vld [vmem:[%s1715 + $0xa1] sm:$0xff]
          %v2111 = vld [vmem:[%s1715 + $0xa9] sm:$0xff]
          %v2112 = vld [vmem:[%s1715 + $0xd1] sm:$0xff]
          %v2113 = vld [vmem:[%s1715 + $0xd9] sm:$0xff]
          %v2114 = vld [vmem:[%s1715 + $0x101] sm:$0xff]
          %v2115 = vld [vmem:[%s1715 + $0x109] sm:$0xff]
          %v2116 = vld [vmem:[%s1715 + $0x131] sm:$0xff]
          %v2117 = vld [vmem:[%s1715 + $0x139] sm:$0xff]
          %v2118 = vld [vmem:[%s1715 + $0x161] sm:$0xff]
          %v2119 = vld [vmem:[%s1715 + $0x169] sm:$0xff]
          %s2120 = scalar_lea.vmem [#allocation7], 1024
          %v2121 = vld [vmem:[%s2120] sm:$0xff]
          %v2122 = vld [vmem:[%s2120 + $0x8] sm:$0xff]
          %v2123 = vld [vmem:[%s2120 + $0x10] sm:$0xff]
          %v2124 = vld [vmem:[%s2120 + $0x18] sm:$0xff]
          %v2125 = vld [vmem:[%s2120 + $0x20] sm:$0xff]
          %v2126 = vld [vmem:[%s2120 + $0x28] sm:$0xff]
          %v2127 = vld [vmem:[%s2120 + $0x30] sm:$0xff]
          %v2128 = vld [vmem:[%s2120 + $0x38] sm:$0xff]
          %v2129 = vld [vmem:[%s2120 + $0x40] sm:$0xff]
          %v2130 = vld [vmem:[%s2120 + $0x48] sm:$0xff]
          %v2131 = vld [vmem:[%s2120 + $0x50] sm:$0xff]
          %v2132 = vld [vmem:[%s2120 + $0x58] sm:$0xff]
          %v2133 = vld [vmem:[%s2120 + $0x60] sm:$0xff]
          %v2134 = vld [vmem:[%s2120 + $0x68] sm:$0xff]
          %v2135 = vld [vmem:[%s2120 + $0x70] sm:$0xff]
          %v2136 = vld [vmem:[%s2120 + $0x78] sm:$0xff]
          %2137 = vmatprep.subr.mxu0 0.0
          %2138 = vmatpush1.msra.mxu0 %v2121
          %2139 = vmatprep.subr.mxu0 0.0
          %2140 = vmatpush1.msra.mxu0 %v2122
          %2141 = vmatprep.subr.mxu0 0.0
          %2142 = vmatpush1.msra.mxu0 %v2123
          %2143 = vmatprep.subr.mxu0 0.0
          %2144 = vmatpush1.msra.mxu0 %v2124
          %2145 = vmatprep.subr.mxu0 0.0
          %2146 = vmatpush1.msra.mxu0 %v2125
          %2147 = vmatprep.subr.mxu0 0.0
          %2148 = vmatpush1.msra.mxu0 %v2126
          %2149 = vmatprep.subr.mxu0 0.0
          %2150 = vmatpush1.msra.mxu0 %v2127
          %2151 = vmatprep.subr.mxu0 0.0
          %2152 = vmatpush1.msra.mxu0 %v2128
          %2153 = vmatprep.subr.mxu0 0.0
          %2154 = vmatpush1.msra.mxu0 %v2129
          %2155 = vmatprep.subr.mxu0 0.0
          %2156 = vmatpush1.msra.mxu0 %v2130
          %2157 = vmatprep.subr.mxu0 0.0
          %2158 = vmatpush1.msra.mxu0 %v2131
          %2159 = vmatprep.subr.mxu0 0.0
          %2160 = vmatpush1.msra.mxu0 %v2132
          %2161 = vmatprep.subr.mxu0 0.0
          %2162 = vmatpush1.msra.mxu0 %v2133
          %2163 = vmatprep.subr.mxu0 0.0
          %2164 = vmatpush1.msra.mxu0 %v2134
          %2165 = vmatprep.subr.mxu0 0.0
          %2166 = vmatpush1.msra.mxu0 %v2135
          %2167 = vmatprep.subr.mxu0 0.0
          %2168 = vmatpush1.msra.mxu0 %v2136
          %2169 = vmatprep.subr.mxu0 0.0
          %2170 = vmatpush1.msra.mxu0 0.0
          %2171 = vmatprep.subr.mxu0 0.0
          %2172 = vmatpush1.msra.mxu0 0.0
          %2173 = vmatprep.subr.mxu0 0.0
          %2174 = vmatpush1.msra.mxu0 0.0
          %2175 = vmatprep.subr.mxu0 0.0
          %2176 = vmatpush1.msra.mxu0 0.0
          %2177 = vmatprep.subr.mxu0 0.0
          %2178 = vmatpush1.msra.mxu0 0.0
          %2179 = vmatprep.subr.mxu0 0.0
          %2180 = vmatpush1.msra.mxu0 0.0
          %2181 = vmatprep.subr.mxu0 0.0
          %2182 = vmatpush1.msra.mxu0 0.0
          %2183 = vmatprep.subr.mxu0 0.0
          %2184 = vmatpush1.msra.mxu0 0.0
          %2185 = vmatprep.subr.mxu0 0.0
          %2186 = vmatpush1.msra.mxu0 0.0
          %2187 = vmatprep.subr.mxu0 0.0
          %2188 = vmatpush1.msra.mxu0 0.0
          %2189 = vmatprep.subr.mxu0 0.0
          %2190 = vmatpush1.msra.mxu0 0.0
          %2191 = vmatprep.subr.mxu0 0.0
          %2192 = vmatpush1.msra.mxu0 0.0
          %2193 = vmatprep.subr.mxu0 0.0
          %2194 = vmatpush1.msra.mxu0 0.0
          %2195 = vmatprep.subr.mxu0 0.0
          %2196 = vmatpush1.msra.mxu0 0.0
          %2197 = vmatprep.subr.mxu0 0.0
          %2198 = vmatpush1.msra.mxu0 0.0
          %2199 = vmatprep.subr.mxu0 0.0
          %2200 = vmatpush1.msra.mxu0 0.0
          %2201 = vmatprep.mubr.f32.mxu0 0.0
          %2202 = vmatmul.mubr.f32.gmra.mrb[0].mxu0 %v2104
          %v2203 = vpop.f32.mrb[0].mxu0
          %v2204 = vadd.f32 0.0, %v2203
          %v2205 = vpop.f32.mrb[0].mxu0
          %2206 = vmatprep.mubr.f32.mxu0 0.0
          %2207 = vmatmul.mubr.f32.gmra.mrb[0].mxu0 %v2105
          %v2208 = vpop.f32.mrb[0].mxu0
          %v2209 = vadd.f32 0.0, %v2208
          %v2210 = vpop.f32.mrb[0].mxu0
          %2211 = vmatprep.mubr.f32.mxu0 0.0
          %2212 = vmatmul.mubr.f32.gmra.mrb[0].mxu0 %v2106
          %v2213 = vpop.f32.mrb[0].mxu0
          %v2214 = vadd.f32 0.0, %v2213
          %v2215 = vpop.f32.mrb[0].mxu0
          %2216 = vmatprep.mubr.f32.mxu0 0.0
          %2217 = vmatmul.mubr.f32.gmra.mrb[0].mxu0 %v2107
          %v2218 = vpop.f32.mrb[0].mxu0
          %v2219 = vadd.f32 0.0, %v2218
          %v2220 = vpop.f32.mrb[0].mxu0
          %2221 = vmatprep.mubr.f32.mxu0 0.0
          %2222 = vmatmul.mubr.f32.gmra.mrb[0].mxu0 %v2108
          %v2223 = vpop.f32.mrb[0].mxu0
          %v2224 = vadd.f32 0.0, %v2223
          %v2225 = vpop.f32.mrb[0].mxu0
          %2226 = vmatprep.mubr.f32.mxu0 0.0
          %2227 = vmatmul.mubr.f32.gmra.mrb[0].mxu0 %v2109
          %v2228 = vpop.f32.mrb[0].mxu0
          %v2229 = vadd.f32 0.0, %v2228
          %v2230 = vpop.f32.mrb[0].mxu0
          %2231 = vmatprep.mubr.f32.mxu0 0.0
          %2232 = vmatmul.mubr.f32.gmra.mrb[0].mxu0 %v2110
          %v2233 = vpop.f32.mrb[0].mxu0
          %v2234 = vadd.f32 0.0, %v2233
          %v2235 = vpop.f32.mrb[0].mxu0
          %2236 = vmatprep.mubr.f32.mxu0 0.0
          %2237 = vmatmul.mubr.f32.gmra.mrb[0].mxu0 %v2111
          %v2238 = vpop.f32.mrb[0].mxu0
          %v2239 = vadd.f32 0.0, %v2238
          %v2240 = vpop.f32.mrb[0].mxu0
          %2241 = vmatprep.mubr.f32.mxu0 0.0
          %2242 = vmatmul.mubr.f32.gmra.mrb[0].mxu0 %v2112
          %v2243 = vpop.f32.mrb[0].mxu0
          %v2244 = vadd.f32 0.0, %v2243
          %v2245 = vpop.f32.mrb[0].mxu0
          %2246 = vmatprep.mubr.f32.mxu0 0.0
          %2247 = vmatmul.mubr.f32.gmra.mrb[0].mxu0 %v2113
          %v2248 = vpop.f32.mrb[0].mxu0
          %v2249 = vadd.f32 0.0, %v2248
          %v2250 = vpop.f32.mrb[0].mxu0
          %2251 = vmatprep.mubr.f32.mxu0 0.0
          %2252 = vmatmul.mubr.f32.gmra.mrb[0].mxu0 %v2114
          %v2253 = vpop.f32.mrb[0].mxu0
          %v2254 = vadd.f32 0.0, %v2253
          %v2255 = vpop.f32.mrb[0].mxu0
          %2256 = vmatprep.mubr.f32.mxu0 0.0
          %2257 = vmatmul.mubr.f32.gmra.mrb[0].mxu0 %v2115
          %v2258 = vpop.f32.mrb[0].mxu0
          %v2259 = vadd.f32 0.0, %v2258
          %v2260 = vpop.f32.mrb[0].mxu0
          %2261 = vmatprep.mubr.f32.mxu0 0.0
          %2262 = vmatmul.mubr.f32.gmra.mrb[0].mxu0 %v2116
          %v2263 = vpop.f32.mrb[0].mxu0
          %v2264 = vadd.f32 0.0, %v2263
          %v2265 = vpop.f32.mrb[0].mxu0
          %2266 = vmatprep.mubr.f32.mxu0 0.0
          %2267 = vmatmul.mubr.f32.gmra.mrb[0].mxu0 %v2117
          %v2268 = vpop.f32.mrb[0].mxu0
          %v2269 = vadd.f32 0.0, %v2268
          %v2270 = vpop.f32.mrb[0].mxu0
          %2271 = vmatprep.mubr.f32.mxu0 0.0
          %2272 = vmatmul.mubr.f32.gmra.mrb[0].mxu0 %v2118
          %v2273 = vpop.f32.mrb[0].mxu0
          %v2274 = vadd.f32 0.0, %v2273
          %v2275 = vpop.f32.mrb[0].mxu0
          %2276 = vmatprep.mubr.f32.mxu0 0.0
          %2277 = vmatmul.mubr.f32.gmra.mrb[0].mxu0 %v2119
          %v2278 = vpop.f32.mrb[0].mxu0
          %v2279 = vadd.f32 0.0, %v2278
          %v2280 = vpop.f32.mrb[0].mxu0
          %2281 = vdwg.mxu0
          %v2282 = vadd.f32 %v2088, %v2204
          %v2283 = vadd.f32 %v2089, %v2209
          %v2284 = vadd.f32 %v2090, %v2214
          %v2285 = vadd.f32 %v2091, %v2219
          %v2286 = vadd.f32 %v2092, %v2224
          %v2287 = vadd.f32 %v2093, %v2229
          %v2288 = vadd.f32 %v2094, %v2234
          %v2289 = vadd.f32 %v2095, %v2239
          %v2290 = vadd.f32 %v2096, %v2244
          %v2291 = vadd.f32 %v2097, %v2249
          %v2292 = vadd.f32 %v2098, %v2254
          %v2293 = vadd.f32 %v2099, %v2259
          %v2294 = vadd.f32 %v2100, %v2264
          %v2295 = vadd.f32 %v2101, %v2269
          %v2296 = vadd.f32 %v2102, %v2274
          %v2297 = vadd.f32 %v2103, %v2279
          %v2299 = vlaneseq
          %v2300 = vshrl.u32 %v2299, 7
          %v2301 = vsub.s32 0, %v2300
          %v2302 = vrot.slane %v382, %v2301
          %v2304 = vadd.f32 %v2282, %v2302
          %v2305 = vadd.f32 %v2283, %v2302
          %v2306 = vadd.f32 %v2284, %v2302
          %v2307 = vadd.f32 %v2285, %v2302
          %v2308 = vadd.f32 %v2286, %v2302
          %v2309 = vadd.f32 %v2287, %v2302
          %v2310 = vadd.f32 %v2288, %v2302
          %v2311 = vadd.f32 %v2289, %v2302
          %v2312 = vadd.f32 %v2290, %v2302
          %v2313 = vadd.f32 %v2291, %v2302
          %v2314 = vadd.f32 %v2292, %v2302
          %v2315 = vadd.f32 %v2293, %v2302
          %v2316 = vadd.f32 %v2294, %v2302
          %v2317 = vadd.f32 %v2295, %v2302
          %v2318 = vadd.f32 %v2296, %v2302
          %v2319 = vadd.f32 %v2297, %v2302
          %v2321 = vlaneseq
          %v2322 = vshrl.u32 %v2321, 7
          %v2323 = vsub.s32 0, %v2322
          %v2324 = vrot.slane %v383, %v2323
          %v2326 = vmul.f32 %v2304, %v2324
          %v2327 = vmul.f32 %v2305, %v2324
          %v2328 = vmul.f32 %v2306, %v2324
          %v2329 = vmul.f32 %v2307, %v2324
          %v2330 = vmul.f32 %v2308, %v2324
          %v2331 = vmul.f32 %v2309, %v2324
          %v2332 = vmul.f32 %v2310, %v2324
          %v2333 = vmul.f32 %v2311, %v2324
          %v2334 = vmul.f32 %v2312, %v2324
          %v2335 = vmul.f32 %v2313, %v2324
          %v2336 = vmul.f32 %v2314, %v2324
          %v2337 = vmul.f32 %v2315, %v2324
          %v2338 = vmul.f32 %v2316, %v2324
          %v2339 = vmul.f32 %v2317, %v2324
          %v2340 = vmul.f32 %v2318, %v2324
          %v2341 = vmul.f32 %v2319, %v2324
          %v2343 = vlaneseq
          %v2344 = vshrl.u32 %v2343, 7
          %v2345 = vsub.s32 0, %v2344
          %v2346 = vrot.slane %v384, %v2345
          %v2348 = vadd.f32 %v2326, %v2346
          %v2349 = vadd.f32 %v2327, %v2346
          %v2350 = vadd.f32 %v2328, %v2346
          %v2351 = vadd.f32 %v2329, %v2346
          %v2352 = vadd.f32 %v2330, %v2346
          %v2353 = vadd.f32 %v2331, %v2346
          %v2354 = vadd.f32 %v2332, %v2346
          %v2355 = vadd.f32 %v2333, %v2346
          %v2356 = vadd.f32 %v2334, %v2346
          %v2357 = vadd.f32 %v2335, %v2346
          %v2358 = vadd.f32 %v2336, %v2346
          %v2359 = vadd.f32 %v2337, %v2346
          %v2360 = vadd.f32 %v2338, %v2346
          %v2361 = vadd.f32 %v2339, %v2346
          %v2362 = vadd.f32 %v2340, %v2346
          %v2363 = vadd.f32 %v2341, %v2346
          %v2364 = vmax.f32 %v2348, 0.0
          %v2365 = vmax.f32 %v2349, 0.0
          %v2366 = vmax.f32 %v2350, 0.0
          %v2367 = vmax.f32 %v2351, 0.0
          %v2368 = vmax.f32 %v2352, 0.0
          %v2369 = vmax.f32 %v2353, 0.0
          %v2370 = vmax.f32 %v2354, 0.0
          %v2371 = vmax.f32 %v2355, 0.0
          %v2372 = vmax.f32 %v2356, 0.0
          %v2373 = vmax.f32 %v2357, 0.0
          %v2374 = vmax.f32 %v2358, 0.0
          %v2375 = vmax.f32 %v2359, 0.0
          %v2376 = vmax.f32 %v2360, 0.0
          %v2377 = vmax.f32 %v2361, 0.0
          %v2378 = vmax.f32 %v2362, 0.0
          %v2379 = vmax.f32 %v2363, 0.0
          %s2380 = scalar_lea.vmem [#allocation3], %s1129
          %2381 = vst [vmem:[%s2380 + $0x10] sm:$0xff] %v2364
          %2382 = vst [vmem:[%s2380 + $0x18] sm:$0xff] %v2365
          %2383 = vst [vmem:[%s2380 + $0x40] sm:$0xff] %v2366
          %2384 = vst [vmem:[%s2380 + $0x48] sm:$0xff] %v2367
          %2385 = vst [vmem:[%s2380 + $0x70] sm:$0xff] %v2368
          %2386 = vst [vmem:[%s2380 + $0x78] sm:$0xff] %v2369
          %2387 = vst [vmem:[%s2380 + $0xa0] sm:$0xff] %v2370
          %2388 = vst [vmem:[%s2380 + $0xa8] sm:$0xff] %v2371
          %2389 = vst [vmem:[%s2380 + $0xd0] sm:$0xff] %v2372
          %2390 = vst [vmem:[%s2380 + $0xd8] sm:$0xff] %v2373
          %2391 = vst [vmem:[%s2380 + $0x100] sm:$0xff] %v2374
          %2392 = vst [vmem:[%s2380 + $0x108] sm:$0xff] %v2375
          %2393 = vst [vmem:[%s2380 + $0x130] sm:$0xff] %v2376
          %2394 = vst [vmem:[%s2380 + $0x138] sm:$0xff] %v2377
          %2395 = vst [vmem:[%s2380 + $0x160] sm:$0xff] %v2378
          %2396 = vst [vmem:[%s2380 + $0x168] sm:$0xff] %v2379
        $region80: #{tpu_custom_call.1} parent=55 // loop_footer
          %s575 = sadd.s32 1, %s571
        $region81: #{tpu_custom_call.1} parent=55 // loop_footer_branch
          %570 = sbr.rel target = $region77
        $region82: #{tpu_custom_call.1} parent=55 // loop_exit
          _
        loop: start=0, step=1, limit=2
        $region83: #{tpu_custom_call.1} parent=55 // loop_pre_header
          _
        $region84: #{tpu_custom_call.1} parent=55 // loop_header
          %s2398 = sphi 0, %s2402
          %p2399 = scmp.ge.s32.totalorder %s2398, 2
        $region85: #{tpu_custom_call.1} parent=55 // loop_header_branch
          %2401 = sbr.rel (%p2399) target = $region89
        $region86: #{tpu_custom_call.1} parent=55 // loop_body
          %s2403 = smul.u32 %s2398, 8
          %s2404 = smul.u32 %s2403, 48
          %s2405 = scalar_lea.vmem [#allocation3], %s2404
          %v2406 = vld [vmem:[%s2405 + $0xf] sm:$0xff]
          %v2407 = vld [vmem:[%s2405 + $0x17] sm:$0xff]
          %v2408 = vld [vmem:[%s2405 + $0x3f] sm:$0xff]
          %v2409 = vld [vmem:[%s2405 + $0x47] sm:$0xff]
          %v2410 = vld [vmem:[%s2405 + $0x6f] sm:$0xff]
          %v2411 = vld [vmem:[%s2405 + $0x77] sm:$0xff]
          %v2412 = vld [vmem:[%s2405 + $0x9f] sm:$0xff]
          %v2413 = vld [vmem:[%s2405 + $0xa7] sm:$0xff]
          %v2414 = vld [vmem:[%s2405 + $0xcf] sm:$0xff]
          %v2415 = vld [vmem:[%s2405 + $0xd7] sm:$0xff]
          %v2416 = vld [vmem:[%s2405 + $0xff] sm:$0xff]
          %v2417 = vld [vmem:[%s2405 + $0x107] sm:$0xff]
          %v2418 = vld [vmem:[%s2405 + $0x12f] sm:$0xff]
          %v2419 = vld [vmem:[%s2405 + $0x137] sm:$0xff]
          %v2420 = vld [vmem:[%s2405 + $0x15f] sm:$0xff]
          %v2421 = vld [vmem:[%s2405 + $0x167] sm:$0xff]
          %v2422 = vld [vmem:[#allocation9] sm:$0xff]
          %v2423 = vld [vmem:[#allocation9 + $0x8] sm:$0xff]
          %v2424 = vld [vmem:[#allocation9 + $0x10] sm:$0xff]
          %v2425 = vld [vmem:[#allocation9 + $0x18] sm:$0xff]
          %v2426 = vld [vmem:[#allocation9 + $0x20] sm:$0xff]
          %v2427 = vld [vmem:[#allocation9 + $0x28] sm:$0xff]
          %v2428 = vld [vmem:[#allocation9 + $0x30] sm:$0xff]
          %v2429 = vld [vmem:[#allocation9 + $0x38] sm:$0xff]
          %v2430 = vld [vmem:[#allocation9 + $0x40] sm:$0xff]
          %v2431 = vld [vmem:[#allocation9 + $0x48] sm:$0xff]
          %v2432 = vld [vmem:[#allocation9 + $0x50] sm:$0xff]
          %v2433 = vld [vmem:[#allocation9 + $0x58] sm:$0xff]
          %v2434 = vld [vmem:[#allocation9 + $0x60] sm:$0xff]
          %v2435 = vld [vmem:[#allocation9 + $0x68] sm:$0xff]
          %v2436 = vld [vmem:[#allocation9 + $0x70] sm:$0xff]
          %v2437 = vld [vmem:[#allocation9 + $0x78] sm:$0xff]
          %v2438 = vld [vmem:[%s2405 + $0x10] sm:$0xff]
          %v2439 = vld [vmem:[%s2405 + $0x18] sm:$0xff]
          %v2440 = vld [vmem:[%s2405 + $0x40] sm:$0xff]
          %v2441 = vld [vmem:[%s2405 + $0x48] sm:$0xff]
          %v2442 = vld [vmem:[%s2405 + $0x70] sm:$0xff]
          %v2443 = vld [vmem:[%s2405 + $0x78] sm:$0xff]
          %v2444 = vld [vmem:[%s2405 + $0xa0] sm:$0xff]
          %v2445 = vld [vmem:[%s2405 + $0xa8] sm:$0xff]
          %v2446 = vld [vmem:[%s2405 + $0xd0] sm:$0xff]
          %v2447 = vld [vmem:[%s2405 + $0xd8] sm:$0xff]
          %v2448 = vld [vmem:[%s2405 + $0x100] sm:$0xff]
          %v2449 = vld [vmem:[%s2405 + $0x108] sm:$0xff]
          %v2450 = vld [vmem:[%s2405 + $0x130] sm:$0xff]
          %v2451 = vld [vmem:[%s2405 + $0x138] sm:$0xff]
          %v2452 = vld [vmem:[%s2405 + $0x160] sm:$0xff]
          %v2453 = vld [vmem:[%s2405 + $0x168] sm:$0xff]
          %s2454 = scalar_lea.vmem [#allocation9], 128
          %v2455 = vld [vmem:[%s2454] sm:$0xff]
          %v2456 = vld [vmem:[%s2454 + $0x8] sm:$0xff]
          %v2457 = vld [vmem:[%s2454 + $0x10] sm:$0xff]
          %v2458 = vld [vmem:[%s2454 + $0x18] sm:$0xff]
          %v2459 = vld [vmem:[%s2454 + $0x20] sm:$0xff]
          %v2460 = vld [vmem:[%s2454 + $0x28] sm:$0xff]
          %v2461 = vld [vmem:[%s2454 + $0x30] sm:$0xff]
          %v2462 = vld [vmem:[%s2454 + $0x38] sm:$0xff]
          %v2463 = vld [vmem:[%s2454 + $0x40] sm:$0xff]
          %v2464 = vld [vmem:[%s2454 + $0x48] sm:$0xff]
          %v2465 = vld [vmem:[%s2454 + $0x50] sm:$0xff]
          %v2466 = vld [vmem:[%s2454 + $0x58] sm:$0xff]
          %v2467 = vld [vmem:[%s2454 + $0x60] sm:$0xff]
          %v2468 = vld [vmem:[%s2454 + $0x68] sm:$0xff]
          %v2469 = vld [vmem:[%s2454 + $0x70] sm:$0xff]
          %v2470 = vld [vmem:[%s2454 + $0x78] sm:$0xff]
          %2471 = vmatprep.subr.mxu0 0.0
          %2472 = vmatpush1.msra.mxu0 %v2455
          %2473 = vmatprep.subr.mxu0 0.0
          %2474 = vmatpush1.msra.mxu0 %v2456
          %2475 = vmatprep.subr.mxu0 0.0
          %2476 = vmatpush1.msra.mxu0 %v2457
          %2477 = vmatprep.subr.mxu0 0.0
          %2478 = vmatpush1.msra.mxu0 %v2458
          %2479 = vmatprep.subr.mxu0 0.0
          %2480 = vmatpush1.msra.mxu0 %v2459
          %2481 = vmatprep.subr.mxu0 0.0
          %2482 = vmatpush1.msra.mxu0 %v2460
          %2483 = vmatprep.subr.mxu0 0.0
          %2484 = vmatpush1.msra.mxu0 %v2461
          %2485 = vmatprep.subr.mxu0 0.0
          %2486 = vmatpush1.msra.mxu0 %v2462
          %2487 = vmatprep.subr.mxu0 0.0
          %2488 = vmatpush1.msra.mxu0 %v2463
          %2489 = vmatprep.subr.mxu0 0.0
          %2490 = vmatpush1.msra.mxu0 %v2464
          %2491 = vmatprep.subr.mxu0 0.0
          %2492 = vmatpush1.msra.mxu0 %v2465
          %2493 = vmatprep.subr.mxu0 0.0
          %2494 = vmatpush1.msra.mxu0 %v2466
          %2495 = vmatprep.subr.mxu0 0.0
          %2496 = vmatpush1.msra.mxu0 %v2467
          %2497 = vmatprep.subr.mxu0 0.0
          %2498 = vmatpush1.msra.mxu0 %v2468
          %2499 = vmatprep.subr.mxu0 0.0
          %2500 = vmatpush1.msra.mxu0 %v2469
          %2501 = vmatprep.subr.mxu0 0.0
          %2502 = vmatpush1.msra.mxu0 %v2470
          %2503 = vmatprep.subr.mxu0 0.0
          %2504 = vmatpush1.msra.mxu0 0.0
          %2505 = vmatprep.subr.mxu0 0.0
          %2506 = vmatpush1.msra.mxu0 0.0
          %2507 = vmatprep.subr.mxu0 0.0
          %2508 = vmatpush1.msra.mxu0 0.0
          %2509 = vmatprep.subr.mxu0 0.0
          %2510 = vmatpush1.msra.mxu0 0.0
          %2511 = vmatprep.subr.mxu0 0.0
          %2512 = vmatpush1.msra.mxu0 0.0
          %2513 = vmatprep.subr.mxu0 0.0
          %2514 = vmatpush1.msra.mxu0 0.0
          %2515 = vmatprep.subr.mxu0 0.0
          %2516 = vmatpush1.msra.mxu0 0.0
          %2517 = vmatprep.subr.mxu0 0.0
          %2518 = vmatpush1.msra.mxu0 0.0
          %2519 = vmatprep.subr.mxu0 0.0
          %2520 = vmatpush1.msra.mxu0 0.0
          %2521 = vmatprep.subr.mxu0 0.0
          %2522 = vmatpush1.msra.mxu0 0.0
          %2523 = vmatprep.subr.mxu0 0.0
          %2524 = vmatpush1.msra.mxu0 0.0
          %2525 = vmatprep.subr.mxu0 0.0
          %2526 = vmatpush1.msra.mxu0 0.0
          %2527 = vmatprep.subr.mxu0 0.0
          %2528 = vmatpush1.msra.mxu0 0.0
          %2529 = vmatprep.subr.mxu0 0.0
          %2530 = vmatpush1.msra.mxu0 0.0
          %2531 = vmatprep.subr.mxu0 0.0
          %2532 = vmatpush1.msra.mxu0 0.0
          %2533 = vmatprep.subr.mxu0 0.0
          %2534 = vmatpush1.msra.mxu0 0.0
          %2535 = vmatprep.mubr.f32.mxu0 0.0
          %2536 = vmatmul.mubr.f32.gmra.mrb[0].mxu0 %v2438
          %v2537 = vpop.f32.mrb[0].mxu0
          %v2538 = vadd.f32 0.0, %v2537
          %v2539 = vpop.f32.mrb[0].mxu0
          %2540 = vmatprep.mubr.f32.mxu0 0.0
          %2541 = vmatmul.mubr.f32.gmra.mrb[0].mxu0 %v2439
          %v2542 = vpop.f32.mrb[0].mxu0
          %v2543 = vadd.f32 0.0, %v2542
          %v2544 = vpop.f32.mrb[0].mxu0
          %2545 = vmatprep.mubr.f32.mxu0 0.0
          %2546 = vmatmul.mubr.f32.gmra.mrb[0].mxu0 %v2440
          %v2547 = vpop.f32.mrb[0].mxu0
          %v2548 = vadd.f32 0.0, %v2547
          %v2549 = vpop.f32.mrb[0].mxu0
          %2550 = vmatprep.mubr.f32.mxu0 0.0
          %2551 = vmatmul.mubr.f32.gmra.mrb[0].mxu0 %v2441
          %v2552 = vpop.f32.mrb[0].mxu0
          %v2553 = vadd.f32 0.0, %v2552
          %v2554 = vpop.f32.mrb[0].mxu0
          %2555 = vmatprep.mubr.f32.mxu0 0.0
          %2556 = vmatmul.mubr.f32.gmra.mrb[0].mxu0 %v2442
          %v2557 = vpop.f32.mrb[0].mxu0
          %v2558 = vadd.f32 0.0, %v2557
          %v2559 = vpop.f32.mrb[0].mxu0
          %2560 = vmatprep.mubr.f32.mxu0 0.0
          %2561 = vmatmul.mubr.f32.gmra.mrb[0].mxu0 %v2443
          %v2562 = vpop.f32.mrb[0].mxu0
          %v2563 = vadd.f32 0.0, %v2562
          %v2564 = vpop.f32.mrb[0].mxu0
          %2565 = vmatprep.mubr.f32.mxu0 0.0
          %2566 = vmatmul.mubr.f32.gmra.mrb[0].mxu0 %v2444
          %v2567 = vpop.f32.mrb[0].mxu0
          %v2568 = vadd.f32 0.0, %v2567
          %v2569 = vpop.f32.mrb[0].mxu0
          %2570 = vmatprep.mubr.f32.mxu0 0.0
          %2571 = vmatmul.mubr.f32.gmra.mrb[0].mxu0 %v2445
          %v2572 = vpop.f32.mrb[0].mxu0
          %v2573 = vadd.f32 0.0, %v2572
          %v2574 = vpop.f32.mrb[0].mxu0
          %2575 = vmatprep.mubr.f32.mxu0 0.0
          %2576 = vmatmul.mubr.f32.gmra.mrb[0].mxu0 %v2446
          %v2577 = vpop.f32.mrb[0].mxu0
          %v2578 = vadd.f32 0.0, %v2577
          %v2579 = vpop.f32.mrb[0].mxu0
          %2580 = vmatprep.mubr.f32.mxu0 0.0
          %2581 = vmatmul.mubr.f32.gmra.mrb[0].mxu0 %v2447
          %v2582 = vpop.f32.mrb[0].mxu0
          %v2583 = vadd.f32 0.0, %v2582
          %v2584 = vpop.f32.mrb[0].mxu0
          %2585 = vmatprep.mubr.f32.mxu0 0.0
          %2586 = vmatmul.mubr.f32.gmra.mrb[0].mxu0 %v2448
          %v2587 = vpop.f32.mrb[0].mxu0
          %v2588 = vadd.f32 0.0, %v2587
          %v2589 = vpop.f32.mrb[0].mxu0
          %2590 = vmatprep.mubr.f32.mxu0 0.0
          %2591 = vmatmul.mubr.f32.gmra.mrb[0].mxu0 %v2449
          %v2592 = vpop.f32.mrb[0].mxu0
          %v2593 = vadd.f32 0.0, %v2592
          %v2594 = vpop.f32.mrb[0].mxu0
          %2595 = vmatprep.mubr.f32.mxu0 0.0
          %2596 = vmatmul.mubr.f32.gmra.mrb[0].mxu0 %v2450
          %v2597 = vpop.f32.mrb[0].mxu0
          %v2598 = vadd.f32 0.0, %v2597
          %v2599 = vpop.f32.mrb[0].mxu0
          %2600 = vmatprep.mubr.f32.mxu0 0.0
          %2601 = vmatmul.mubr.f32.gmra.mrb[0].mxu0 %v2451
          %v2602 = vpop.f32.mrb[0].mxu0
          %v2603 = vadd.f32 0.0, %v2602
          %v2604 = vpop.f32.mrb[0].mxu0
          %2605 = vmatprep.mubr.f32.mxu0 0.0
          %2606 = vmatmul.mubr.f32.gmra.mrb[0].mxu0 %v2452
          %v2607 = vpop.f32.mrb[0].mxu0
          %v2608 = vadd.f32 0.0, %v2607
          %v2609 = vpop.f32.mrb[0].mxu0
          %2610 = vmatprep.mubr.f32.mxu0 0.0
          %2611 = vmatmul.mubr.f32.gmra.mrb[0].mxu0 %v2453
          %v2612 = vpop.f32.mrb[0].mxu0
          %v2613 = vadd.f32 0.0, %v2612
          %v2614 = vpop.f32.mrb[0].mxu0
          %2615 = vdwg.mxu0
          %2616 = vmatprep.subr.mxu0 0.0
          %2617 = vmatpush1.msra.mxu0 %v2422
          %2618 = vmatprep.subr.mxu0 0.0
          %2619 = vmatpush1.msra.mxu0 %v2423
          %2620 = vmatprep.subr.mxu0 0.0
          %2621 = vmatpush1.msra.mxu0 %v2424
          %2622 = vmatprep.subr.mxu0 0.0
          %2623 = vmatpush1.msra.mxu0 %v2425
          %2624 = vmatprep.subr.mxu0 0.0
          %2625 = vmatpush1.msra.mxu0 %v2426
          %2626 = vmatprep.subr.mxu0 0.0
          %2627 = vmatpush1.msra.mxu0 %v2427
          %2628 = vmatprep.subr.mxu0 0.0
          %2629 = vmatpush1.msra.mxu0 %v2428
          %2630 = vmatprep.subr.mxu0 0.0
          %2631 = vmatpush1.msra.mxu0 %v2429
          %2632 = vmatprep.subr.mxu0 0.0
          %2633 = vmatpush1.msra.mxu0 %v2430
          %2634 = vmatprep.subr.mxu0 0.0
          %2635 = vmatpush1.msra.mxu0 %v2431
          %2636 = vmatprep.subr.mxu0 0.0
          %2637 = vmatpush1.msra.mxu0 %v2432
          %2638 = vmatprep.subr.mxu0 0.0
          %2639 = vmatpush1.msra.mxu0 %v2433
          %2640 = vmatprep.subr.mxu0 0.0
          %2641 = vmatpush1.msra.mxu0 %v2434
          %2642 = vmatprep.subr.mxu0 0.0
          %2643 = vmatpush1.msra.mxu0 %v2435
          %2644 = vmatprep.subr.mxu0 0.0
          %2645 = vmatpush1.msra.mxu0 %v2436
          %2646 = vmatprep.subr.mxu0 0.0
          %2647 = vmatpush1.msra.mxu0 %v2437
          %2648 = vmatprep.subr.mxu0 0.0
          %2649 = vmatpush1.msra.mxu0 0.0
          %2650 = vmatprep.subr.mxu0 0.0
          %2651 = vmatpush1.msra.mxu0 0.0
          %2652 = vmatprep.subr.mxu0 0.0
          %2653 = vmatpush1.msra.mxu0 0.0
          %2654 = vmatprep.subr.mxu0 0.0
          %2655 = vmatpush1.msra.mxu0 0.0
          %2656 = vmatprep.subr.mxu0 0.0
          %2657 = vmatpush1.msra.mxu0 0.0
          %2658 = vmatprep.subr.mxu0 0.0
          %2659 = vmatpush1.msra.mxu0 0.0
          %2660 = vmatprep.subr.mxu0 0.0
          %2661 = vmatpush1.msra.mxu0 0.0
          %2662 = vmatprep.subr.mxu0 0.0
          %2663 = vmatpush1.msra.mxu0 0.0
          %2664 = vmatprep.subr.mxu0 0.0
          %2665 = vmatpush1.msra.mxu0 0.0
          %2666 = vmatprep.subr.mxu0 0.0
          %2667 = vmatpush1.msra.mxu0 0.0
          %2668 = vmatprep.subr.mxu0 0.0
          %2669 = vmatpush1.msra.mxu0 0.0
          %2670 = vmatprep.subr.mxu0 0.0
          %2671 = vmatpush1.msra.mxu0 0.0
          %2672 = vmatprep.subr.mxu0 0.0
          %2673 = vmatpush1.msra.mxu0 0.0
          %2674 = vmatprep.subr.mxu0 0.0
          %2675 = vmatpush1.msra.mxu0 0.0
          %2676 = vmatprep.subr.mxu0 0.0
          %2677 = vmatpush1.msra.mxu0 0.0
          %2678 = vmatprep.subr.mxu0 0.0
          %2679 = vmatpush1.msra.mxu0 0.0
          %2680 = vmatprep.mubr.f32.mxu0 0.0
          %2681 = vmatmul.mubr.f32.gmra.mrb[0].mxu0 %v2406
          %v2682 = vpop.f32.mrb[0].mxu0
          %v2683 = vadd.f32 %v2538, %v2682
          %v2684 = vpop.f32.mrb[0].mxu0
          %2685 = vmatprep.mubr.f32.mxu0 0.0
          %2686 = vmatmul.mubr.f32.gmra.mrb[0].mxu0 %v2407
          %v2687 = vpop.f32.mrb[0].mxu0
          %v2688 = vadd.f32 %v2543, %v2687
          %v2689 = vpop.f32.mrb[0].mxu0
          %2690 = vmatprep.mubr.f32.mxu0 0.0
          %2691 = vmatmul.mubr.f32.gmra.mrb[0].mxu0 %v2408
          %v2692 = vpop.f32.mrb[0].mxu0
          %v2693 = vadd.f32 %v2548, %v2692
          %v2694 = vpop.f32.mrb[0].mxu0
          %2695 = vmatprep.mubr.f32.mxu0 0.0
          %2696 = vmatmul.mubr.f32.gmra.mrb[0].mxu0 %v2409
          %v2697 = vpop.f32.mrb[0].mxu0
          %v2698 = vadd.f32 %v2553, %v2697
          %v2699 = vpop.f32.mrb[0].mxu0
          %2700 = vmatprep.mubr.f32.mxu0 0.0
          %2701 = vmatmul.mubr.f32.gmra.mrb[0].mxu0 %v2410
          %v2702 = vpop.f32.mrb[0].mxu0
          %v2703 = vadd.f32 %v2558, %v2702
          %v2704 = vpop.f32.mrb[0].mxu0
          %2705 = vmatprep.mubr.f32.mxu0 0.0
          %2706 = vmatmul.mubr.f32.gmra.mrb[0].mxu0 %v2411
          %v2707 = vpop.f32.mrb[0].mxu0
          %v2708 = vadd.f32 %v2563, %v2707
          %v2709 = vpop.f32.mrb[0].mxu0
          %2710 = vmatprep.mubr.f32.mxu0 0.0
          %2711 = vmatmul.mubr.f32.gmra.mrb[0].mxu0 %v2412
          %v2712 = vpop.f32.mrb[0].mxu0
          %v2713 = vadd.f32 %v2568, %v2712
          %v2714 = vpop.f32.mrb[0].mxu0
          %2715 = vmatprep.mubr.f32.mxu0 0.0
          %2716 = vmatmul.mubr.f32.gmra.mrb[0].mxu0 %v2413
          %v2717 = vpop.f32.mrb[0].mxu0
          %v2718 = vadd.f32 %v2573, %v2717
          %v2719 = vpop.f32.mrb[0].mxu0
          %2720 = vmatprep.mubr.f32.mxu0 0.0
          %2721 = vmatmul.mubr.f32.gmra.mrb[0].mxu0 %v2414
          %v2722 = vpop.f32.mrb[0].mxu0
          %v2723 = vadd.f32 %v2578, %v2722
          %v2724 = vpop.f32.mrb[0].mxu0
          %2725 = vmatprep.mubr.f32.mxu0 0.0
          %2726 = vmatmul.mubr.f32.gmra.mrb[0].mxu0 %v2415
          %v2727 = vpop.f32.mrb[0].mxu0
          %v2728 = vadd.f32 %v2583, %v2727
          %v2729 = vpop.f32.mrb[0].mxu0
          %2730 = vmatprep.mubr.f32.mxu0 0.0
          %2731 = vmatmul.mubr.f32.gmra.mrb[0].mxu0 %v2416
          %v2732 = vpop.f32.mrb[0].mxu0
          %v2733 = vadd.f32 %v2588, %v2732
          %v2734 = vpop.f32.mrb[0].mxu0
          %2735 = vmatprep.mubr.f32.mxu0 0.0
          %2736 = vmatmul.mubr.f32.gmra.mrb[0].mxu0 %v2417
          %v2737 = vpop.f32.mrb[0].mxu0
          %v2738 = vadd.f32 %v2593, %v2737
          %v2739 = vpop.f32.mrb[0].mxu0
          %2740 = vmatprep.mubr.f32.mxu0 0.0
          %2741 = vmatmul.mubr.f32.gmra.mrb[0].mxu0 %v2418
          %v2742 = vpop.f32.mrb[0].mxu0
          %v2743 = vadd.f32 %v2598, %v2742
          %v2744 = vpop.f32.mrb[0].mxu0
          %2745 = vmatprep.mubr.f32.mxu0 0.0
          %2746 = vmatmul.mubr.f32.gmra.mrb[0].mxu0 %v2419
          %v2747 = vpop.f32.mrb[0].mxu0
          %v2748 = vadd.f32 %v2603, %v2747
          %v2749 = vpop.f32.mrb[0].mxu0
          %2750 = vmatprep.mubr.f32.mxu0 0.0
          %2751 = vmatmul.mubr.f32.gmra.mrb[0].mxu0 %v2420
          %v2752 = vpop.f32.mrb[0].mxu0
          %v2753 = vadd.f32 %v2608, %v2752
          %v2754 = vpop.f32.mrb[0].mxu0
          %2755 = vmatprep.mubr.f32.mxu0 0.0
          %2756 = vmatmul.mubr.f32.gmra.mrb[0].mxu0 %v2421
          %v2757 = vpop.f32.mrb[0].mxu0
          %v2758 = vadd.f32 %v2613, %v2757
          %v2759 = vpop.f32.mrb[0].mxu0
          %2760 = vdwg.mxu0
          %v2761 = vld [vmem:[%s2405 + $0x11] sm:$0xff]
          %v2762 = vld [vmem:[%s2405 + $0x19] sm:$0xff]
          %v2763 = vld [vmem:[%s2405 + $0x41] sm:$0xff]
          %v2764 = vld [vmem:[%s2405 + $0x49] sm:$0xff]
          %v2765 = vld [vmem:[%s2405 + $0x71] sm:$0xff]
          %v2766 = vld [vmem:[%s2405 + $0x79] sm:$0xff]
          %v2767 = vld [vmem:[%s2405 + $0xa1] sm:$0xff]
          %v2768 = vld [vmem:[%s2405 + $0xa9] sm:$0xff]
          %v2769 = vld [vmem:[%s2405 + $0xd1] sm:$0xff]
          %v2770 = vld [vmem:[%s2405 + $0xd9] sm:$0xff]
          %v2771 = vld [vmem:[%s2405 + $0x101] sm:$0xff]
          %v2772 = vld [vmem:[%s2405 + $0x109] sm:$0xff]
          %v2773 = vld [vmem:[%s2405 + $0x131] sm:$0xff]
          %v2774 = vld [vmem:[%s2405 + $0x139] sm:$0xff]
          %v2775 = vld [vmem:[%s2405 + $0x161] sm:$0xff]
          %v2776 = vld [vmem:[%s2405 + $0x169] sm:$0xff]
          %s2777 = scalar_lea.vmem [#allocation9], 256
          %v2778 = vld [vmem:[%s2777] sm:$0xff]
          %v2779 = vld [vmem:[%s2777 + $0x8] sm:$0xff]
          %v2780 = vld [vmem:[%s2777 + $0x10] sm:$0xff]
          %v2781 = vld [vmem:[%s2777 + $0x18] sm:$0xff]
          %v2782 = vld [vmem:[%s2777 + $0x20] sm:$0xff]
          %v2783 = vld [vmem:[%s2777 + $0x28] sm:$0xff]
          %v2784 = vld [vmem:[%s2777 + $0x30] sm:$0xff]
          %v2785 = vld [vmem:[%s2777 + $0x38] sm:$0xff]
          %v2786 = vld [vmem:[%s2777 + $0x40] sm:$0xff]
          %v2787 = vld [vmem:[%s2777 + $0x48] sm:$0xff]
          %v2788 = vld [vmem:[%s2777 + $0x50] sm:$0xff]
          %v2789 = vld [vmem:[%s2777 + $0x58] sm:$0xff]
          %v2790 = vld [vmem:[%s2777 + $0x60] sm:$0xff]
          %v2791 = vld [vmem:[%s2777 + $0x68] sm:$0xff]
          %v2792 = vld [vmem:[%s2777 + $0x70] sm:$0xff]
          %v2793 = vld [vmem:[%s2777 + $0x78] sm:$0xff]
          %2794 = vmatprep.subr.mxu0 0.0
          %2795 = vmatpush1.msra.mxu0 %v2778
          %2796 = vmatprep.subr.mxu0 0.0
          %2797 = vmatpush1.msra.mxu0 %v2779
          %2798 = vmatprep.subr.mxu0 0.0
          %2799 = vmatpush1.msra.mxu0 %v2780
          %2800 = vmatprep.subr.mxu0 0.0
          %2801 = vmatpush1.msra.mxu0 %v2781
          %2802 = vmatprep.subr.mxu0 0.0
          %2803 = vmatpush1.msra.mxu0 %v2782
          %2804 = vmatprep.subr.mxu0 0.0
          %2805 = vmatpush1.msra.mxu0 %v2783
          %2806 = vmatprep.subr.mxu0 0.0
          %2807 = vmatpush1.msra.mxu0 %v2784
          %2808 = vmatprep.subr.mxu0 0.0
          %2809 = vmatpush1.msra.mxu0 %v2785
          %2810 = vmatprep.subr.mxu0 0.0
          %2811 = vmatpush1.msra.mxu0 %v2786
          %2812 = vmatprep.subr.mxu0 0.0
          %2813 = vmatpush1.msra.mxu0 %v2787
          %2814 = vmatprep.subr.mxu0 0.0
          %2815 = vmatpush1.msra.mxu0 %v2788
          %2816 = vmatprep.subr.mxu0 0.0
          %2817 = vmatpush1.msra.mxu0 %v2789
          %2818 = vmatprep.subr.mxu0 0.0
          %2819 = vmatpush1.msra.mxu0 %v2790
          %2820 = vmatprep.subr.mxu0 0.0
          %2821 = vmatpush1.msra.mxu0 %v2791
          %2822 = vmatprep.subr.mxu0 0.0
          %2823 = vmatpush1.msra.mxu0 %v2792
          %2824 = vmatprep.subr.mxu0 0.0
          %2825 = vmatpush1.msra.mxu0 %v2793
          %2826 = vmatprep.subr.mxu0 0.0
          %2827 = vmatpush1.msra.mxu0 0.0
          %2828 = vmatprep.subr.mxu0 0.0
          %2829 = vmatpush1.msra.mxu0 0.0
          %2830 = vmatprep.subr.mxu0 0.0
          %2831 = vmatpush1.msra.mxu0 0.0
          %2832 = vmatprep.subr.mxu0 0.0
          %2833 = vmatpush1.msra.mxu0 0.0
          %2834 = vmatprep.subr.mxu0 0.0
          %2835 = vmatpush1.msra.mxu0 0.0
          %2836 = vmatprep.subr.mxu0 0.0
          %2837 = vmatpush1.msra.mxu0 0.0
          %2838 = vmatprep.subr.mxu0 0.0
          %2839 = vmatpush1.msra.mxu0 0.0
          %2840 = vmatprep.subr.mxu0 0.0
          %2841 = vmatpush1.msra.mxu0 0.0
          %2842 = vmatprep.subr.mxu0 0.0
          %2843 = vmatpush1.msra.mxu0 0.0
          %2844 = vmatprep.subr.mxu0 0.0
          %2845 = vmatpush1.msra.mxu0 0.0
          %2846 = vmatprep.subr.mxu0 0.0
          %2847 = vmatpush1.msra.mxu0 0.0
          %2848 = vmatprep.subr.mxu0 0.0
          %2849 = vmatpush1.msra.mxu0 0.0
          %2850 = vmatprep.subr.mxu0 0.0
          %2851 = vmatpush1.msra.mxu0 0.0
          %2852 = vmatprep.subr.mxu0 0.0
          %2853 = vmatpush1.msra.mxu0 0.0
          %2854 = vmatprep.subr.mxu0 0.0
          %2855 = vmatpush1.msra.mxu0 0.0
          %2856 = vmatprep.subr.mxu0 0.0
          %2857 = vmatpush1.msra.mxu0 0.0
          %2858 = vmatprep.mubr.f32.mxu0 0.0
          %2859 = vmatmul.mubr.f32.gmra.mrb[0].mxu0 %v2761
          %v2860 = vpop.f32.mrb[0].mxu0
          %v2861 = vadd.f32 0.0, %v2860
          %v2862 = vpop.f32.mrb[0].mxu0
          %2863 = vmatprep.mubr.f32.mxu0 0.0
          %2864 = vmatmul.mubr.f32.gmra.mrb[0].mxu0 %v2762
          %v2865 = vpop.f32.mrb[0].mxu0
          %v2866 = vadd.f32 0.0, %v2865
          %v2867 = vpop.f32.mrb[0].mxu0
          %2868 = vmatprep.mubr.f32.mxu0 0.0
          %2869 = vmatmul.mubr.f32.gmra.mrb[0].mxu0 %v2763
          %v2870 = vpop.f32.mrb[0].mxu0
          %v2871 = vadd.f32 0.0, %v2870
          %v2872 = vpop.f32.mrb[0].mxu0
          %2873 = vmatprep.mubr.f32.mxu0 0.0
          %2874 = vmatmul.mubr.f32.gmra.mrb[0].mxu0 %v2764
          %v2875 = vpop.f32.mrb[0].mxu0
          %v2876 = vadd.f32 0.0, %v2875
          %v2877 = vpop.f32.mrb[0].mxu0
          %2878 = vmatprep.mubr.f32.mxu0 0.0
          %2879 = vmatmul.mubr.f32.gmra.mrb[0].mxu0 %v2765
          %v2880 = vpop.f32.mrb[0].mxu0
          %v2881 = vadd.f32 0.0, %v2880
          %v2882 = vpop.f32.mrb[0].mxu0
          %2883 = vmatprep.mubr.f32.mxu0 0.0
          %2884 = vmatmul.mubr.f32.gmra.mrb[0].mxu0 %v2766
          %v2885 = vpop.f32.mrb[0].mxu0
          %v2886 = vadd.f32 0.0, %v2885
          %v2887 = vpop.f32.mrb[0].mxu0
          %2888 = vmatprep.mubr.f32.mxu0 0.0
          %2889 = vmatmul.mubr.f32.gmra.mrb[0].mxu0 %v2767
          %v2890 = vpop.f32.mrb[0].mxu0
          %v2891 = vadd.f32 0.0, %v2890
          %v2892 = vpop.f32.mrb[0].mxu0
          %2893 = vmatprep.mubr.f32.mxu0 0.0
          %2894 = vmatmul.mubr.f32.gmra.mrb[0].mxu0 %v2768
          %v2895 = vpop.f32.mrb[0].mxu0
          %v2896 = vadd.f32 0.0, %v2895
          %v2897 = vpop.f32.mrb[0].mxu0
          %2898 = vmatprep.mubr.f32.mxu0 0.0
          %2899 = vmatmul.mubr.f32.gmra.mrb[0].mxu0 %v2769
          %v2900 = vpop.f32.mrb[0].mxu0
          %v2901 = vadd.f32 0.0, %v2900
          %v2902 = vpop.f32.mrb[0].mxu0
          %2903 = vmatprep.mubr.f32.mxu0 0.0
          %2904 = vmatmul.mubr.f32.gmra.mrb[0].mxu0 %v2770
          %v2905 = vpop.f32.mrb[0].mxu0
          %v2906 = vadd.f32 0.0, %v2905
          %v2907 = vpop.f32.mrb[0].mxu0
          %2908 = vmatprep.mubr.f32.mxu0 0.0
          %2909 = vmatmul.mubr.f32.gmra.mrb[0].mxu0 %v2771
          %v2910 = vpop.f32.mrb[0].mxu0
          %v2911 = vadd.f32 0.0, %v2910
          %v2912 = vpop.f32.mrb[0].mxu0
          %2913 = vmatprep.mubr.f32.mxu0 0.0
          %2914 = vmatmul.mubr.f32.gmra.mrb[0].mxu0 %v2772
          %v2915 = vpop.f32.mrb[0].mxu0
          %v2916 = vadd.f32 0.0, %v2915
          %v2917 = vpop.f32.mrb[0].mxu0
          %2918 = vmatprep.mubr.f32.mxu0 0.0
          %2919 = vmatmul.mubr.f32.gmra.mrb[0].mxu0 %v2773
          %v2920 = vpop.f32.mrb[0].mxu0
          %v2921 = vadd.f32 0.0, %v2920
          %v2922 = vpop.f32.mrb[0].mxu0
          %2923 = vmatprep.mubr.f32.mxu0 0.0
          %2924 = vmatmul.mubr.f32.gmra.mrb[0].mxu0 %v2774
          %v2925 = vpop.f32.mrb[0].mxu0
          %v2926 = vadd.f32 0.0, %v2925
          %v2927 = vpop.f32.mrb[0].mxu0
          %2928 = vmatprep.mubr.f32.mxu0 0.0
          %2929 = vmatmul.mubr.f32.gmra.mrb[0].mxu0 %v2775
          %v2930 = vpop.f32.mrb[0].mxu0
          %v2931 = vadd.f32 0.0, %v2930
          %v2932 = vpop.f32.mrb[0].mxu0
          %2933 = vmatprep.mubr.f32.mxu0 0.0
          %2934 = vmatmul.mubr.f32.gmra.mrb[0].mxu0 %v2776
          %v2935 = vpop.f32.mrb[0].mxu0
          %v2936 = vadd.f32 0.0, %v2935
          %v2937 = vpop.f32.mrb[0].mxu0
          %2938 = vdwg.mxu0
          %v2939 = vadd.f32 %v2683, %v2861
          %v2940 = vadd.f32 %v2688, %v2866
          %v2941 = vadd.f32 %v2693, %v2871
          %v2942 = vadd.f32 %v2698, %v2876
          %v2943 = vadd.f32 %v2703, %v2881
          %v2944 = vadd.f32 %v2708, %v2886
          %v2945 = vadd.f32 %v2713, %v2891
          %v2946 = vadd.f32 %v2718, %v2896
          %v2947 = vadd.f32 %v2723, %v2901
          %v2948 = vadd.f32 %v2728, %v2906
          %v2949 = vadd.f32 %v2733, %v2911
          %v2950 = vadd.f32 %v2738, %v2916
          %v2951 = vadd.f32 %v2743, %v2921
          %v2952 = vadd.f32 %v2748, %v2926
          %v2953 = vadd.f32 %v2753, %v2931
          %v2954 = vadd.f32 %v2758, %v2936
          %s2955 = sadd.s32 %s2403, 1
          %s2956 = smul.u32 %s2955, 48
          %s2957 = scalar_lea.vmem [#allocation3], %s2956
          %v2958 = vld [vmem:[%s2957 + $0xf] sm:$0xff]
          %v2959 = vld [vmem:[%s2957 + $0x17] sm:$0xff]
          %v2960 = vld [vmem:[%s2957 + $0x3f] sm:$0xff]
          %v2961 = vld [vmem:[%s2957 + $0x47] sm:$0xff]
          %v2962 = vld [vmem:[%s2957 + $0x6f] sm:$0xff]
          %v2963 = vld [vmem:[%s2957 + $0x77] sm:$0xff]
          %v2964 = vld [vmem:[%s2957 + $0x9f] sm:$0xff]
          %v2965 = vld [vmem:[%s2957 + $0xa7] sm:$0xff]
          %v2966 = vld [vmem:[%s2957 + $0xcf] sm:$0xff]
          %v2967 = vld [vmem:[%s2957 + $0xd7] sm:$0xff]
          %v2968 = vld [vmem:[%s2957 + $0xff] sm:$0xff]
          %v2969 = vld [vmem:[%s2957 + $0x107] sm:$0xff]
          %v2970 = vld [vmem:[%s2957 + $0x12f] sm:$0xff]
          %v2971 = vld [vmem:[%s2957 + $0x137] sm:$0xff]
          %v2972 = vld [vmem:[%s2957 + $0x15f] sm:$0xff]
          %v2973 = vld [vmem:[%s2957 + $0x167] sm:$0xff]
          %s2974 = scalar_lea.vmem [#allocation9], 384
          %v2975 = vld [vmem:[%s2974] sm:$0xff]
          %v2976 = vld [vmem:[%s2974 + $0x8] sm:$0xff]
          %v2977 = vld [vmem:[%s2974 + $0x10] sm:$0xff]
          %v2978 = vld [vmem:[%s2974 + $0x18] sm:$0xff]
          %v2979 = vld [vmem:[%s2974 + $0x20] sm:$0xff]
          %v2980 = vld [vmem:[%s2974 + $0x28] sm:$0xff]
          %v2981 = vld [vmem:[%s2974 + $0x30] sm:$0xff]
          %v2982 = vld [vmem:[%s2974 + $0x38] sm:$0xff]
          %v2983 = vld [vmem:[%s2974 + $0x40] sm:$0xff]
          %v2984 = vld [vmem:[%s2974 + $0x48] sm:$0xff]
          %v2985 = vld [vmem:[%s2974 + $0x50] sm:$0xff]
          %v2986 = vld [vmem:[%s2974 + $0x58] sm:$0xff]
          %v2987 = vld [vmem:[%s2974 + $0x60] sm:$0xff]
          %v2988 = vld [vmem:[%s2974 + $0x68] sm:$0xff]
          %v2989 = vld [vmem:[%s2974 + $0x70] sm:$0xff]
          %v2990 = vld [vmem:[%s2974 + $0x78] sm:$0xff]
          %2991 = vmatprep.subr.mxu0 0.0
          %2992 = vmatpush1.msra.mxu0 %v2975
          %2993 = vmatprep.subr.mxu0 0.0
          %2994 = vmatpush1.msra.mxu0 %v2976
          %2995 = vmatprep.subr.mxu0 0.0
          %2996 = vmatpush1.msra.mxu0 %v2977
          %2997 = vmatprep.subr.mxu0 0.0
          %2998 = vmatpush1.msra.mxu0 %v2978
          %2999 = vmatprep.subr.mxu0 0.0
          %3000 = vmatpush1.msra.mxu0 %v2979
          %3001 = vmatprep.subr.mxu0 0.0
          %3002 = vmatpush1.msra.mxu0 %v2980
          %3003 = vmatprep.subr.mxu0 0.0
          %3004 = vmatpush1.msra.mxu0 %v2981
          %3005 = vmatprep.subr.mxu0 0.0
          %3006 = vmatpush1.msra.mxu0 %v2982
          %3007 = vmatprep.subr.mxu0 0.0
          %3008 = vmatpush1.msra.mxu0 %v2983
          %3009 = vmatprep.subr.mxu0 0.0
          %3010 = vmatpush1.msra.mxu0 %v2984
          %3011 = vmatprep.subr.mxu0 0.0
          %3012 = vmatpush1.msra.mxu0 %v2985
          %3013 = vmatprep.subr.mxu0 0.0
          %3014 = vmatpush1.msra.mxu0 %v2986
          %3015 = vmatprep.subr.mxu0 0.0
          %3016 = vmatpush1.msra.mxu0 %v2987
          %3017 = vmatprep.subr.mxu0 0.0
          %3018 = vmatpush1.msra.mxu0 %v2988
          %3019 = vmatprep.subr.mxu0 0.0
          %3020 = vmatpush1.msra.mxu0 %v2989
          %3021 = vmatprep.subr.mxu0 0.0
          %3022 = vmatpush1.msra.mxu0 %v2990
          %3023 = vmatprep.subr.mxu0 0.0
          %3024 = vmatpush1.msra.mxu0 0.0
          %3025 = vmatprep.subr.mxu0 0.0
          %3026 = vmatpush1.msra.mxu0 0.0
          %3027 = vmatprep.subr.mxu0 0.0
          %3028 = vmatpush1.msra.mxu0 0.0
          %3029 = vmatprep.subr.mxu0 0.0
          %3030 = vmatpush1.msra.mxu0 0.0
          %3031 = vmatprep.subr.mxu0 0.0
          %3032 = vmatpush1.msra.mxu0 0.0
          %3033 = vmatprep.subr.mxu0 0.0
          %3034 = vmatpush1.msra.mxu0 0.0
          %3035 = vmatprep.subr.mxu0 0.0
          %3036 = vmatpush1.msra.mxu0 0.0
          %3037 = vmatprep.subr.mxu0 0.0
          %3038 = vmatpush1.msra.mxu0 0.0
          %3039 = vmatprep.subr.mxu0 0.0
          %3040 = vmatpush1.msra.mxu0 0.0
          %3041 = vmatprep.subr.mxu0 0.0
          %3042 = vmatpush1.msra.mxu0 0.0
          %3043 = vmatprep.subr.mxu0 0.0
          %3044 = vmatpush1.msra.mxu0 0.0
          %3045 = vmatprep.subr.mxu0 0.0
          %3046 = vmatpush1.msra.mxu0 0.0
          %3047 = vmatprep.subr.mxu0 0.0
          %3048 = vmatpush1.msra.mxu0 0.0
          %3049 = vmatprep.subr.mxu0 0.0
          %3050 = vmatpush1.msra.mxu0 0.0
          %3051 = vmatprep.subr.mxu0 0.0
          %3052 = vmatpush1.msra.mxu0 0.0
          %3053 = vmatprep.subr.mxu0 0.0
          %3054 = vmatpush1.msra.mxu0 0.0
          %3055 = vmatprep.mubr.f32.mxu0 0.0
          %3056 = vmatmul.mubr.f32.gmra.mrb[0].mxu0 %v2958
          %v3057 = vpop.f32.mrb[0].mxu0
          %v3058 = vadd.f32 0.0, %v3057
          %v3059 = vpop.f32.mrb[0].mxu0
          %3060 = vmatprep.mubr.f32.mxu0 0.0
          %3061 = vmatmul.mubr.f32.gmra.mrb[0].mxu0 %v2959
          %v3062 = vpop.f32.mrb[0].mxu0
          %v3063 = vadd.f32 0.0, %v3062
          %v3064 = vpop.f32.mrb[0].mxu0
          %3065 = vmatprep.mubr.f32.mxu0 0.0
          %3066 = vmatmul.mubr.f32.gmra.mrb[0].mxu0 %v2960
          %v3067 = vpop.f32.mrb[0].mxu0
          %v3068 = vadd.f32 0.0, %v3067
          %v3069 = vpop.f32.mrb[0].mxu0
          %3070 = vmatprep.mubr.f32.mxu0 0.0
          %3071 = vmatmul.mubr.f32.gmra.mrb[0].mxu0 %v2961
          %v3072 = vpop.f32.mrb[0].mxu0
          %v3073 = vadd.f32 0.0, %v3072
          %v3074 = vpop.f32.mrb[0].mxu0
          %3075 = vmatprep.mubr.f32.mxu0 0.0
          %3076 = vmatmul.mubr.f32.gmra.mrb[0].mxu0 %v2962
          %v3077 = vpop.f32.mrb[0].mxu0
          %v3078 = vadd.f32 0.0, %v3077
          %v3079 = vpop.f32.mrb[0].mxu0
          %3080 = vmatprep.mubr.f32.mxu0 0.0
          %3081 = vmatmul.mubr.f32.gmra.mrb[0].mxu0 %v2963
          %v3082 = vpop.f32.mrb[0].mxu0
          %v3083 = vadd.f32 0.0, %v3082
          %v3084 = vpop.f32.mrb[0].mxu0
          %3085 = vmatprep.mubr.f32.mxu0 0.0
          %3086 = vmatmul.mubr.f32.gmra.mrb[0].mxu0 %v2964
          %v3087 = vpop.f32.mrb[0].mxu0
          %v3088 = vadd.f32 0.0, %v3087
          %v3089 = vpop.f32.mrb[0].mxu0
          %3090 = vmatprep.mubr.f32.mxu0 0.0
          %3091 = vmatmul.mubr.f32.gmra.mrb[0].mxu0 %v2965
          %v3092 = vpop.f32.mrb[0].mxu0
          %v3093 = vadd.f32 0.0, %v3092
          %v3094 = vpop.f32.mrb[0].mxu0
          %3095 = vmatprep.mubr.f32.mxu0 0.0
          %3096 = vmatmul.mubr.f32.gmra.mrb[0].mxu0 %v2966
          %v3097 = vpop.f32.mrb[0].mxu0
          %v3098 = vadd.f32 0.0, %v3097
          %v3099 = vpop.f32.mrb[0].mxu0
          %3100 = vmatprep.mubr.f32.mxu0 0.0
          %3101 = vmatmul.mubr.f32.gmra.mrb[0].mxu0 %v2967
          %v3102 = vpop.f32.mrb[0].mxu0
          %v3103 = vadd.f32 0.0, %v3102
          %v3104 = vpop.f32.mrb[0].mxu0
          %3105 = vmatprep.mubr.f32.mxu0 0.0
          %3106 = vmatmul.mubr.f32.gmra.mrb[0].mxu0 %v2968
          %v3107 = vpop.f32.mrb[0].mxu0
          %v3108 = vadd.f32 0.0, %v3107
          %v3109 = vpop.f32.mrb[0].mxu0
          %3110 = vmatprep.mubr.f32.mxu0 0.0
          %3111 = vmatmul.mubr.f32.gmra.mrb[0].mxu0 %v2969
          %v3112 = vpop.f32.mrb[0].mxu0
          %v3113 = vadd.f32 0.0, %v3112
          %v3114 = vpop.f32.mrb[0].mxu0
          %3115 = vmatprep.mubr.f32.mxu0 0.0
          %3116 = vmatmul.mubr.f32.gmra.mrb[0].mxu0 %v2970
          %v3117 = vpop.f32.mrb[0].mxu0
          %v3118 = vadd.f32 0.0, %v3117
          %v3119 = vpop.f32.mrb[0].mxu0
          %3120 = vmatprep.mubr.f32.mxu0 0.0
          %3121 = vmatmul.mubr.f32.gmra.mrb[0].mxu0 %v2971
          %v3122 = vpop.f32.mrb[0].mxu0
          %v3123 = vadd.f32 0.0, %v3122
          %v3124 = vpop.f32.mrb[0].mxu0
          %3125 = vmatprep.mubr.f32.mxu0 0.0
          %3126 = vmatmul.mubr.f32.gmra.mrb[0].mxu0 %v2972
          %v3127 = vpop.f32.mrb[0].mxu0
          %v3128 = vadd.f32 0.0, %v3127
          %v3129 = vpop.f32.mrb[0].mxu0
          %3130 = vmatprep.mubr.f32.mxu0 0.0
          %3131 = vmatmul.mubr.f32.gmra.mrb[0].mxu0 %v2973
          %v3132 = vpop.f32.mrb[0].mxu0
          %v3133 = vadd.f32 0.0, %v3132
          %v3134 = vpop.f32.mrb[0].mxu0
          %3135 = vdwg.mxu0
          %v3136 = vadd.f32 %v2939, %v3058
          %v3137 = vadd.f32 %v2940, %v3063
          %v3138 = vadd.f32 %v2941, %v3068
          %v3139 = vadd.f32 %v2942, %v3073
          %v3140 = vadd.f32 %v2943, %v3078
          %v3141 = vadd.f32 %v2944, %v3083
          %v3142 = vadd.f32 %v2945, %v3088
          %v3143 = vadd.f32 %v2946, %v3093
          %v3144 = vadd.f32 %v2947, %v3098
          %v3145 = vadd.f32 %v2948, %v3103
          %v3146 = vadd.f32 %v2949, %v3108
          %v3147 = vadd.f32 %v2950, %v3113
          %v3148 = vadd.f32 %v2951, %v3118
          %v3149 = vadd.f32 %v2952, %v3123
          %v3150 = vadd.f32 %v2953, %v3128
          %v3151 = vadd.f32 %v2954, %v3133
          %v3152 = vld [vmem:[%s2957 + $0x10] sm:$0xff]
          %v3153 = vld [vmem:[%s2957 + $0x18] sm:$0xff]
          %v3154 = vld [vmem:[%s2957 + $0x40] sm:$0xff]
          %v3155 = vld [vmem:[%s2957 + $0x48] sm:$0xff]
          %v3156 = vld [vmem:[%s2957 + $0x70] sm:$0xff]
          %v3157 = vld [vmem:[%s2957 + $0x78] sm:$0xff]
          %v3158 = vld [vmem:[%s2957 + $0xa0] sm:$0xff]
          %v3159 = vld [vmem:[%s2957 + $0xa8] sm:$0xff]
          %v3160 = vld [vmem:[%s2957 + $0xd0] sm:$0xff]
          %v3161 = vld [vmem:[%s2957 + $0xd8] sm:$0xff]
          %v3162 = vld [vmem:[%s2957 + $0x100] sm:$0xff]
          %v3163 = vld [vmem:[%s2957 + $0x108] sm:$0xff]
          %v3164 = vld [vmem:[%s2957 + $0x130] sm:$0xff]
          %v3165 = vld [vmem:[%s2957 + $0x138] sm:$0xff]
          %v3166 = vld [vmem:[%s2957 + $0x160] sm:$0xff]
          %v3167 = vld [vmem:[%s2957 + $0x168] sm:$0xff]
          %s3168 = scalar_lea.vmem [#allocation9], 512
          %v3169 = vld [vmem:[%s3168] sm:$0xff]
          %v3170 = vld [vmem:[%s3168 + $0x8] sm:$0xff]
          %v3171 = vld [vmem:[%s3168 + $0x10] sm:$0xff]
          %v3172 = vld [vmem:[%s3168 + $0x18] sm:$0xff]
          %v3173 = vld [vmem:[%s3168 + $0x20] sm:$0xff]
          %v3174 = vld [vmem:[%s3168 + $0x28] sm:$0xff]
          %v3175 = vld [vmem:[%s3168 + $0x30] sm:$0xff]
          %v3176 = vld [vmem:[%s3168 + $0x38] sm:$0xff]
          %v3177 = vld [vmem:[%s3168 + $0x40] sm:$0xff]
          %v3178 = vld [vmem:[%s3168 + $0x48] sm:$0xff]
          %v3179 = vld [vmem:[%s3168 + $0x50] sm:$0xff]
          %v3180 = vld [vmem:[%s3168 + $0x58] sm:$0xff]
          %v3181 = vld [vmem:[%s3168 + $0x60] sm:$0xff]
          %v3182 = vld [vmem:[%s3168 + $0x68] sm:$0xff]
          %v3183 = vld [vmem:[%s3168 + $0x70] sm:$0xff]
          %v3184 = vld [vmem:[%s3168 + $0x78] sm:$0xff]
          %3185 = vmatprep.subr.mxu0 0.0
          %3186 = vmatpush1.msra.mxu0 %v3169
          %3187 = vmatprep.subr.mxu0 0.0
          %3188 = vmatpush1.msra.mxu0 %v3170
          %3189 = vmatprep.subr.mxu0 0.0
          %3190 = vmatpush1.msra.mxu0 %v3171
          %3191 = vmatprep.subr.mxu0 0.0
          %3192 = vmatpush1.msra.mxu0 %v3172
          %3193 = vmatprep.subr.mxu0 0.0
          %3194 = vmatpush1.msra.mxu0 %v3173
          %3195 = vmatprep.subr.mxu0 0.0
          %3196 = vmatpush1.msra.mxu0 %v3174
          %3197 = vmatprep.subr.mxu0 0.0
          %3198 = vmatpush1.msra.mxu0 %v3175
          %3199 = vmatprep.subr.mxu0 0.0
          %3200 = vmatpush1.msra.mxu0 %v3176
          %3201 = vmatprep.subr.mxu0 0.0
          %3202 = vmatpush1.msra.mxu0 %v3177
          %3203 = vmatprep.subr.mxu0 0.0
          %3204 = vmatpush1.msra.mxu0 %v3178
          %3205 = vmatprep.subr.mxu0 0.0
          %3206 = vmatpush1.msra.mxu0 %v3179
          %3207 = vmatprep.subr.mxu0 0.0
          %3208 = vmatpush1.msra.mxu0 %v3180
          %3209 = vmatprep.subr.mxu0 0.0
          %3210 = vmatpush1.msra.mxu0 %v3181
          %3211 = vmatprep.subr.mxu0 0.0
          %3212 = vmatpush1.msra.mxu0 %v3182
          %3213 = vmatprep.subr.mxu0 0.0
          %3214 = vmatpush1.msra.mxu0 %v3183
          %3215 = vmatprep.subr.mxu0 0.0
          %3216 = vmatpush1.msra.mxu0 %v3184
          %3217 = vmatprep.subr.mxu0 0.0
          %3218 = vmatpush1.msra.mxu0 0.0
          %3219 = vmatprep.subr.mxu0 0.0
          %3220 = vmatpush1.msra.mxu0 0.0
          %3221 = vmatprep.subr.mxu0 0.0
          %3222 = vmatpush1.msra.mxu0 0.0
          %3223 = vmatprep.subr.mxu0 0.0
          %3224 = vmatpush1.msra.mxu0 0.0
          %3225 = vmatprep.subr.mxu0 0.0
          %3226 = vmatpush1.msra.mxu0 0.0
          %3227 = vmatprep.subr.mxu0 0.0
          %3228 = vmatpush1.msra.mxu0 0.0
          %3229 = vmatprep.subr.mxu0 0.0
          %3230 = vmatpush1.msra.mxu0 0.0
          %3231 = vmatprep.subr.mxu0 0.0
          %3232 = vmatpush1.msra.mxu0 0.0
          %3233 = vmatprep.subr.mxu0 0.0
          %3234 = vmatpush1.msra.mxu0 0.0
          %3235 = vmatprep.subr.mxu0 0.0
          %3236 = vmatpush1.msra.mxu0 0.0
          %3237 = vmatprep.subr.mxu0 0.0
          %3238 = vmatpush1.msra.mxu0 0.0
          %3239 = vmatprep.subr.mxu0 0.0
          %3240 = vmatpush1.msra.mxu0 0.0
          %3241 = vmatprep.subr.mxu0 0.0
          %3242 = vmatpush1.msra.mxu0 0.0
          %3243 = vmatprep.subr.mxu0 0.0
          %3244 = vmatpush1.msra.mxu0 0.0
          %3245 = vmatprep.subr.mxu0 0.0
          %3246 = vmatpush1.msra.mxu0 0.0
          %3247 = vmatprep.subr.mxu0 0.0
          %3248 = vmatpush1.msra.mxu0 0.0
          %3249 = vmatprep.mubr.f32.mxu0 0.0
          %3250 = vmatmul.mubr.f32.gmra.mrb[0].mxu0 %v3152
          %v3251 = vpop.f32.mrb[0].mxu0
          %v3252 = vadd.f32 0.0, %v3251
          %v3253 = vpop.f32.mrb[0].mxu0
          %3254 = vmatprep.mubr.f32.mxu0 0.0
          %3255 = vmatmul.mubr.f32.gmra.mrb[0].mxu0 %v3153
          %v3256 = vpop.f32.mrb[0].mxu0
          %v3257 = vadd.f32 0.0, %v3256
          %v3258 = vpop.f32.mrb[0].mxu0
          %3259 = vmatprep.mubr.f32.mxu0 0.0
          %3260 = vmatmul.mubr.f32.gmra.mrb[0].mxu0 %v3154
          %v3261 = vpop.f32.mrb[0].mxu0
          %v3262 = vadd.f32 0.0, %v3261
          %v3263 = vpop.f32.mrb[0].mxu0
          %3264 = vmatprep.mubr.f32.mxu0 0.0
          %3265 = vmatmul.mubr.f32.gmra.mrb[0].mxu0 %v3155
          %v3266 = vpop.f32.mrb[0].mxu0
          %v3267 = vadd.f32 0.0, %v3266
          %v3268 = vpop.f32.mrb[0].mxu0
          %3269 = vmatprep.mubr.f32.mxu0 0.0
          %3270 = vmatmul.mubr.f32.gmra.mrb[0].mxu0 %v3156
          %v3271 = vpop.f32.mrb[0].mxu0
          %v3272 = vadd.f32 0.0, %v3271
          %v3273 = vpop.f32.mrb[0].mxu0
          %3274 = vmatprep.mubr.f32.mxu0 0.0
          %3275 = vmatmul.mubr.f32.gmra.mrb[0].mxu0 %v3157
          %v3276 = vpop.f32.mrb[0].mxu0
          %v3277 = vadd.f32 0.0, %v3276
          %v3278 = vpop.f32.mrb[0].mxu0
          %3279 = vmatprep.mubr.f32.mxu0 0.0
          %3280 = vmatmul.mubr.f32.gmra.mrb[0].mxu0 %v3158
          %v3281 = vpop.f32.mrb[0].mxu0
          %v3282 = vadd.f32 0.0, %v3281
          %v3283 = vpop.f32.mrb[0].mxu0
          %3284 = vmatprep.mubr.f32.mxu0 0.0
          %3285 = vmatmul.mubr.f32.gmra.mrb[0].mxu0 %v3159
          %v3286 = vpop.f32.mrb[0].mxu0
          %v3287 = vadd.f32 0.0, %v3286
          %v3288 = vpop.f32.mrb[0].mxu0
          %3289 = vmatprep.mubr.f32.mxu0 0.0
          %3290 = vmatmul.mubr.f32.gmra.mrb[0].mxu0 %v3160
          %v3291 = vpop.f32.mrb[0].mxu0
          %v3292 = vadd.f32 0.0, %v3291
          %v3293 = vpop.f32.mrb[0].mxu0
          %3294 = vmatprep.mubr.f32.mxu0 0.0
          %3295 = vmatmul.mubr.f32.gmra.mrb[0].mxu0 %v3161
          %v3296 = vpop.f32.mrb[0].mxu0
          %v3297 = vadd.f32 0.0, %v3296
          %v3298 = vpop.f32.mrb[0].mxu0
          %3299 = vmatprep.mubr.f32.mxu0 0.0
          %3300 = vmatmul.mubr.f32.gmra.mrb[0].mxu0 %v3162
          %v3301 = vpop.f32.mrb[0].mxu0
          %v3302 = vadd.f32 0.0, %v3301
          %v3303 = vpop.f32.mrb[0].mxu0
          %3304 = vmatprep.mubr.f32.mxu0 0.0
          %3305 = vmatmul.mubr.f32.gmra.mrb[0].mxu0 %v3163
          %v3306 = vpop.f32.mrb[0].mxu0
          %v3307 = vadd.f32 0.0, %v3306
          %v3308 = vpop.f32.mrb[0].mxu0
          %3309 = vmatprep.mubr.f32.mxu0 0.0
          %3310 = vmatmul.mubr.f32.gmra.mrb[0].mxu0 %v3164
          %v3311 = vpop.f32.mrb[0].mxu0
          %v3312 = vadd.f32 0.0, %v3311
          %v3313 = vpop.f32.mrb[0].mxu0
          %3314 = vmatprep.mubr.f32.mxu0 0.0
          %3315 = vmatmul.mubr.f32.gmra.mrb[0].mxu0 %v3165
          %v3316 = vpop.f32.mrb[0].mxu0
          %v3317 = vadd.f32 0.0, %v3316
          %v3318 = vpop.f32.mrb[0].mxu0
          %3319 = vmatprep.mubr.f32.mxu0 0.0
          %3320 = vmatmul.mubr.f32.gmra.mrb[0].mxu0 %v3166
          %v3321 = vpop.f32.mrb[0].mxu0
          %v3322 = vadd.f32 0.0, %v3321
          %v3323 = vpop.f32.mrb[0].mxu0
          %3324 = vmatprep.mubr.f32.mxu0 0.0
          %3325 = vmatmul.mubr.f32.gmra.mrb[0].mxu0 %v3167
          %v3326 = vpop.f32.mrb[0].mxu0
          %v3327 = vadd.f32 0.0, %v3326
          %v3328 = vpop.f32.mrb[0].mxu0
          %3329 = vdwg.mxu0
          %v3330 = vadd.f32 %v3136, %v3252
          %v3331 = vadd.f32 %v3137, %v3257
          %v3332 = vadd.f32 %v3138, %v3262
          %v3333 = vadd.f32 %v3139, %v3267
          %v3334 = vadd.f32 %v3140, %v3272
          %v3335 = vadd.f32 %v3141, %v3277
          %v3336 = vadd.f32 %v3142, %v3282
          %v3337 = vadd.f32 %v3143, %v3287
          %v3338 = vadd.f32 %v3144, %v3292
          %v3339 = vadd.f32 %v3145, %v3297
          %v3340 = vadd.f32 %v3146, %v3302
          %v3341 = vadd.f32 %v3147, %v3307
          %v3342 = vadd.f32 %v3148, %v3312
          %v3343 = vadd.f32 %v3149, %v3317
          %v3344 = vadd.f32 %v3150, %v3322
          %v3345 = vadd.f32 %v3151, %v3327
          %v3346 = vld [vmem:[%s2957 + $0x11] sm:$0xff]
          %v3347 = vld [vmem:[%s2957 + $0x19] sm:$0xff]
          %v3348 = vld [vmem:[%s2957 + $0x41] sm:$0xff]
          %v3349 = vld [vmem:[%s2957 + $0x49] sm:$0xff]
          %v3350 = vld [vmem:[%s2957 + $0x71] sm:$0xff]
          %v3351 = vld [vmem:[%s2957 + $0x79] sm:$0xff]
          %v3352 = vld [vmem:[%s2957 + $0xa1] sm:$0xff]
          %v3353 = vld [vmem:[%s2957 + $0xa9] sm:$0xff]
          %v3354 = vld [vmem:[%s2957 + $0xd1] sm:$0xff]
          %v3355 = vld [vmem:[%s2957 + $0xd9] sm:$0xff]
          %v3356 = vld [vmem:[%s2957 + $0x101] sm:$0xff]
          %v3357 = vld [vmem:[%s2957 + $0x109] sm:$0xff]
          %v3358 = vld [vmem:[%s2957 + $0x131] sm:$0xff]
          %v3359 = vld [vmem:[%s2957 + $0x139] sm:$0xff]
          %v3360 = vld [vmem:[%s2957 + $0x161] sm:$0xff]
          %v3361 = vld [vmem:[%s2957 + $0x169] sm:$0xff]
          %s3362 = scalar_lea.vmem [#allocation9], 640
          %v3363 = vld [vmem:[%s3362] sm:$0xff]
          %v3364 = vld [vmem:[%s3362 + $0x8] sm:$0xff]
          %v3365 = vld [vmem:[%s3362 + $0x10] sm:$0xff]
          %v3366 = vld [vmem:[%s3362 + $0x18] sm:$0xff]
          %v3367 = vld [vmem:[%s3362 + $0x20] sm:$0xff]
          %v3368 = vld [vmem:[%s3362 + $0x28] sm:$0xff]
          %v3369 = vld [vmem:[%s3362 + $0x30] sm:$0xff]
          %v3370 = vld [vmem:[%s3362 + $0x38] sm:$0xff]
          %v3371 = vld [vmem:[%s3362 + $0x40] sm:$0xff]
          %v3372 = vld [vmem:[%s3362 + $0x48] sm:$0xff]
          %v3373 = vld [vmem:[%s3362 + $0x50] sm:$0xff]
          %v3374 = vld [vmem:[%s3362 + $0x58] sm:$0xff]
          %v3375 = vld [vmem:[%s3362 + $0x60] sm:$0xff]
          %v3376 = vld [vmem:[%s3362 + $0x68] sm:$0xff]
          %v3377 = vld [vmem:[%s3362 + $0x70] sm:$0xff]
          %v3378 = vld [vmem:[%s3362 + $0x78] sm:$0xff]
          %3379 = vmatprep.subr.mxu0 0.0
          %3380 = vmatpush1.msra.mxu0 %v3363
          %3381 = vmatprep.subr.mxu0 0.0
          %3382 = vmatpush1.msra.mxu0 %v3364
          %3383 = vmatprep.subr.mxu0 0.0
          %3384 = vmatpush1.msra.mxu0 %v3365
          %3385 = vmatprep.subr.mxu0 0.0
          %3386 = vmatpush1.msra.mxu0 %v3366
          %3387 = vmatprep.subr.mxu0 0.0
          %3388 = vmatpush1.msra.mxu0 %v3367
          %3389 = vmatprep.subr.mxu0 0.0
          %3390 = vmatpush1.msra.mxu0 %v3368
          %3391 = vmatprep.subr.mxu0 0.0
          %3392 = vmatpush1.msra.mxu0 %v3369
          %3393 = vmatprep.subr.mxu0 0.0
          %3394 = vmatpush1.msra.mxu0 %v3370
          %3395 = vmatprep.subr.mxu0 0.0
          %3396 = vmatpush1.msra.mxu0 %v3371
          %3397 = vmatprep.subr.mxu0 0.0
          %3398 = vmatpush1.msra.mxu0 %v3372
          %3399 = vmatprep.subr.mxu0 0.0
          %3400 = vmatpush1.msra.mxu0 %v3373
          %3401 = vmatprep.subr.mxu0 0.0
          %3402 = vmatpush1.msra.mxu0 %v3374
          %3403 = vmatprep.subr.mxu0 0.0
          %3404 = vmatpush1.msra.mxu0 %v3375
          %3405 = vmatprep.subr.mxu0 0.0
          %3406 = vmatpush1.msra.mxu0 %v3376
          %3407 = vmatprep.subr.mxu0 0.0
          %3408 = vmatpush1.msra.mxu0 %v3377
          %3409 = vmatprep.subr.mxu0 0.0
          %3410 = vmatpush1.msra.mxu0 %v3378
          %3411 = vmatprep.subr.mxu0 0.0
          %3412 = vmatpush1.msra.mxu0 0.0
          %3413 = vmatprep.subr.mxu0 0.0
          %3414 = vmatpush1.msra.mxu0 0.0
          %3415 = vmatprep.subr.mxu0 0.0
          %3416 = vmatpush1.msra.mxu0 0.0
          %3417 = vmatprep.subr.mxu0 0.0
          %3418 = vmatpush1.msra.mxu0 0.0
          %3419 = vmatprep.subr.mxu0 0.0
          %3420 = vmatpush1.msra.mxu0 0.0
          %3421 = vmatprep.subr.mxu0 0.0
          %3422 = vmatpush1.msra.mxu0 0.0
          %3423 = vmatprep.subr.mxu0 0.0
          %3424 = vmatpush1.msra.mxu0 0.0
          %3425 = vmatprep.subr.mxu0 0.0
          %3426 = vmatpush1.msra.mxu0 0.0
          %3427 = vmatprep.subr.mxu0 0.0
          %3428 = vmatpush1.msra.mxu0 0.0
          %3429 = vmatprep.subr.mxu0 0.0
          %3430 = vmatpush1.msra.mxu0 0.0
          %3431 = vmatprep.subr.mxu0 0.0
          %3432 = vmatpush1.msra.mxu0 0.0
          %3433 = vmatprep.subr.mxu0 0.0
          %3434 = vmatpush1.msra.mxu0 0.0
          %3435 = vmatprep.subr.mxu0 0.0
          %3436 = vmatpush1.msra.mxu0 0.0
          %3437 = vmatprep.subr.mxu0 0.0
          %3438 = vmatpush1.msra.mxu0 0.0
          %3439 = vmatprep.subr.mxu0 0.0
          %3440 = vmatpush1.msra.mxu0 0.0
          %3441 = vmatprep.subr.mxu0 0.0
          %3442 = vmatpush1.msra.mxu0 0.0
          %3443 = vmatprep.mubr.f32.mxu0 0.0
          %3444 = vmatmul.mubr.f32.gmra.mrb[0].mxu0 %v3346
          %v3445 = vpop.f32.mrb[0].mxu0
          %v3446 = vadd.f32 0.0, %v3445
          %v3447 = vpop.f32.mrb[0].mxu0
          %3448 = vmatprep.mubr.f32.mxu0 0.0
          %3449 = vmatmul.mubr.f32.gmra.mrb[0].mxu0 %v3347
          %v3450 = vpop.f32.mrb[0].mxu0
          %v3451 = vadd.f32 0.0, %v3450
          %v3452 = vpop.f32.mrb[0].mxu0
          %3453 = vmatprep.mubr.f32.mxu0 0.0
          %3454 = vmatmul.mubr.f32.gmra.mrb[0].mxu0 %v3348
          %v3455 = vpop.f32.mrb[0].mxu0
          %v3456 = vadd.f32 0.0, %v3455
          %v3457 = vpop.f32.mrb[0].mxu0
          %3458 = vmatprep.mubr.f32.mxu0 0.0
          %3459 = vmatmul.mubr.f32.gmra.mrb[0].mxu0 %v3349
          %v3460 = vpop.f32.mrb[0].mxu0
          %v3461 = vadd.f32 0.0, %v3460
          %v3462 = vpop.f32.mrb[0].mxu0
          %3463 = vmatprep.mubr.f32.mxu0 0.0
          %3464 = vmatmul.mubr.f32.gmra.mrb[0].mxu0 %v3350
          %v3465 = vpop.f32.mrb[0].mxu0
          %v3466 = vadd.f32 0.0, %v3465
          %v3467 = vpop.f32.mrb[0].mxu0
          %3468 = vmatprep.mubr.f32.mxu0 0.0
          %3469 = vmatmul.mubr.f32.gmra.mrb[0].mxu0 %v3351
          %v3470 = vpop.f32.mrb[0].mxu0
          %v3471 = vadd.f32 0.0, %v3470
          %v3472 = vpop.f32.mrb[0].mxu0
          %3473 = vmatprep.mubr.f32.mxu0 0.0
          %3474 = vmatmul.mubr.f32.gmra.mrb[0].mxu0 %v3352
          %v3475 = vpop.f32.mrb[0].mxu0
          %v3476 = vadd.f32 0.0, %v3475
          %v3477 = vpop.f32.mrb[0].mxu0
          %3478 = vmatprep.mubr.f32.mxu0 0.0
          %3479 = vmatmul.mubr.f32.gmra.mrb[0].mxu0 %v3353
          %v3480 = vpop.f32.mrb[0].mxu0
          %v3481 = vadd.f32 0.0, %v3480
          %v3482 = vpop.f32.mrb[0].mxu0
          %3483 = vmatprep.mubr.f32.mxu0 0.0
          %3484 = vmatmul.mubr.f32.gmra.mrb[0].mxu0 %v3354
          %v3485 = vpop.f32.mrb[0].mxu0
          %v3486 = vadd.f32 0.0, %v3485
          %v3487 = vpop.f32.mrb[0].mxu0
          %3488 = vmatprep.mubr.f32.mxu0 0.0
          %3489 = vmatmul.mubr.f32.gmra.mrb[0].mxu0 %v3355
          %v3490 = vpop.f32.mrb[0].mxu0
          %v3491 = vadd.f32 0.0, %v3490
          %v3492 = vpop.f32.mrb[0].mxu0
          %3493 = vmatprep.mubr.f32.mxu0 0.0
          %3494 = vmatmul.mubr.f32.gmra.mrb[0].mxu0 %v3356
          %v3495 = vpop.f32.mrb[0].mxu0
          %v3496 = vadd.f32 0.0, %v3495
          %v3497 = vpop.f32.mrb[0].mxu0
          %3498 = vmatprep.mubr.f32.mxu0 0.0
          %3499 = vmatmul.mubr.f32.gmra.mrb[0].mxu0 %v3357
          %v3500 = vpop.f32.mrb[0].mxu0
          %v3501 = vadd.f32 0.0, %v3500
          %v3502 = vpop.f32.mrb[0].mxu0
          %3503 = vmatprep.mubr.f32.mxu0 0.0
          %3504 = vmatmul.mubr.f32.gmra.mrb[0].mxu0 %v3358
          %v3505 = vpop.f32.mrb[0].mxu0
          %v3506 = vadd.f32 0.0, %v3505
          %v3507 = vpop.f32.mrb[0].mxu0
          %3508 = vmatprep.mubr.f32.mxu0 0.0
          %3509 = vmatmul.mubr.f32.gmra.mrb[0].mxu0 %v3359
          %v3510 = vpop.f32.mrb[0].mxu0
          %v3511 = vadd.f32 0.0, %v3510
          %v3512 = vpop.f32.mrb[0].mxu0
          %3513 = vmatprep.mubr.f32.mxu0 0.0
          %3514 = vmatmul.mubr.f32.gmra.mrb[0].mxu0 %v3360
          %v3515 = vpop.f32.mrb[0].mxu0
          %v3516 = vadd.f32 0.0, %v3515
          %v3517 = vpop.f32.mrb[0].mxu0
          %3518 = vmatprep.mubr.f32.mxu0 0.0
          %3519 = vmatmul.mubr.f32.gmra.mrb[0].mxu0 %v3361
          %v3520 = vpop.f32.mrb[0].mxu0
          %v3521 = vadd.f32 0.0, %v3520
          %v3522 = vpop.f32.mrb[0].mxu0
          %3523 = vdwg.mxu0
          %v3524 = vadd.f32 %v3330, %v3446
          %v3525 = vadd.f32 %v3331, %v3451
          %v3526 = vadd.f32 %v3332, %v3456
          %v3527 = vadd.f32 %v3333, %v3461
          %v3528 = vadd.f32 %v3334, %v3466
          %v3529 = vadd.f32 %v3335, %v3471
          %v3530 = vadd.f32 %v3336, %v3476
          %v3531 = vadd.f32 %v3337, %v3481
          %v3532 = vadd.f32 %v3338, %v3486
          %v3533 = vadd.f32 %v3339, %v3491
          %v3534 = vadd.f32 %v3340, %v3496
          %v3535 = vadd.f32 %v3341, %v3501
          %v3536 = vadd.f32 %v3342, %v3506
          %v3537 = vadd.f32 %v3343, %v3511
          %v3538 = vadd.f32 %v3344, %v3516
          %v3539 = vadd.f32 %v3345, %v3521
          %s3540 = sadd.s32 %s2403, 2
          %s3541 = smul.u32 %s3540, 48
          %s3542 = scalar_lea.vmem [#allocation3], %s3541
          %v3543 = vld [vmem:[%s3542 + $0xf] sm:$0xff]
          %v3544 = vld [vmem:[%s3542 + $0x17] sm:$0xff]
          %v3545 = vld [vmem:[%s3542 + $0x3f] sm:$0xff]
          %v3546 = vld [vmem:[%s3542 + $0x47] sm:$0xff]
          %v3547 = vld [vmem:[%s3542 + $0x6f] sm:$0xff]
          %v3548 = vld [vmem:[%s3542 + $0x77] sm:$0xff]
          %v3549 = vld [vmem:[%s3542 + $0x9f] sm:$0xff]
          %v3550 = vld [vmem:[%s3542 + $0xa7] sm:$0xff]
          %v3551 = vld [vmem:[%s3542 + $0xcf] sm:$0xff]
          %v3552 = vld [vmem:[%s3542 + $0xd7] sm:$0xff]
          %v3553 = vld [vmem:[%s3542 + $0xff] sm:$0xff]
          %v3554 = vld [vmem:[%s3542 + $0x107] sm:$0xff]
          %v3555 = vld [vmem:[%s3542 + $0x12f] sm:$0xff]
          %v3556 = vld [vmem:[%s3542 + $0x137] sm:$0xff]
          %v3557 = vld [vmem:[%s3542 + $0x15f] sm:$0xff]
          %v3558 = vld [vmem:[%s3542 + $0x167] sm:$0xff]
          %s3559 = scalar_lea.vmem [#allocation9], 768
          %v3560 = vld [vmem:[%s3559] sm:$0xff]
          %v3561 = vld [vmem:[%s3559 + $0x8] sm:$0xff]
          %v3562 = vld [vmem:[%s3559 + $0x10] sm:$0xff]
          %v3563 = vld [vmem:[%s3559 + $0x18] sm:$0xff]
          %v3564 = vld [vmem:[%s3559 + $0x20] sm:$0xff]
          %v3565 = vld [vmem:[%s3559 + $0x28] sm:$0xff]
          %v3566 = vld [vmem:[%s3559 + $0x30] sm:$0xff]
          %v3567 = vld [vmem:[%s3559 + $0x38] sm:$0xff]
          %v3568 = vld [vmem:[%s3559 + $0x40] sm:$0xff]
          %v3569 = vld [vmem:[%s3559 + $0x48] sm:$0xff]
          %v3570 = vld [vmem:[%s3559 + $0x50] sm:$0xff]
          %v3571 = vld [vmem:[%s3559 + $0x58] sm:$0xff]
          %v3572 = vld [vmem:[%s3559 + $0x60] sm:$0xff]
          %v3573 = vld [vmem:[%s3559 + $0x68] sm:$0xff]
          %v3574 = vld [vmem:[%s3559 + $0x70] sm:$0xff]
          %v3575 = vld [vmem:[%s3559 + $0x78] sm:$0xff]
          %3576 = vmatprep.subr.mxu0 0.0
          %3577 = vmatpush1.msra.mxu0 %v3560
          %3578 = vmatprep.subr.mxu0 0.0
          %3579 = vmatpush1.msra.mxu0 %v3561
          %3580 = vmatprep.subr.mxu0 0.0
          %3581 = vmatpush1.msra.mxu0 %v3562
          %3582 = vmatprep.subr.mxu0 0.0
          %3583 = vmatpush1.msra.mxu0 %v3563
          %3584 = vmatprep.subr.mxu0 0.0
          %3585 = vmatpush1.msra.mxu0 %v3564
          %3586 = vmatprep.subr.mxu0 0.0
          %3587 = vmatpush1.msra.mxu0 %v3565
          %3588 = vmatprep.subr.mxu0 0.0
          %3589 = vmatpush1.msra.mxu0 %v3566
          %3590 = vmatprep.subr.mxu0 0.0
          %3591 = vmatpush1.msra.mxu0 %v3567
          %3592 = vmatprep.subr.mxu0 0.0
          %3593 = vmatpush1.msra.mxu0 %v3568
          %3594 = vmatprep.subr.mxu0 0.0
          %3595 = vmatpush1.msra.mxu0 %v3569
          %3596 = vmatprep.subr.mxu0 0.0
          %3597 = vmatpush1.msra.mxu0 %v3570
          %3598 = vmatprep.subr.mxu0 0.0
          %3599 = vmatpush1.msra.mxu0 %v3571
          %3600 = vmatprep.subr.mxu0 0.0
          %3601 = vmatpush1.msra.mxu0 %v3572
          %3602 = vmatprep.subr.mxu0 0.0
          %3603 = vmatpush1.msra.mxu0 %v3573
          %3604 = vmatprep.subr.mxu0 0.0
          %3605 = vmatpush1.msra.mxu0 %v3574
          %3606 = vmatprep.subr.mxu0 0.0
          %3607 = vmatpush1.msra.mxu0 %v3575
          %3608 = vmatprep.subr.mxu0 0.0
          %3609 = vmatpush1.msra.mxu0 0.0
          %3610 = vmatprep.subr.mxu0 0.0
          %3611 = vmatpush1.msra.mxu0 0.0
          %3612 = vmatprep.subr.mxu0 0.0
          %3613 = vmatpush1.msra.mxu0 0.0
          %3614 = vmatprep.subr.mxu0 0.0
          %3615 = vmatpush1.msra.mxu0 0.0
          %3616 = vmatprep.subr.mxu0 0.0
          %3617 = vmatpush1.msra.mxu0 0.0
          %3618 = vmatprep.subr.mxu0 0.0
          %3619 = vmatpush1.msra.mxu0 0.0
          %3620 = vmatprep.subr.mxu0 0.0
          %3621 = vmatpush1.msra.mxu0 0.0
          %3622 = vmatprep.subr.mxu0 0.0
          %3623 = vmatpush1.msra.mxu0 0.0
          %3624 = vmatprep.subr.mxu0 0.0
          %3625 = vmatpush1.msra.mxu0 0.0
          %3626 = vmatprep.subr.mxu0 0.0
          %3627 = vmatpush1.msra.mxu0 0.0
          %3628 = vmatprep.subr.mxu0 0.0
          %3629 = vmatpush1.msra.mxu0 0.0
          %3630 = vmatprep.subr.mxu0 0.0
          %3631 = vmatpush1.msra.mxu0 0.0
          %3632 = vmatprep.subr.mxu0 0.0
          %3633 = vmatpush1.msra.mxu0 0.0
          %3634 = vmatprep.subr.mxu0 0.0
          %3635 = vmatpush1.msra.mxu0 0.0
          %3636 = vmatprep.subr.mxu0 0.0
          %3637 = vmatpush1.msra.mxu0 0.0
          %3638 = vmatprep.subr.mxu0 0.0
          %3639 = vmatpush1.msra.mxu0 0.0
          %3640 = vmatprep.mubr.f32.mxu0 0.0
          %3641 = vmatmul.mubr.f32.gmra.mrb[0].mxu0 %v3543
          %v3642 = vpop.f32.mrb[0].mxu0
          %v3643 = vadd.f32 0.0, %v3642
          %v3644 = vpop.f32.mrb[0].mxu0
          %3645 = vmatprep.mubr.f32.mxu0 0.0
          %3646 = vmatmul.mubr.f32.gmra.mrb[0].mxu0 %v3544
          %v3647 = vpop.f32.mrb[0].mxu0
          %v3648 = vadd.f32 0.0, %v3647
          %v3649 = vpop.f32.mrb[0].mxu0
          %3650 = vmatprep.mubr.f32.mxu0 0.0
          %3651 = vmatmul.mubr.f32.gmra.mrb[0].mxu0 %v3545
          %v3652 = vpop.f32.mrb[0].mxu0
          %v3653 = vadd.f32 0.0, %v3652
          %v3654 = vpop.f32.mrb[0].mxu0
          %3655 = vmatprep.mubr.f32.mxu0 0.0
          %3656 = vmatmul.mubr.f32.gmra.mrb[0].mxu0 %v3546
          %v3657 = vpop.f32.mrb[0].mxu0
          %v3658 = vadd.f32 0.0, %v3657
          %v3659 = vpop.f32.mrb[0].mxu0
          %3660 = vmatprep.mubr.f32.mxu0 0.0
          %3661 = vmatmul.mubr.f32.gmra.mrb[0].mxu0 %v3547
          %v3662 = vpop.f32.mrb[0].mxu0
          %v3663 = vadd.f32 0.0, %v3662
          %v3664 = vpop.f32.mrb[0].mxu0
          %3665 = vmatprep.mubr.f32.mxu0 0.0
          %3666 = vmatmul.mubr.f32.gmra.mrb[0].mxu0 %v3548
          %v3667 = vpop.f32.mrb[0].mxu0
          %v3668 = vadd.f32 0.0, %v3667
          %v3669 = vpop.f32.mrb[0].mxu0
          %3670 = vmatprep.mubr.f32.mxu0 0.0
          %3671 = vmatmul.mubr.f32.gmra.mrb[0].mxu0 %v3549
          %v3672 = vpop.f32.mrb[0].mxu0
          %v3673 = vadd.f32 0.0, %v3672
          %v3674 = vpop.f32.mrb[0].mxu0
          %3675 = vmatprep.mubr.f32.mxu0 0.0
          %3676 = vmatmul.mubr.f32.gmra.mrb[0].mxu0 %v3550
          %v3677 = vpop.f32.mrb[0].mxu0
          %v3678 = vadd.f32 0.0, %v3677
          %v3679 = vpop.f32.mrb[0].mxu0
          %3680 = vmatprep.mubr.f32.mxu0 0.0
          %3681 = vmatmul.mubr.f32.gmra.mrb[0].mxu0 %v3551
          %v3682 = vpop.f32.mrb[0].mxu0
          %v3683 = vadd.f32 0.0, %v3682
          %v3684 = vpop.f32.mrb[0].mxu0
          %3685 = vmatprep.mubr.f32.mxu0 0.0
          %3686 = vmatmul.mubr.f32.gmra.mrb[0].mxu0 %v3552
          %v3687 = vpop.f32.mrb[0].mxu0
          %v3688 = vadd.f32 0.0, %v3687
          %v3689 = vpop.f32.mrb[0].mxu0
          %3690 = vmatprep.mubr.f32.mxu0 0.0
          %3691 = vmatmul.mubr.f32.gmra.mrb[0].mxu0 %v3553
          %v3692 = vpop.f32.mrb[0].mxu0
          %v3693 = vadd.f32 0.0, %v3692
          %v3694 = vpop.f32.mrb[0].mxu0
          %3695 = vmatprep.mubr.f32.mxu0 0.0
          %3696 = vmatmul.mubr.f32.gmra.mrb[0].mxu0 %v3554
          %v3697 = vpop.f32.mrb[0].mxu0
          %v3698 = vadd.f32 0.0, %v3697
          %v3699 = vpop.f32.mrb[0].mxu0
          %3700 = vmatprep.mubr.f32.mxu0 0.0
          %3701 = vmatmul.mubr.f32.gmra.mrb[0].mxu0 %v3555
          %v3702 = vpop.f32.mrb[0].mxu0
          %v3703 = vadd.f32 0.0, %v3702
          %v3704 = vpop.f32.mrb[0].mxu0
          %3705 = vmatprep.mubr.f32.mxu0 0.0
          %3706 = vmatmul.mubr.f32.gmra.mrb[0].mxu0 %v3556
          %v3707 = vpop.f32.mrb[0].mxu0
          %v3708 = vadd.f32 0.0, %v3707
          %v3709 = vpop.f32.mrb[0].mxu0
          %3710 = vmatprep.mubr.f32.mxu0 0.0
          %3711 = vmatmul.mubr.f32.gmra.mrb[0].mxu0 %v3557
          %v3712 = vpop.f32.mrb[0].mxu0
          %v3713 = vadd.f32 0.0, %v3712
          %v3714 = vpop.f32.mrb[0].mxu0
          %3715 = vmatprep.mubr.f32.mxu0 0.0
          %3716 = vmatmul.mubr.f32.gmra.mrb[0].mxu0 %v3558
          %v3717 = vpop.f32.mrb[0].mxu0
          %v3718 = vadd.f32 0.0, %v3717
          %v3719 = vpop.f32.mrb[0].mxu0
          %3720 = vdwg.mxu0
          %v3721 = vadd.f32 %v3524, %v3643
          %v3722 = vadd.f32 %v3525, %v3648
          %v3723 = vadd.f32 %v3526, %v3653
          %v3724 = vadd.f32 %v3527, %v3658
          %v3725 = vadd.f32 %v3528, %v3663
          %v3726 = vadd.f32 %v3529, %v3668
          %v3727 = vadd.f32 %v3530, %v3673
          %v3728 = vadd.f32 %v3531, %v3678
          %v3729 = vadd.f32 %v3532, %v3683
          %v3730 = vadd.f32 %v3533, %v3688
          %v3731 = vadd.f32 %v3534, %v3693
          %v3732 = vadd.f32 %v3535, %v3698
          %v3733 = vadd.f32 %v3536, %v3703
          %v3734 = vadd.f32 %v3537, %v3708
          %v3735 = vadd.f32 %v3538, %v3713
          %v3736 = vadd.f32 %v3539, %v3718
          %v3737 = vld [vmem:[%s3542 + $0x10] sm:$0xff]
          %v3738 = vld [vmem:[%s3542 + $0x18] sm:$0xff]
          %v3739 = vld [vmem:[%s3542 + $0x40] sm:$0xff]
          %v3740 = vld [vmem:[%s3542 + $0x48] sm:$0xff]
          %v3741 = vld [vmem:[%s3542 + $0x70] sm:$0xff]
          %v3742 = vld [vmem:[%s3542 + $0x78] sm:$0xff]
          %v3743 = vld [vmem:[%s3542 + $0xa0] sm:$0xff]
          %v3744 = vld [vmem:[%s3542 + $0xa8] sm:$0xff]
          %v3745 = vld [vmem:[%s3542 + $0xd0] sm:$0xff]
          %v3746 = vld [vmem:[%s3542 + $0xd8] sm:$0xff]
          %v3747 = vld [vmem:[%s3542 + $0x100] sm:$0xff]
          %v3748 = vld [vmem:[%s3542 + $0x108] sm:$0xff]
          %v3749 = vld [vmem:[%s3542 + $0x130] sm:$0xff]
          %v3750 = vld [vmem:[%s3542 + $0x138] sm:$0xff]
          %v3751 = vld [vmem:[%s3542 + $0x160] sm:$0xff]
          %v3752 = vld [vmem:[%s3542 + $0x168] sm:$0xff]
          %s3753 = scalar_lea.vmem [#allocation9], 896
          %v3754 = vld [vmem:[%s3753] sm:$0xff]
          %v3755 = vld [vmem:[%s3753 + $0x8] sm:$0xff]
          %v3756 = vld [vmem:[%s3753 + $0x10] sm:$0xff]
          %v3757 = vld [vmem:[%s3753 + $0x18] sm:$0xff]
          %v3758 = vld [vmem:[%s3753 + $0x20] sm:$0xff]
          %v3759 = vld [vmem:[%s3753 + $0x28] sm:$0xff]
          %v3760 = vld [vmem:[%s3753 + $0x30] sm:$0xff]
          %v3761 = vld [vmem:[%s3753 + $0x38] sm:$0xff]
          %v3762 = vld [vmem:[%s3753 + $0x40] sm:$0xff]
          %v3763 = vld [vmem:[%s3753 + $0x48] sm:$0xff]
          %v3764 = vld [vmem:[%s3753 + $0x50] sm:$0xff]
          %v3765 = vld [vmem:[%s3753 + $0x58] sm:$0xff]
          %v3766 = vld [vmem:[%s3753 + $0x60] sm:$0xff]
          %v3767 = vld [vmem:[%s3753 + $0x68] sm:$0xff]
          %v3768 = vld [vmem:[%s3753 + $0x70] sm:$0xff]
          %v3769 = vld [vmem:[%s3753 + $0x78] sm:$0xff]
          %3770 = vmatprep.subr.mxu0 0.0
          %3771 = vmatpush1.msra.mxu0 %v3754
          %3772 = vmatprep.subr.mxu0 0.0
          %3773 = vmatpush1.msra.mxu0 %v3755
          %3774 = vmatprep.subr.mxu0 0.0
          %3775 = vmatpush1.msra.mxu0 %v3756
          %3776 = vmatprep.subr.mxu0 0.0
          %3777 = vmatpush1.msra.mxu0 %v3757
          %3778 = vmatprep.subr.mxu0 0.0
          %3779 = vmatpush1.msra.mxu0 %v3758
          %3780 = vmatprep.subr.mxu0 0.0
          %3781 = vmatpush1.msra.mxu0 %v3759
          %3782 = vmatprep.subr.mxu0 0.0
          %3783 = vmatpush1.msra.mxu0 %v3760
          %3784 = vmatprep.subr.mxu0 0.0
          %3785 = vmatpush1.msra.mxu0 %v3761
          %3786 = vmatprep.subr.mxu0 0.0
          %3787 = vmatpush1.msra.mxu0 %v3762
          %3788 = vmatprep.subr.mxu0 0.0
          %3789 = vmatpush1.msra.mxu0 %v3763
          %3790 = vmatprep.subr.mxu0 0.0
          %3791 = vmatpush1.msra.mxu0 %v3764
          %3792 = vmatprep.subr.mxu0 0.0
          %3793 = vmatpush1.msra.mxu0 %v3765
          %3794 = vmatprep.subr.mxu0 0.0
          %3795 = vmatpush1.msra.mxu0 %v3766
          %3796 = vmatprep.subr.mxu0 0.0
          %3797 = vmatpush1.msra.mxu0 %v3767
          %3798 = vmatprep.subr.mxu0 0.0
          %3799 = vmatpush1.msra.mxu0 %v3768
          %3800 = vmatprep.subr.mxu0 0.0
          %3801 = vmatpush1.msra.mxu0 %v3769
          %3802 = vmatprep.subr.mxu0 0.0
          %3803 = vmatpush1.msra.mxu0 0.0
          %3804 = vmatprep.subr.mxu0 0.0
          %3805 = vmatpush1.msra.mxu0 0.0
          %3806 = vmatprep.subr.mxu0 0.0
          %3807 = vmatpush1.msra.mxu0 0.0
          %3808 = vmatprep.subr.mxu0 0.0
          %3809 = vmatpush1.msra.mxu0 0.0
          %3810 = vmatprep.subr.mxu0 0.0
          %3811 = vmatpush1.msra.mxu0 0.0
          %3812 = vmatprep.subr.mxu0 0.0
          %3813 = vmatpush1.msra.mxu0 0.0
          %3814 = vmatprep.subr.mxu0 0.0
          %3815 = vmatpush1.msra.mxu0 0.0
          %3816 = vmatprep.subr.mxu0 0.0
          %3817 = vmatpush1.msra.mxu0 0.0
          %3818 = vmatprep.subr.mxu0 0.0
          %3819 = vmatpush1.msra.mxu0 0.0
          %3820 = vmatprep.subr.mxu0 0.0
          %3821 = vmatpush1.msra.mxu0 0.0
          %3822 = vmatprep.subr.mxu0 0.0
          %3823 = vmatpush1.msra.mxu0 0.0
          %3824 = vmatprep.subr.mxu0 0.0
          %3825 = vmatpush1.msra.mxu0 0.0
          %3826 = vmatprep.subr.mxu0 0.0
          %3827 = vmatpush1.msra.mxu0 0.0
          %3828 = vmatprep.subr.mxu0 0.0
          %3829 = vmatpush1.msra.mxu0 0.0
          %3830 = vmatprep.subr.mxu0 0.0
          %3831 = vmatpush1.msra.mxu0 0.0
          %3832 = vmatprep.subr.mxu0 0.0
          %3833 = vmatpush1.msra.mxu0 0.0
          %3834 = vmatprep.mubr.f32.mxu0 0.0
          %3835 = vmatmul.mubr.f32.gmra.mrb[0].mxu0 %v3737
          %v3836 = vpop.f32.mrb[0].mxu0
          %v3837 = vadd.f32 0.0, %v3836
          %v3838 = vpop.f32.mrb[0].mxu0
          %3839 = vmatprep.mubr.f32.mxu0 0.0
          %3840 = vmatmul.mubr.f32.gmra.mrb[0].mxu0 %v3738
          %v3841 = vpop.f32.mrb[0].mxu0
          %v3842 = vadd.f32 0.0, %v3841
          %v3843 = vpop.f32.mrb[0].mxu0
          %3844 = vmatprep.mubr.f32.mxu0 0.0
          %3845 = vmatmul.mubr.f32.gmra.mrb[0].mxu0 %v3739
          %v3846 = vpop.f32.mrb[0].mxu0
          %v3847 = vadd.f32 0.0, %v3846
          %v3848 = vpop.f32.mrb[0].mxu0
          %3849 = vmatprep.mubr.f32.mxu0 0.0
          %3850 = vmatmul.mubr.f32.gmra.mrb[0].mxu0 %v3740
          %v3851 = vpop.f32.mrb[0].mxu0
          %v3852 = vadd.f32 0.0, %v3851
          %v3853 = vpop.f32.mrb[0].mxu0
          %3854 = vmatprep.mubr.f32.mxu0 0.0
          %3855 = vmatmul.mubr.f32.gmra.mrb[0].mxu0 %v3741
          %v3856 = vpop.f32.mrb[0].mxu0
          %v3857 = vadd.f32 0.0, %v3856
          %v3858 = vpop.f32.mrb[0].mxu0
          %3859 = vmatprep.mubr.f32.mxu0 0.0
          %3860 = vmatmul.mubr.f32.gmra.mrb[0].mxu0 %v3742
          %v3861 = vpop.f32.mrb[0].mxu0
          %v3862 = vadd.f32 0.0, %v3861
          %v3863 = vpop.f32.mrb[0].mxu0
          %3864 = vmatprep.mubr.f32.mxu0 0.0
          %3865 = vmatmul.mubr.f32.gmra.mrb[0].mxu0 %v3743
          %v3866 = vpop.f32.mrb[0].mxu0
          %v3867 = vadd.f32 0.0, %v3866
          %v3868 = vpop.f32.mrb[0].mxu0
          %3869 = vmatprep.mubr.f32.mxu0 0.0
          %3870 = vmatmul.mubr.f32.gmra.mrb[0].mxu0 %v3744
          %v3871 = vpop.f32.mrb[0].mxu0
          %v3872 = vadd.f32 0.0, %v3871
          %v3873 = vpop.f32.mrb[0].mxu0
          %3874 = vmatprep.mubr.f32.mxu0 0.0
          %3875 = vmatmul.mubr.f32.gmra.mrb[0].mxu0 %v3745
          %v3876 = vpop.f32.mrb[0].mxu0
          %v3877 = vadd.f32 0.0, %v3876
          %v3878 = vpop.f32.mrb[0].mxu0
          %3879 = vmatprep.mubr.f32.mxu0 0.0
          %3880 = vmatmul.mubr.f32.gmra.mrb[0].mxu0 %v3746
          %v3881 = vpop.f32.mrb[0].mxu0
          %v3882 = vadd.f32 0.0, %v3881
          %v3883 = vpop.f32.mrb[0].mxu0
          %3884 = vmatprep.mubr.f32.mxu0 0.0
          %3885 = vmatmul.mubr.f32.gmra.mrb[0].mxu0 %v3747
          %v3886 = vpop.f32.mrb[0].mxu0
          %v3887 = vadd.f32 0.0, %v3886
          %v3888 = vpop.f32.mrb[0].mxu0
          %3889 = vmatprep.mubr.f32.mxu0 0.0
          %3890 = vmatmul.mubr.f32.gmra.mrb[0].mxu0 %v3748
          %v3891 = vpop.f32.mrb[0].mxu0
          %v3892 = vadd.f32 0.0, %v3891
          %v3893 = vpop.f32.mrb[0].mxu0
          %3894 = vmatprep.mubr.f32.mxu0 0.0
          %3895 = vmatmul.mubr.f32.gmra.mrb[0].mxu0 %v3749
          %v3896 = vpop.f32.mrb[0].mxu0
          %v3897 = vadd.f32 0.0, %v3896
          %v3898 = vpop.f32.mrb[0].mxu0
          %3899 = vmatprep.mubr.f32.mxu0 0.0
          %3900 = vmatmul.mubr.f32.gmra.mrb[0].mxu0 %v3750
          %v3901 = vpop.f32.mrb[0].mxu0
          %v3902 = vadd.f32 0.0, %v3901
          %v3903 = vpop.f32.mrb[0].mxu0
          %3904 = vmatprep.mubr.f32.mxu0 0.0
          %3905 = vmatmul.mubr.f32.gmra.mrb[0].mxu0 %v3751
          %v3906 = vpop.f32.mrb[0].mxu0
          %v3907 = vadd.f32 0.0, %v3906
          %v3908 = vpop.f32.mrb[0].mxu0
          %3909 = vmatprep.mubr.f32.mxu0 0.0
          %3910 = vmatmul.mubr.f32.gmra.mrb[0].mxu0 %v3752
          %v3911 = vpop.f32.mrb[0].mxu0
          %v3912 = vadd.f32 0.0, %v3911
          %v3913 = vpop.f32.mrb[0].mxu0
          %3914 = vdwg.mxu0
          %v3915 = vadd.f32 %v3721, %v3837
          %v3916 = vadd.f32 %v3722, %v3842
          %v3917 = vadd.f32 %v3723, %v3847
          %v3918 = vadd.f32 %v3724, %v3852
          %v3919 = vadd.f32 %v3725, %v3857
          %v3920 = vadd.f32 %v3726, %v3862
          %v3921 = vadd.f32 %v3727, %v3867
          %v3922 = vadd.f32 %v3728, %v3872
          %v3923 = vadd.f32 %v3729, %v3877
          %v3924 = vadd.f32 %v3730, %v3882
          %v3925 = vadd.f32 %v3731, %v3887
          %v3926 = vadd.f32 %v3732, %v3892
          %v3927 = vadd.f32 %v3733, %v3897
          %v3928 = vadd.f32 %v3734, %v3902
          %v3929 = vadd.f32 %v3735, %v3907
          %v3930 = vadd.f32 %v3736, %v3912
          %v3931 = vld [vmem:[%s3542 + $0x11] sm:$0xff]
          %v3932 = vld [vmem:[%s3542 + $0x19] sm:$0xff]
          %v3933 = vld [vmem:[%s3542 + $0x41] sm:$0xff]
          %v3934 = vld [vmem:[%s3542 + $0x49] sm:$0xff]
          %v3935 = vld [vmem:[%s3542 + $0x71] sm:$0xff]
          %v3936 = vld [vmem:[%s3542 + $0x79] sm:$0xff]
          %v3937 = vld [vmem:[%s3542 + $0xa1] sm:$0xff]
          %v3938 = vld [vmem:[%s3542 + $0xa9] sm:$0xff]
          %v3939 = vld [vmem:[%s3542 + $0xd1] sm:$0xff]
          %v3940 = vld [vmem:[%s3542 + $0xd9] sm:$0xff]
          %v3941 = vld [vmem:[%s3542 + $0x101] sm:$0xff]
          %v3942 = vld [vmem:[%s3542 + $0x109] sm:$0xff]
          %v3943 = vld [vmem:[%s3542 + $0x131] sm:$0xff]
          %v3944 = vld [vmem:[%s3542 + $0x139] sm:$0xff]
          %v3945 = vld [vmem:[%s3542 + $0x161] sm:$0xff]
          %v3946 = vld [vmem:[%s3542 + $0x169] sm:$0xff]
          %s3947 = scalar_lea.vmem [#allocation9], 1024
          %v3948 = vld [vmem:[%s3947] sm:$0xff]
          %v3949 = vld [vmem:[%s3947 + $0x8] sm:$0xff]
          %v3950 = vld [vmem:[%s3947 + $0x10] sm:$0xff]
          %v3951 = vld [vmem:[%s3947 + $0x18] sm:$0xff]
          %v3952 = vld [vmem:[%s3947 + $0x20] sm:$0xff]
          %v3953 = vld [vmem:[%s3947 + $0x28] sm:$0xff]
          %v3954 = vld [vmem:[%s3947 + $0x30] sm:$0xff]
          %v3955 = vld [vmem:[%s3947 + $0x38] sm:$0xff]
          %v3956 = vld [vmem:[%s3947 + $0x40] sm:$0xff]
          %v3957 = vld [vmem:[%s3947 + $0x48] sm:$0xff]
          %v3958 = vld [vmem:[%s3947 + $0x50] sm:$0xff]
          %v3959 = vld [vmem:[%s3947 + $0x58] sm:$0xff]
          %v3960 = vld [vmem:[%s3947 + $0x60] sm:$0xff]
          %v3961 = vld [vmem:[%s3947 + $0x68] sm:$0xff]
          %v3962 = vld [vmem:[%s3947 + $0x70] sm:$0xff]
          %v3963 = vld [vmem:[%s3947 + $0x78] sm:$0xff]
          %3964 = vmatprep.subr.mxu0 0.0
          %3965 = vmatpush1.msra.mxu0 %v3948
          %3966 = vmatprep.subr.mxu0 0.0
          %3967 = vmatpush1.msra.mxu0 %v3949
          %3968 = vmatprep.subr.mxu0 0.0
          %3969 = vmatpush1.msra.mxu0 %v3950
          %3970 = vmatprep.subr.mxu0 0.0
          %3971 = vmatpush1.msra.mxu0 %v3951
          %3972 = vmatprep.subr.mxu0 0.0
          %3973 = vmatpush1.msra.mxu0 %v3952
          %3974 = vmatprep.subr.mxu0 0.0
          %3975 = vmatpush1.msra.mxu0 %v3953
          %3976 = vmatprep.subr.mxu0 0.0
          %3977 = vmatpush1.msra.mxu0 %v3954
          %3978 = vmatprep.subr.mxu0 0.0
          %3979 = vmatpush1.msra.mxu0 %v3955
          %3980 = vmatprep.subr.mxu0 0.0
          %3981 = vmatpush1.msra.mxu0 %v3956
          %3982 = vmatprep.subr.mxu0 0.0
          %3983 = vmatpush1.msra.mxu0 %v3957
          %3984 = vmatprep.subr.mxu0 0.0
          %3985 = vmatpush1.msra.mxu0 %v3958
          %3986 = vmatprep.subr.mxu0 0.0
          %3987 = vmatpush1.msra.mxu0 %v3959
          %3988 = vmatprep.subr.mxu0 0.0
          %3989 = vmatpush1.msra.mxu0 %v3960
          %3990 = vmatprep.subr.mxu0 0.0
          %3991 = vmatpush1.msra.mxu0 %v3961
          %3992 = vmatprep.subr.mxu0 0.0
          %3993 = vmatpush1.msra.mxu0 %v3962
          %3994 = vmatprep.subr.mxu0 0.0
          %3995 = vmatpush1.msra.mxu0 %v3963
          %3996 = vmatprep.subr.mxu0 0.0
          %3997 = vmatpush1.msra.mxu0 0.0
          %3998 = vmatprep.subr.mxu0 0.0
          %3999 = vmatpush1.msra.mxu0 0.0
          %4000 = vmatprep.subr.mxu0 0.0
          %4001 = vmatpush1.msra.mxu0 0.0
          %4002 = vmatprep.subr.mxu0 0.0
          %4003 = vmatpush1.msra.mxu0 0.0
          %4004 = vmatprep.subr.mxu0 0.0
          %4005 = vmatpush1.msra.mxu0 0.0
          %4006 = vmatprep.subr.mxu0 0.0
          %4007 = vmatpush1.msra.mxu0 0.0
          %4008 = vmatprep.subr.mxu0 0.0
          %4009 = vmatpush1.msra.mxu0 0.0
          %4010 = vmatprep.subr.mxu0 0.0
          %4011 = vmatpush1.msra.mxu0 0.0
          %4012 = vmatprep.subr.mxu0 0.0
          %4013 = vmatpush1.msra.mxu0 0.0
          %4014 = vmatprep.subr.mxu0 0.0
          %4015 = vmatpush1.msra.mxu0 0.0
          %4016 = vmatprep.subr.mxu0 0.0
          %4017 = vmatpush1.msra.mxu0 0.0
          %4018 = vmatprep.subr.mxu0 0.0
          %4019 = vmatpush1.msra.mxu0 0.0
          %4020 = vmatprep.subr.mxu0 0.0
          %4021 = vmatpush1.msra.mxu0 0.0
          %4022 = vmatprep.subr.mxu0 0.0
          %4023 = vmatpush1.msra.mxu0 0.0
          %4024 = vmatprep.subr.mxu0 0.0
          %4025 = vmatpush1.msra.mxu0 0.0
          %4026 = vmatprep.subr.mxu0 0.0
          %4027 = vmatpush1.msra.mxu0 0.0
          %4028 = vmatprep.mubr.f32.mxu0 0.0
          %4029 = vmatmul.mubr.f32.gmra.mrb[0].mxu0 %v3931
          %v4030 = vpop.f32.mrb[0].mxu0
          %v4031 = vadd.f32 0.0, %v4030
          %v4032 = vpop.f32.mrb[0].mxu0
          %4033 = vmatprep.mubr.f32.mxu0 0.0
          %4034 = vmatmul.mubr.f32.gmra.mrb[0].mxu0 %v3932
          %v4035 = vpop.f32.mrb[0].mxu0
          %v4036 = vadd.f32 0.0, %v4035
          %v4037 = vpop.f32.mrb[0].mxu0
          %4038 = vmatprep.mubr.f32.mxu0 0.0
          %4039 = vmatmul.mubr.f32.gmra.mrb[0].mxu0 %v3933
          %v4040 = vpop.f32.mrb[0].mxu0
          %v4041 = vadd.f32 0.0, %v4040
          %v4042 = vpop.f32.mrb[0].mxu0
          %4043 = vmatprep.mubr.f32.mxu0 0.0
          %4044 = vmatmul.mubr.f32.gmra.mrb[0].mxu0 %v3934
          %v4045 = vpop.f32.mrb[0].mxu0
          %v4046 = vadd.f32 0.0, %v4045
          %v4047 = vpop.f32.mrb[0].mxu0
          %4048 = vmatprep.mubr.f32.mxu0 0.0
          %4049 = vmatmul.mubr.f32.gmra.mrb[0].mxu0 %v3935
          %v4050 = vpop.f32.mrb[0].mxu0
          %v4051 = vadd.f32 0.0, %v4050
          %v4052 = vpop.f32.mrb[0].mxu0
          %4053 = vmatprep.mubr.f32.mxu0 0.0
          %4054 = vmatmul.mubr.f32.gmra.mrb[0].mxu0 %v3936
          %v4055 = vpop.f32.mrb[0].mxu0
          %v4056 = vadd.f32 0.0, %v4055
          %v4057 = vpop.f32.mrb[0].mxu0
          %4058 = vmatprep.mubr.f32.mxu0 0.0
          %4059 = vmatmul.mubr.f32.gmra.mrb[0].mxu0 %v3937
          %v4060 = vpop.f32.mrb[0].mxu0
          %v4061 = vadd.f32 0.0, %v4060
          %v4062 = vpop.f32.mrb[0].mxu0
          %4063 = vmatprep.mubr.f32.mxu0 0.0
          %4064 = vmatmul.mubr.f32.gmra.mrb[0].mxu0 %v3938
          %v4065 = vpop.f32.mrb[0].mxu0
          %v4066 = vadd.f32 0.0, %v4065
          %v4067 = vpop.f32.mrb[0].mxu0
          %4068 = vmatprep.mubr.f32.mxu0 0.0
          %4069 = vmatmul.mubr.f32.gmra.mrb[0].mxu0 %v3939
          %v4070 = vpop.f32.mrb[0].mxu0
          %v4071 = vadd.f32 0.0, %v4070
          %v4072 = vpop.f32.mrb[0].mxu0
          %4073 = vmatprep.mubr.f32.mxu0 0.0
          %4074 = vmatmul.mubr.f32.gmra.mrb[0].mxu0 %v3940
          %v4075 = vpop.f32.mrb[0].mxu0
          %v4076 = vadd.f32 0.0, %v4075
          %v4077 = vpop.f32.mrb[0].mxu0
          %4078 = vmatprep.mubr.f32.mxu0 0.0
          %4079 = vmatmul.mubr.f32.gmra.mrb[0].mxu0 %v3941
          %v4080 = vpop.f32.mrb[0].mxu0
          %v4081 = vadd.f32 0.0, %v4080
          %v4082 = vpop.f32.mrb[0].mxu0
          %4083 = vmatprep.mubr.f32.mxu0 0.0
          %4084 = vmatmul.mubr.f32.gmra.mrb[0].mxu0 %v3942
          %v4085 = vpop.f32.mrb[0].mxu0
          %v4086 = vadd.f32 0.0, %v4085
          %v4087 = vpop.f32.mrb[0].mxu0
          %4088 = vmatprep.mubr.f32.mxu0 0.0
          %4089 = vmatmul.mubr.f32.gmra.mrb[0].mxu0 %v3943
          %v4090 = vpop.f32.mrb[0].mxu0
          %v4091 = vadd.f32 0.0, %v4090
          %v4092 = vpop.f32.mrb[0].mxu0
          %4093 = vmatprep.mubr.f32.mxu0 0.0
          %4094 = vmatmul.mubr.f32.gmra.mrb[0].mxu0 %v3944
          %v4095 = vpop.f32.mrb[0].mxu0
          %v4096 = vadd.f32 0.0, %v4095
          %v4097 = vpop.f32.mrb[0].mxu0
          %4098 = vmatprep.mubr.f32.mxu0 0.0
          %4099 = vmatmul.mubr.f32.gmra.mrb[0].mxu0 %v3945
          %v4100 = vpop.f32.mrb[0].mxu0
          %v4101 = vadd.f32 0.0, %v4100
          %v4102 = vpop.f32.mrb[0].mxu0
          %4103 = vmatprep.mubr.f32.mxu0 0.0
          %4104 = vmatmul.mubr.f32.gmra.mrb[0].mxu0 %v3946
          %v4105 = vpop.f32.mrb[0].mxu0
          %v4106 = vadd.f32 0.0, %v4105
          %v4107 = vpop.f32.mrb[0].mxu0
          %4108 = vdwg.mxu0
          %v4109 = vadd.f32 %v3915, %v4031
          %v4110 = vadd.f32 %v3916, %v4036
          %v4111 = vadd.f32 %v3917, %v4041
          %v4112 = vadd.f32 %v3918, %v4046
          %v4113 = vadd.f32 %v3919, %v4051
          %v4114 = vadd.f32 %v3920, %v4056
          %v4115 = vadd.f32 %v3921, %v4061
          %v4116 = vadd.f32 %v3922, %v4066
          %v4117 = vadd.f32 %v3923, %v4071
          %v4118 = vadd.f32 %v3924, %v4076
          %v4119 = vadd.f32 %v3925, %v4081
          %v4120 = vadd.f32 %v3926, %v4086
          %v4121 = vadd.f32 %v3927, %v4091
          %v4122 = vadd.f32 %v3928, %v4096
          %v4123 = vadd.f32 %v3929, %v4101
          %v4124 = vadd.f32 %v3930, %v4106
          %s4125 = smul.u32 %s2403, 16
          %s4126 = scalar_lea.vmem %s337, %s4125 [#allocation4]
          %v4127 = vld [vmem:[%s4126] sm:$0xff]
          %v4128 = vld [vmem:[%s4126 + $0x8] sm:$0xff]
          %v4129 = vld [vmem:[%s4126 + $0x10] sm:$0xff]
          %v4130 = vld [vmem:[%s4126 + $0x18] sm:$0xff]
          %v4131 = vld [vmem:[%s4126 + $0x20] sm:$0xff]
          %v4132 = vld [vmem:[%s4126 + $0x28] sm:$0xff]
          %v4133 = vld [vmem:[%s4126 + $0x30] sm:$0xff]
          %v4134 = vld [vmem:[%s4126 + $0x38] sm:$0xff]
          %v4135 = vld [vmem:[%s4126 + $0x40] sm:$0xff]
          %v4136 = vld [vmem:[%s4126 + $0x48] sm:$0xff]
          %v4137 = vld [vmem:[%s4126 + $0x50] sm:$0xff]
          %v4138 = vld [vmem:[%s4126 + $0x58] sm:$0xff]
          %v4139 = vld [vmem:[%s4126 + $0x60] sm:$0xff]
          %v4140 = vld [vmem:[%s4126 + $0x68] sm:$0xff]
          %v4141 = vld [vmem:[%s4126 + $0x70] sm:$0xff]
          %v4142 = vld [vmem:[%s4126 + $0x78] sm:$0xff]
          %v4144 = vlaneseq
          %v4145 = vshrl.u32 %v4144, 7
          %v4146 = vsub.s32 0, %v4145
          %v4147 = vrot.slane %v385, %v4146
          %v4149 = vadd.f32 %v4109, %v4147
          %v4150 = vadd.f32 %v4110, %v4147
          %v4151 = vadd.f32 %v4111, %v4147
          %v4152 = vadd.f32 %v4112, %v4147
          %v4153 = vadd.f32 %v4113, %v4147
          %v4154 = vadd.f32 %v4114, %v4147
          %v4155 = vadd.f32 %v4115, %v4147
          %v4156 = vadd.f32 %v4116, %v4147
          %v4157 = vadd.f32 %v4117, %v4147
          %v4158 = vadd.f32 %v4118, %v4147
          %v4159 = vadd.f32 %v4119, %v4147
          %v4160 = vadd.f32 %v4120, %v4147
          %v4161 = vadd.f32 %v4121, %v4147
          %v4162 = vadd.f32 %v4122, %v4147
          %v4163 = vadd.f32 %v4123, %v4147
          %v4164 = vadd.f32 %v4124, %v4147
          %v4165 = vadd.f32 %v4149, %v4127
          %v4166 = vadd.f32 %v4150, %v4128
          %v4167 = vadd.f32 %v4151, %v4129
          %v4168 = vadd.f32 %v4152, %v4130
          %v4169 = vadd.f32 %v4153, %v4131
          %v4170 = vadd.f32 %v4154, %v4132
          %v4171 = vadd.f32 %v4155, %v4133
          %v4172 = vadd.f32 %v4156, %v4134
          %v4173 = vadd.f32 %v4157, %v4135
          %v4174 = vadd.f32 %v4158, %v4136
          %v4175 = vadd.f32 %v4159, %v4137
          %v4176 = vadd.f32 %v4160, %v4138
          %v4177 = vadd.f32 %v4161, %v4139
          %v4178 = vadd.f32 %v4162, %v4140
          %v4179 = vadd.f32 %v4163, %v4141
          %v4180 = vadd.f32 %v4164, %v4142
          %s4181 = scalar_lea.vmem %s379, %s4125 [#allocation10]
          %4182 = vst [vmem:[%s4181] sm:$0xff] %v4165
          %4183 = vst [vmem:[%s4181 + $0x8] sm:$0xff] %v4166
          %4184 = vst [vmem:[%s4181 + $0x10] sm:$0xff] %v4167
          %4185 = vst [vmem:[%s4181 + $0x18] sm:$0xff] %v4168
          %4186 = vst [vmem:[%s4181 + $0x20] sm:$0xff] %v4169
          %4187 = vst [vmem:[%s4181 + $0x28] sm:$0xff] %v4170
          %4188 = vst [vmem:[%s4181 + $0x30] sm:$0xff] %v4171
          %4189 = vst [vmem:[%s4181 + $0x38] sm:$0xff] %v4172
          %4190 = vst [vmem:[%s4181 + $0x40] sm:$0xff] %v4173
          %4191 = vst [vmem:[%s4181 + $0x48] sm:$0xff] %v4174
          %4192 = vst [vmem:[%s4181 + $0x50] sm:$0xff] %v4175
          %4193 = vst [vmem:[%s4181 + $0x58] sm:$0xff] %v4176
          %4194 = vst [vmem:[%s4181 + $0x60] sm:$0xff] %v4177
          %4195 = vst [vmem:[%s4181 + $0x68] sm:$0xff] %v4178
          %4196 = vst [vmem:[%s4181 + $0x70] sm:$0xff] %v4179
          %4197 = vst [vmem:[%s4181 + $0x78] sm:$0xff] %v4180
        $region87: #{tpu_custom_call.1} parent=55 // loop_footer
          %s2402 = sadd.s32 1, %s2398
        $region88: #{tpu_custom_call.1} parent=55 // loop_footer_branch
          %2397 = sbr.rel target = $region84
        $region89: #{tpu_custom_call.1} parent=55 // loop_exit
          _
        %s4198 = sand.u32 %s229, 1
        %s4199 = scalar_lea.sflag [#allocation6], %s4198
        %s4200 = sand.u32 %s229, 1
        %s4201 = smul.addr %s4200, 256
        %s4202 = scalar_lea.vmem [#allocation10], %s4201
        // Predicated region
        $region90: #{tpu_custom_call.1} parent=55 // pred_check
          %p4203 = pneg %p239
        $region91: #{tpu_custom_call.1} parent=55 // pred_check_branch
          %4205 = sbr.rel (%p4203) target = $region93
        $region92: #{tpu_custom_call.1} parent=55 // pred_region
          %s4207 = ssub.s32 4096, 4096
          %4208 = vsyncadd %s4199, %s4207
          %s4209 = smul.addr %s27, 32
          %s4210 = smul.addr %s4209, 128
          %s4211 = scalar_lea.hbm %s9, %s4210
          %s4212 = sshll.u32 %s4202, 4
          %s4213 = int_to_ptr.vmem [resolvable:$true] %s4212
          %4218 = dma.vmem_to_hbm [thread:$0]  %s4213, 4096, %s4211, %s4199, 128, 128, 8
        $region93: #{tpu_custom_call.1} parent=55 // pred_fallthru
          _
      $region56: #{tpu_custom_call.1} parent=5 // pred_fallthru
        _
      %p4219 = scmp.le.s32.totalorder 2, %s22
      // Predicated region
      $region94: #{tpu_custom_call.1} parent=5 // pred_check
        %p4220 = pneg %p4219
      $region95: #{tpu_custom_call.1} parent=5 // pred_check_branch
        %4222 = sbr.rel (%p4220) target = $region97
      $region96: #{tpu_custom_call.1} parent=5 // pred_region
        %s4223 = ssub.s32 %s22, 2
        // Predicated region
        $region98: #{tpu_custom_call.1} parent=96 // pred_check
          %p4224 = pneg %p245
        $region99: #{tpu_custom_call.1} parent=96 // pred_check_branch
          %4226 = sbr.rel (%p4224) target = $region101
        $region100: #{tpu_custom_call.1} parent=96 // pred_region
          %s4227 = sand.u32 %s230, 1
          %s4228 = scalar_lea.sflag [#allocation6], %s4227
          %s4229 = sand.u32 %s230, 1
          %s4230 = smul.addr %s4229, 256
          %s4231 = scalar_lea.vmem [#allocation10], %s4230
          %4232 = dma.done %s4228, 4096
        $region101: #{tpu_custom_call.1} parent=96 // pred_fallthru
          _
      $region97: #{tpu_custom_call.1} parent=5 // pred_fallthru
        _
    $region6: #{tpu_custom_call.1} parent=1 // loop_footer
      %s26 = sadd.s32 1, %s22
    $region7: #{tpu_custom_call.1} parent=1 // loop_footer_branch
      %21 = sbr.rel target = $region3
    $region8: #{tpu_custom_call.1} parent=1 // loop_exit
      _
    %4233 = vsyncpa [#allocation5], 1
    %s4234 = scalar_lea.sflag [#allocation5], 1
    %4235 = vsyncpa %s4234, 1
    %4236 = vsyncpa [#allocation8], 1
    %4237 = vsyncpa [#allocation6], 1
    %s4238 = scalar_lea.sflag [#allocation6], 1
    %4239 = vsyncpa %s4238, 1

</llo_original>
